<compile_context>
chip_gen: v6e
topology: v6e:2x2x1
jax: 0.10.0
libtpu: 0.0.40
codegen_flags: <defaults>
</compile_context>

<pallas_src>
import functools
import math

import jax
import jax.numpy as jnp
from jax.experimental import pallas as pl
from jax.experimental.pallas import tpu as pltpu


def _round_up(a, b):
    return ((a + b - 1) // b) * b


def vaegan_kernel(
    # batch-tile inputs
    x_ref, eps_ref,
    # encoder params (mu/logvar head fused into ml_*)
    e1_w, e1_b, e2_w, e2_b, ml_w, ml_b,
    # decoder params
    d1_w, d1_b, d2_w, d2_b, d3_w, d3_b,
    # discriminator params (g3 weight pre-transposed to (1, 64) for lane reduce)
    g1_w, g1_b, g2_w, g2_b, g3_wt, g3_b,
    # packed lane-dense output: [recon | mu | logvar | disc | zero pad]
    out_ref,
    *, latent_dim, pad_width,
):
    relu = lambda v: jnp.maximum(v, 0.0)
    leaky = lambda v: jnp.maximum(v, 0.2 * v)          # mul+max, no select

    def matmul(h, w_ref):
        # bf16 MXU operands, f32 accumulation. astype is a no-op if already bf16.
        return jnp.dot(h.astype(jnp.bfloat16), w_ref[...],
                       preferred_element_type=jnp.float32)

    def layer(h, w_ref, b_ref, act):
        # Bias add + activation run in the bias dtype (bf16 on v6e/v7x, f32 on v5e).
        o = matmul(h, w_ref).astype(b_ref.dtype) + b_ref[...]
        return act(o)

    x = x_ref[...]                                      # already bf16 (cast in wrapper)

    # ---- Encoder ----
    h = layer(x, e1_w, e1_b, relu)                      # Linear(input,128) + ReLU
    h = layer(h, e2_w, e2_b, relu)                      # Linear(128,64)    + ReLU
    ml = matmul(h, ml_w) + ml_b[...]                    # fused mu||logvar, f32
    mu = ml[:, :latent_dim]
    logvar = ml[:, latent_dim:]

    # ---- Reparameterize: z = mu + eps * exp(0.5*logvar)  (f32) ----
    z = mu + eps_ref[...] * jnp.exp(0.5 * logvar)

    # ---- Decoder ----
    d = layer(z, d1_w, d1_b, relu)                      # Linear(latent,64) + ReLU
    d = layer(d, d2_w, d2_b, relu)                      # Linear(64,128)    + ReLU
    recon = matmul(d, d3_w) + d3_b[...]                 # Linear(128,input), f32

    # ---- Discriminator ----
    g = layer(recon, g1_w, g1_b, leaky)                 # Linear(input,128) + LeakyReLU(0.2)
    g = layer(g, g2_w, g2_b, leaky)                     # Linear(128,64)    + LeakyReLU(0.2)
    # Linear(64,1) as a lane reduce (VPU mul + XLU reduce) instead of N=1 MXU pass.
    logit = jnp.sum(g.astype(jnp.float32) * g3_wt[...], axis=-1, keepdims=True) + g3_b[...]
    disc = jax.nn.sigmoid(logit)

    # ---- Single unmasked, lane-dense output store ----
    parts = [recon, ml, disc]
    if pad_width:
        parts.append(jnp.zeros((recon.shape[0], pad_width), jnp.float32))
    out_ref[...] = jnp.concatenate(parts, axis=-1)


def init_params(key, input_dim, latent_dim, dtype=jnp.float32):
    """Deterministic parameter init (W stored as (in, out), b as (1, out))."""
    dims = [
        ("e1", input_dim, 128), ("e2", 128, 64),
        ("mu", 64, latent_dim), ("lv", 64, latent_dim),
        ("d1", latent_dim, 64), ("d2", 64, 128), ("d3", 128, input_dim),
        ("g1", input_dim, 128), ("g2", 128, 64), ("g3", 64, 1),
    ]
    params = {}
    for name, fan_in, fan_out in dims:
        key, kw, kb = jax.random.split(key, 3)
        scale = 1.0 / jnp.sqrt(jnp.asarray(fan_in, dtype))
        w = jax.random.uniform(kw, (fan_in, fan_out), dtype, -scale, scale)
        b = jax.random.uniform(kb, (1, fan_out), dtype, -scale, scale)
        params[name] = (w, b)
    return params


def vaegan_forward(x, eps, params, *, batch_tile=1024, bf16_hidden=True):
    batch, input_dim = x.shape
    latent_dim = eps.shape[1]

    # ---- Parameter re-layout / fusion (done once at the JAX level) ----
    mu_w, mu_b = params["mu"]
    lv_w, lv_b = params["lv"]
    ml_w = jnp.concatenate([mu_w, lv_w], axis=1)              # (64, 2*latent)
    ml_b = jnp.concatenate([mu_b, lv_b], axis=1).astype(jnp.float32)
    g3_w, g3_b = params["g3"]
    g3_wt = g3_w.T.astype(jnp.float32)                        # (1, 64) for lane reduce

    hid = jnp.bfloat16 if bf16_hidden else jnp.float32        # hidden bias/act dtype
    bf16 = lambda a: a.astype(jnp.bfloat16)
    kernel_params = [
        bf16(params["e1"][0]), params["e1"][1].astype(hid),
        bf16(params["e2"][0]), params["e2"][1].astype(hid),
        bf16(ml_w), ml_b,
        bf16(params["d1"][0]), params["d1"][1].astype(hid),
        bf16(params["d2"][0]), params["d2"][1].astype(hid),
        bf16(params["d3"][0]), params["d3"][1].astype(jnp.float32),
        bf16(params["g1"][0]), params["g1"][1].astype(hid),
        bf16(params["g2"][0]), params["g2"][1].astype(hid),
        g3_wt, g3_b.astype(jnp.float32),
    ]

    # ---- Batch tiling ----
    # Biggest tile up to batch_tile; prefer exactly 2 tiles when the batch is
    # big enough so the "parallel" batch axis shards across v7x's 2 TensorCores.
    tb_cap = max(8, (batch_tile // 8) * 8)
    padded8 = _round_up(max(batch, 8), 8)
    if padded8 >= 2 * tb_cap:
        tb = tb_cap
        padded = _round_up(batch, tb)
    elif padded8 >= 16:
        padded = _round_up(max(batch, 16), 16)
        tb = padded // 2
    else:
        padded = padded8
        tb = padded
    num_tiles = padded // tb

    # ---- Input prep: bf16 x (half the DMA bytes), f32 eps, pad batch rows ----
    x = x.astype(jnp.bfloat16)
    eps = eps.astype(jnp.float32)
    if padded != batch:
        x = jnp.pad(x, ((0, padded - batch), (0, 0)))
        eps = jnp.pad(eps, ((0, padded - batch), (0, 0)))

    # ---- Lane-dense packed output width ----
    payload = input_dim + 2 * latent_dim + 1
    packed_width = _round_up(payload, 128)
    pad_width = packed_width - payload

    x_spec = pl.BlockSpec((tb, input_dim), lambda i: (i, 0))
    eps_spec = pl.BlockSpec((tb, latent_dim), lambda i: (i, 0))
    # Weights/biases: full-array blocks, same block every grid step -> VMEM-resident.
    param_specs = [pl.BlockSpec(p.shape, lambda i: (0, 0)) for p in kernel_params]
    out_spec = pl.BlockSpec((tb, packed_width), lambda i: (i, 0))

    # ---- Explicit VMEM budget (double-buffered blocks + resident params, 3x headroom) ----
    block_bytes = (tb * input_dim * 2          # x  (bf16)
                   + tb * latent_dim * 4       # eps (f32)
                   + tb * packed_width * 4)    # packed output (f32)
    param_bytes = sum(math.prod(p.shape) * p.dtype.itemsize for p in kernel_params)
    vmem_limit = int(min(64 << 20,
                         max(16 << 20, 3 * (2 * block_bytes + 2 * param_bytes))))

    kernel = functools.partial(
        vaegan_kernel, latent_dim=latent_dim, pad_width=pad_width)

    packed = pl.pallas_call(
        kernel,
        out_shape=jax.ShapeDtypeStruct((padded, packed_width), jnp.float32),
        grid_spec=pltpu.PrefetchScalarGridSpec(
            num_scalar_prefetch=0,
            grid=(num_tiles,),
            in_specs=[x_spec, eps_spec] + param_specs,
            out_specs=out_spec,
        ),
        compiler_params=pltpu.CompilerParams(
            dimension_semantics=("parallel",),
            vmem_limit_bytes=vmem_limit,
        ),
    )(x, eps, *kernel_params)

    # Split the packed slab (cheap slices in XLA).
    recon = packed[:batch, :input_dim]
    mu = packed[:batch, input_dim:input_dim + latent_dim]
    logvar = packed[:batch, input_dim + latent_dim:input_dim + 2 * latent_dim]
    disc = packed[:batch, input_dim + 2 * latent_dim:input_dim + 2 * latent_dim + 1]
    return recon, mu, logvar, disc


def vaegan_reference(x, eps, params):
    """Pure-JAX f32 reference of the PyTorch forward (for correctness check)."""
    lin = lambda h, wb: h @ wb[0] + wb[1]
    h = jax.nn.relu(lin(x, params["e1"]))
    h = jax.nn.relu(lin(h, params["e2"]))
    mu = lin(h, params["mu"])
    logvar = lin(h, params["lv"])
    z = mu + eps * jnp.exp(0.5 * logvar)
    d = jax.nn.relu(lin(z, params["d1"]))
    d = jax.nn.relu(lin(d, params["d2"]))
    recon = lin(d, params["d3"])
    g = jax.nn.leaky_relu(lin(recon, params["g1"]), 0.2)
    g = jax.nn.leaky_relu(lin(g, params["g2"]), 0.2)
    disc = jax.nn.sigmoid(lin(g, params["g3"]))
    return recon, mu, logvar, disc


if __name__ == "__main__":
    key = jax.random.PRNGKey(0)
    batch, input_dim, latent_dim = 512, 32, 8

    k_x, k_eps, k_params = jax.random.split(key, 3)
    x = jax.random.normal(k_x, (batch, input_dim), jnp.float32)
    # eps is the reparameterization noise (torch.randn_like(std)); drawn here
    # deterministically and passed in so the kernel is pure.
    eps = jax.random.normal(k_eps, (batch, latent_dim), jnp.float32)
    params = init_params(k_params, input_dim, latent_dim)

    recon_x, mu, logvar, disc_out = jax.block_until_ready(
        vaegan_forward(x, eps, params)
    )

    assert recon_x.shape == (batch, input_dim)
    assert mu.shape == (batch, latent_dim)
    assert logvar.shape == (batch, latent_dim)
    assert disc_out.shape == (batch, 1)
    assert bool(jnp.all(jnp.isfinite(recon_x)))
    assert bool(jnp.all((disc_out >= 0.0) & (disc_out <= 1.0)))

    # Compare against the f32 reference (loose tolerance: bf16 MXU operands
    # and bf16 hidden activations).
    r_recon, r_mu, r_lv, r_disc = vaegan_reference(x, eps, params)
    assert float(jnp.max(jnp.abs(recon_x - r_recon))) < 0.1
    assert float(jnp.max(jnp.abs(mu - r_mu))) < 0.1
    assert float(jnp.max(jnp.abs(logvar - r_lv))) < 0.1
    assert float(jnp.max(jnp.abs(disc_out - r_disc))) < 0.05

    print("KERNEL_OK")
</pallas_src>

<mosaic_0001>
module attributes {stable_mosaic.version = 11 : i64} {
  func.func @vaegan_kernel(%arg0: i32, %arg1: memref<256x32xbf16, #tpu.memory_space<vmem>>, %arg2: memref<256x8xf32, #tpu.memory_space<vmem>>, %arg3: memref<32x128xbf16, #tpu.memory_space<vmem>>, %arg4: memref<1x128xbf16, #tpu.memory_space<vmem>>, %arg5: memref<128x64xbf16, #tpu.memory_space<vmem>>, %arg6: memref<1x64xbf16, #tpu.memory_space<vmem>>, %arg7: memref<64x16xbf16, #tpu.memory_space<vmem>>, %arg8: memref<1x16xf32, #tpu.memory_space<vmem>>, %arg9: memref<8x64xbf16, #tpu.memory_space<vmem>>, %arg10: memref<1x64xbf16, #tpu.memory_space<vmem>>, %arg11: memref<64x128xbf16, #tpu.memory_space<vmem>>, %arg12: memref<1x128xbf16, #tpu.memory_space<vmem>>, %arg13: memref<128x32xbf16, #tpu.memory_space<vmem>>, %arg14: memref<1x32xf32, #tpu.memory_space<vmem>>, %arg15: memref<32x128xbf16, #tpu.memory_space<vmem>>, %arg16: memref<1x128xbf16, #tpu.memory_space<vmem>>, %arg17: memref<128x64xbf16, #tpu.memory_space<vmem>>, %arg18: memref<1x64xbf16, #tpu.memory_space<vmem>>, %arg19: memref<1x64xf32, #tpu.memory_space<vmem>>, %arg20: memref<1x1xf32, #tpu.memory_space<vmem>>, %arg21: memref<256x128xf32, #tpu.memory_space<vmem>>) attributes {dimension_semantics = [#tpu.dimension_semantics<parallel>], iteration_bounds = array<i64: 2>, scalar_prefetch = 0 : i64, scratch_operands = 0 : i64, tpu.core_type = #tpu.core_type<tc>, window_params = [{transform_indices = @transform_0, window_bounds = array<i64: 256, 32>}, {transform_indices = @transform_1, window_bounds = array<i64: 256, 8>}, {pipeline_mode = #tpu.pipeline_mode<synchronous>, transform_indices = @transform_2, window_bounds = array<i64: 32, 128>}, {pipeline_mode = #tpu.pipeline_mode<synchronous>, transform_indices = @transform_3, window_bounds = array<i64: 1, 128>}, {pipeline_mode = #tpu.pipeline_mode<synchronous>, transform_indices = @transform_4, window_bounds = array<i64: 128, 64>}, {pipeline_mode = #tpu.pipeline_mode<synchronous>, transform_indices = @transform_5, window_bounds = array<i64: 1, 64>}, {pipeline_mode = #tpu.pipeline_mode<synchronous>, transform_indices = @transform_6, window_bounds = array<i64: 64, 16>}, {pipeline_mode = #tpu.pipeline_mode<synchronous>, transform_indices = @transform_7, window_bounds = array<i64: 1, 16>}, {pipeline_mode = #tpu.pipeline_mode<synchronous>, transform_indices = @transform_8, window_bounds = array<i64: 8, 64>}, {pipeline_mode = #tpu.pipeline_mode<synchronous>, transform_indices = @transform_9, window_bounds = array<i64: 1, 64>}, {pipeline_mode = #tpu.pipeline_mode<synchronous>, transform_indices = @transform_10, window_bounds = array<i64: 64, 128>}, {pipeline_mode = #tpu.pipeline_mode<synchronous>, transform_indices = @transform_11, window_bounds = array<i64: 1, 128>}, {pipeline_mode = #tpu.pipeline_mode<synchronous>, transform_indices = @transform_12, window_bounds = array<i64: 128, 32>}, {pipeline_mode = #tpu.pipeline_mode<synchronous>, transform_indices = @transform_13, window_bounds = array<i64: 1, 32>}, {pipeline_mode = #tpu.pipeline_mode<synchronous>, transform_indices = @transform_14, window_bounds = array<i64: 32, 128>}, {pipeline_mode = #tpu.pipeline_mode<synchronous>, transform_indices = @transform_15, window_bounds = array<i64: 1, 128>}, {pipeline_mode = #tpu.pipeline_mode<synchronous>, transform_indices = @transform_16, window_bounds = array<i64: 128, 64>}, {pipeline_mode = #tpu.pipeline_mode<synchronous>, transform_indices = @transform_17, window_bounds = array<i64: 1, 64>}, {pipeline_mode = #tpu.pipeline_mode<synchronous>, transform_indices = @transform_18, window_bounds = array<i64: 1, 64>}, {pipeline_mode = #tpu.pipeline_mode<synchronous>, transform_indices = @transform_19, window_bounds = array<i64: 1, 1>}, {transform_indices = @transform_20, window_bounds = array<i64: 256, 128>}]} {
    %c0 = arith.constant 0 : index
    %c0_0 = arith.constant 0 : index
    %0 = vector.load %arg1[%c0, %c0_0] : memref<256x32xbf16, #tpu.memory_space<vmem>>, vector<256x32xbf16>
    %c0_1 = arith.constant 0 : index
    %c0_2 = arith.constant 0 : index
    %1 = vector.load %arg3[%c0_1, %c0_2] : memref<32x128xbf16, #tpu.memory_space<vmem>>, vector<32x128xbf16>
    %cst = arith.constant dense<0.000000e+00> : vector<256x128xf32>
    %2 = tpu.matmul %0, %1, %cst {dimension_numbers = #tpu.dot_dimension_numbers<[1], [0], [0], [1], [0, 0, 1, 1], [], []>} : vector<256x32xbf16>, vector<32x128xbf16>, vector<256x128xf32> -> vector<256x128xf32>
    %3 = arith.truncf %2 : vector<256x128xf32> to vector<256x128xbf16>
    %c0_3 = arith.constant 0 : index
    %c0_4 = arith.constant 0 : index
    %4 = vector.load %arg4[%c0_3, %c0_4] : memref<1x128xbf16, #tpu.memory_space<vmem>>, vector<1x128xbf16>
    %5 = vector.broadcast %4 : vector<1x128xbf16> to vector<256x128xbf16>
    %6 = arith.addf %3, %5 : vector<256x128xbf16>
    %cst_5 = arith.constant 0.000000e+00 : bf16
    %7 = vector.broadcast %cst_5 : bf16 to vector<256x128xbf16>
    %8 = arith.maximumf %6, %7 : vector<256x128xbf16>
    %c0_6 = arith.constant 0 : index
    %c0_7 = arith.constant 0 : index
    %9 = vector.load %arg5[%c0_6, %c0_7] : memref<128x64xbf16, #tpu.memory_space<vmem>>, vector<128x64xbf16>
    %cst_8 = arith.constant dense<0.000000e+00> : vector<256x64xf32>
    %10 = tpu.matmul %8, %9, %cst_8 {dimension_numbers = #tpu.dot_dimension_numbers<[1], [0], [0], [1], [0, 0, 1, 1], [], []>} : vector<256x128xbf16>, vector<128x64xbf16>, vector<256x64xf32> -> vector<256x64xf32>
    %11 = arith.truncf %10 : vector<256x64xf32> to vector<256x64xbf16>
    %c0_9 = arith.constant 0 : index
    %c0_10 = arith.constant 0 : index
    %12 = vector.load %arg6[%c0_9, %c0_10] : memref<1x64xbf16, #tpu.memory_space<vmem>>, vector<1x64xbf16>
    %13 = vector.broadcast %12 : vector<1x64xbf16> to vector<256x64xbf16>
    %14 = arith.addf %11, %13 : vector<256x64xbf16>
    %cst_11 = arith.constant 0.000000e+00 : bf16
    %15 = vector.broadcast %cst_11 : bf16 to vector<256x64xbf16>
    %16 = arith.maximumf %14, %15 : vector<256x64xbf16>
    %c0_12 = arith.constant 0 : index
    %c0_13 = arith.constant 0 : index
    %17 = vector.load %arg7[%c0_12, %c0_13] : memref<64x16xbf16, #tpu.memory_space<vmem>>, vector<64x16xbf16>
    %cst_14 = arith.constant dense<0.000000e+00> : vector<256x16xf32>
    %18 = tpu.matmul %16, %17, %cst_14 {dimension_numbers = #tpu.dot_dimension_numbers<[1], [0], [0], [1], [0, 0, 1, 1], [], []>} : vector<256x64xbf16>, vector<64x16xbf16>, vector<256x16xf32> -> vector<256x16xf32>
    %c0_15 = arith.constant 0 : index
    %c0_16 = arith.constant 0 : index
    %19 = vector.load %arg8[%c0_15, %c0_16] : memref<1x16xf32, #tpu.memory_space<vmem>>, vector<1x16xf32>
    %20 = vector.broadcast %19 : vector<1x16xf32> to vector<256x16xf32>
    %21 = arith.addf %18, %20 : vector<256x16xf32>
    %22 = vector.extract_strided_slice %21 {offsets = [0, 0], sizes = [256, 8], strides = [1, 1]} : vector<256x16xf32> to vector<256x8xf32>
    %23 = vector.extract_strided_slice %21 {offsets = [0, 8], sizes = [256, 8], strides = [1, 1]} : vector<256x16xf32> to vector<256x8xf32>
    %c0_17 = arith.constant 0 : index
    %c0_18 = arith.constant 0 : index
    %24 = vector.load %arg2[%c0_17, %c0_18] : memref<256x8xf32, #tpu.memory_space<vmem>>, vector<256x8xf32>
    %cst_19 = arith.constant 5.000000e-01 : f32
    %25 = vector.broadcast %cst_19 : f32 to vector<256x8xf32>
    %26 = arith.mulf %25, %23 : vector<256x8xf32>
    %27 = math.exp %26 : vector<256x8xf32>
    %28 = arith.mulf %24, %27 : vector<256x8xf32>
    %29 = arith.addf %22, %28 : vector<256x8xf32>
    %30 = arith.truncf %29 : vector<256x8xf32> to vector<256x8xbf16>
    %c0_20 = arith.constant 0 : index
    %c0_21 = arith.constant 0 : index
    %31 = vector.load %arg9[%c0_20, %c0_21] : memref<8x64xbf16, #tpu.memory_space<vmem>>, vector<8x64xbf16>
    %cst_22 = arith.constant dense<0.000000e+00> : vector<256x64xf32>
    %32 = tpu.matmul %30, %31, %cst_22 {dimension_numbers = #tpu.dot_dimension_numbers<[1], [0], [0], [1], [0, 0, 1, 1], [], []>} : vector<256x8xbf16>, vector<8x64xbf16>, vector<256x64xf32> -> vector<256x64xf32>
    %33 = arith.truncf %32 : vector<256x64xf32> to vector<256x64xbf16>
    %c0_23 = arith.constant 0 : index
    %c0_24 = arith.constant 0 : index
    %34 = vector.load %arg10[%c0_23, %c0_24] : memref<1x64xbf16, #tpu.memory_space<vmem>>, vector<1x64xbf16>
    %35 = vector.broadcast %34 : vector<1x64xbf16> to vector<256x64xbf16>
    %36 = arith.addf %33, %35 : vector<256x64xbf16>
    %cst_25 = arith.constant 0.000000e+00 : bf16
    %37 = vector.broadcast %cst_25 : bf16 to vector<256x64xbf16>
    %38 = arith.maximumf %36, %37 : vector<256x64xbf16>
    %c0_26 = arith.constant 0 : index
    %c0_27 = arith.constant 0 : index
    %39 = vector.load %arg11[%c0_26, %c0_27] : memref<64x128xbf16, #tpu.memory_space<vmem>>, vector<64x128xbf16>
    %cst_28 = arith.constant dense<0.000000e+00> : vector<256x128xf32>
    %40 = tpu.matmul %38, %39, %cst_28 {dimension_numbers = #tpu.dot_dimension_numbers<[1], [0], [0], [1], [0, 0, 1, 1], [], []>} : vector<256x64xbf16>, vector<64x128xbf16>, vector<256x128xf32> -> vector<256x128xf32>
    %41 = arith.truncf %40 : vector<256x128xf32> to vector<256x128xbf16>
    %c0_29 = arith.constant 0 : index
    %c0_30 = arith.constant 0 : index
    %42 = vector.load %arg12[%c0_29, %c0_30] : memref<1x128xbf16, #tpu.memory_space<vmem>>, vector<1x128xbf16>
    %43 = vector.broadcast %42 : vector<1x128xbf16> to vector<256x128xbf16>
    %44 = arith.addf %41, %43 : vector<256x128xbf16>
    %cst_31 = arith.constant 0.000000e+00 : bf16
    %45 = vector.broadcast %cst_31 : bf16 to vector<256x128xbf16>
    %46 = arith.maximumf %44, %45 : vector<256x128xbf16>
    %c0_32 = arith.constant 0 : index
    %c0_33 = arith.constant 0 : index
    %47 = vector.load %arg13[%c0_32, %c0_33] : memref<128x32xbf16, #tpu.memory_space<vmem>>, vector<128x32xbf16>
    %cst_34 = arith.constant dense<0.000000e+00> : vector<256x32xf32>
    %48 = tpu.matmul %46, %47, %cst_34 {dimension_numbers = #tpu.dot_dimension_numbers<[1], [0], [0], [1], [0, 0, 1, 1], [], []>} : vector<256x128xbf16>, vector<128x32xbf16>, vector<256x32xf32> -> vector<256x32xf32>
    %c0_35 = arith.constant 0 : index
    %c0_36 = arith.constant 0 : index
    %49 = vector.load %arg14[%c0_35, %c0_36] : memref<1x32xf32, #tpu.memory_space<vmem>>, vector<1x32xf32>
    %50 = vector.broadcast %49 : vector<1x32xf32> to vector<256x32xf32>
    %51 = arith.addf %48, %50 : vector<256x32xf32>
    %52 = arith.truncf %51 : vector<256x32xf32> to vector<256x32xbf16>
    %c0_37 = arith.constant 0 : index
    %c0_38 = arith.constant 0 : index
    %53 = vector.load %arg15[%c0_37, %c0_38] : memref<32x128xbf16, #tpu.memory_space<vmem>>, vector<32x128xbf16>
    %cst_39 = arith.constant dense<0.000000e+00> : vector<256x128xf32>
    %54 = tpu.matmul %52, %53, %cst_39 {dimension_numbers = #tpu.dot_dimension_numbers<[1], [0], [0], [1], [0, 0, 1, 1], [], []>} : vector<256x32xbf16>, vector<32x128xbf16>, vector<256x128xf32> -> vector<256x128xf32>
    %55 = arith.truncf %54 : vector<256x128xf32> to vector<256x128xbf16>
    %c0_40 = arith.constant 0 : index
    %c0_41 = arith.constant 0 : index
    %56 = vector.load %arg16[%c0_40, %c0_41] : memref<1x128xbf16, #tpu.memory_space<vmem>>, vector<1x128xbf16>
    %57 = vector.broadcast %56 : vector<1x128xbf16> to vector<256x128xbf16>
    %58 = arith.addf %55, %57 : vector<256x128xbf16>
    %cst_42 = arith.constant 2.001950e-01 : bf16
    %59 = vector.broadcast %cst_42 : bf16 to vector<256x128xbf16>
    %60 = arith.mulf %59, %58 : vector<256x128xbf16>
    %61 = arith.maximumf %58, %60 : vector<256x128xbf16>
    %c0_43 = arith.constant 0 : index
    %c0_44 = arith.constant 0 : index
    %62 = vector.load %arg17[%c0_43, %c0_44] : memref<128x64xbf16, #tpu.memory_space<vmem>>, vector<128x64xbf16>
    %cst_45 = arith.constant dense<0.000000e+00> : vector<256x64xf32>
    %63 = tpu.matmul %61, %62, %cst_45 {dimension_numbers = #tpu.dot_dimension_numbers<[1], [0], [0], [1], [0, 0, 1, 1], [], []>} : vector<256x128xbf16>, vector<128x64xbf16>, vector<256x64xf32> -> vector<256x64xf32>
    %64 = arith.truncf %63 : vector<256x64xf32> to vector<256x64xbf16>
    %c0_46 = arith.constant 0 : index
    %c0_47 = arith.constant 0 : index
    %65 = vector.load %arg18[%c0_46, %c0_47] : memref<1x64xbf16, #tpu.memory_space<vmem>>, vector<1x64xbf16>
    %66 = vector.broadcast %65 : vector<1x64xbf16> to vector<256x64xbf16>
    %67 = arith.addf %64, %66 : vector<256x64xbf16>
    %cst_48 = arith.constant 2.001950e-01 : bf16
    %68 = vector.broadcast %cst_48 : bf16 to vector<256x64xbf16>
    %69 = arith.mulf %68, %67 : vector<256x64xbf16>
    %70 = arith.maximumf %67, %69 : vector<256x64xbf16>
    %71 = arith.extf %70 : vector<256x64xbf16> to vector<256x64xf32>
    %c0_49 = arith.constant 0 : index
    %c0_50 = arith.constant 0 : index
    %72 = vector.load %arg19[%c0_49, %c0_50] : memref<1x64xf32, #tpu.memory_space<vmem>>, vector<1x64xf32>
    %73 = vector.broadcast %72 : vector<1x64xf32> to vector<256x64xf32>
    %74 = arith.mulf %71, %73 : vector<256x64xf32>
    %cst_51 = arith.constant dense<0.000000e+00> : vector<256xf32>
    %75 = vector.multi_reduction <add>, %74, %cst_51 [1] : vector<256x64xf32> to vector<256xf32>
    %76 = vector.shape_cast %75 : vector<256xf32> to vector<256x1xf32>
    %c0_52 = arith.constant 0 : index
    %c0_53 = arith.constant 0 : index
    %77 = vector.load %arg20[%c0_52, %c0_53] : memref<1x1xf32, #tpu.memory_space<vmem>>, vector<1x1xf32>
    %78 = vector.broadcast %77 : vector<1x1xf32> to vector<256x1xf32>
    %79 = arith.addf %76, %78 : vector<256x1xf32>
    %80 = arith.negf %79 : vector<256x1xf32>
    %81 = math.exp %80 : vector<256x1xf32>
    %cst_54 = arith.constant 1.000000e+00 : f32
    %82 = vector.broadcast %cst_54 : f32 to vector<256x1xf32>
    %83 = arith.addf %82, %81 : vector<256x1xf32>
    %84 = arith.divf %82, %83 : vector<256x1xf32>
    %cst_55 = arith.constant 0.000000e+00 : f32
    %85 = vector.broadcast %cst_55 : f32 to vector<256x79xf32>
    %86 = tpu.concatenate %51, %21, %84, %85 in 1 : vector<256x32xf32>, vector<256x16xf32>, vector<256x1xf32>, vector<256x79xf32> -> vector<256x128xf32>
    %c0_56 = arith.constant 0 : index
    %c0_57 = arith.constant 0 : index
    %87 = vector.load %arg21[%c0_56, %c0_57] : memref<256x128xf32, #tpu.memory_space<vmem>>, vector<256x128xf32>
    tpu.vector_store %arg21[%c0_56, %c0_57], %86 {strides = array<i32>} : memref<256x128xf32, #tpu.memory_space<vmem>>, vector<256x128xf32>,
    return
  }
  func.func @transform_0(%arg0: i32) -> (i32, i32) {
    %c0_i32 = arith.constant 0 : i32
    %c0_i32_0 = arith.constant 0 : i32
    return %arg0, %c0_i32 : i32, i32
  }
  func.func @transform_1(%arg0: i32) -> (i32, i32) {
    %c0_i32 = arith.constant 0 : i32
    %c0_i32_0 = arith.constant 0 : i32
    return %arg0, %c0_i32 : i32, i32
  }
  func.func @transform_2(%arg0: i32) -> (i32, i32) {
    %c0_i32 = arith.constant 0 : i32
    %c0_i32_0 = arith.constant 0 : i32
    %c0_i32_1 = arith.constant 0 : i32
    return %c0_i32, %c0_i32_0 : i32, i32
  }
  func.func @transform_3(%arg0: i32) -> (i32, i32) {
    %c0_i32 = arith.constant 0 : i32
    %c0_i32_0 = arith.constant 0 : i32
    %c0_i32_1 = arith.constant 0 : i32
    return %c0_i32, %c0_i32_0 : i32, i32
  }
  func.func @transform_4(%arg0: i32) -> (i32, i32) {
    %c0_i32 = arith.constant 0 : i32
    %c0_i32_0 = arith.constant 0 : i32
    %c0_i32_1 = arith.constant 0 : i32
    return %c0_i32, %c0_i32_0 : i32, i32
  }
  func.func @transform_5(%arg0: i32) -> (i32, i32) {
    %c0_i32 = arith.constant 0 : i32
    %c0_i32_0 = arith.constant 0 : i32
    %c0_i32_1 = arith.constant 0 : i32
    return %c0_i32, %c0_i32_0 : i32, i32
  }
  func.func @transform_6(%arg0: i32) -> (i32, i32) {
    %c0_i32 = arith.constant 0 : i32
    %c0_i32_0 = arith.constant 0 : i32
    %c0_i32_1 = arith.constant 0 : i32
    return %c0_i32, %c0_i32_0 : i32, i32
  }
  func.func @transform_7(%arg0: i32) -> (i32, i32) {
    %c0_i32 = arith.constant 0 : i32
    %c0_i32_0 = arith.constant 0 : i32
    %c0_i32_1 = arith.constant 0 : i32
    return %c0_i32, %c0_i32_0 : i32, i32
  }
  func.func @transform_8(%arg0: i32) -> (i32, i32) {
    %c0_i32 = arith.constant 0 : i32
    %c0_i32_0 = arith.constant 0 : i32
    %c0_i32_1 = arith.constant 0 : i32
    return %c0_i32, %c0_i32_0 : i32, i32
  }
  func.func @transform_9(%arg0: i32) -> (i32, i32) {
    %c0_i32 = arith.constant 0 : i32
    %c0_i32_0 = arith.constant 0 : i32
    %c0_i32_1 = arith.constant 0 : i32
    return %c0_i32, %c0_i32_0 : i32, i32
  }
  func.func @transform_10(%arg0: i32) -> (i32, i32) {
    %c0_i32 = arith.constant 0 : i32
    %c0_i32_0 = arith.constant 0 : i32
    %c0_i32_1 = arith.constant 0 : i32
    return %c0_i32, %c0_i32_0 : i32, i32
  }
  func.func @transform_11(%arg0: i32) -> (i32, i32) {
    %c0_i32 = arith.constant 0 : i32
    %c0_i32_0 = arith.constant 0 : i32
    %c0_i32_1 = arith.constant 0 : i32
    return %c0_i32, %c0_i32_0 : i32, i32
  }
  func.func @transform_12(%arg0: i32) -> (i32, i32) {
    %c0_i32 = arith.constant 0 : i32
    %c0_i32_0 = arith.constant 0 : i32
    %c0_i32_1 = arith.constant 0 : i32
    return %c0_i32, %c0_i32_0 : i32, i32
  }
  func.func @transform_13(%arg0: i32) -> (i32, i32) {
    %c0_i32 = arith.constant 0 : i32
    %c0_i32_0 = arith.constant 0 : i32
    %c0_i32_1 = arith.constant 0 : i32
    return %c0_i32, %c0_i32_0 : i32, i32
  }
  func.func @transform_14(%arg0: i32) -> (i32, i32) {
    %c0_i32 = arith.constant 0 : i32
    %c0_i32_0 = arith.constant 0 : i32
    %c0_i32_1 = arith.constant 0 : i32
    return %c0_i32, %c0_i32_0 : i32, i32
  }
  func.func @transform_15(%arg0: i32) -> (i32, i32) {
    %c0_i32 = arith.constant 0 : i32
    %c0_i32_0 = arith.constant 0 : i32
    %c0_i32_1 = arith.constant 0 : i32
    return %c0_i32, %c0_i32_0 : i32, i32
  }
  func.func @transform_16(%arg0: i32) -> (i32, i32) {
    %c0_i32 = arith.constant 0 : i32
    %c0_i32_0 = arith.constant 0 : i32
    %c0_i32_1 = arith.constant 0 : i32
    return %c0_i32, %c0_i32_0 : i32, i32
  }
  func.func @transform_17(%arg0: i32) -> (i32, i32) {
    %c0_i32 = arith.constant 0 : i32
    %c0_i32_0 = arith.constant 0 : i32
    %c0_i32_1 = arith.constant 0 : i32
    return %c0_i32, %c0_i32_0 : i32, i32
  }
  func.func @transform_18(%arg0: i32) -> (i32, i32) {
    %c0_i32 = arith.constant 0 : i32
    %c0_i32_0 = arith.constant 0 : i32
    %c0_i32_1 = arith.constant 0 : i32
    return %c0_i32, %c0_i32_0 : i32, i32
  }
  func.func @transform_19(%arg0: i32) -> (i32, i32) {
    %c0_i32 = arith.constant 0 : i32
    %c0_i32_0 = arith.constant 0 : i32
    %c0_i32_1 = arith.constant 0 : i32
    return %c0_i32, %c0_i32_0 : i32, i32
  }
  func.func @transform_20(%arg0: i32) -> (i32, i32) {
    %c0_i32 = arith.constant 0 : i32
    %c0_i32_0 = arith.constant 0 : i32
    return %arg0, %c0_i32 : i32, i32
  }
}

</mosaic_0001>

<llo_original>
// kernel: tpu_custom_call.1
$region0: #{tpu_custom_call.1}
  #allocation0 [shape = 'u32[]', space=smem, size = 0x4, offset = 0x4, fixed_abs, tag = 'smem constant byte address 0x4 - core index']
  #allocation1 [shape = 'u32[144,128]{1,0:T(1,128)}', space=vmem, size = 0x12000, scoped, tag = 'internal scratch']
  #allocation2 [shape = 'f32[1,1]{1,0:T(1,128)S(1)}', space=vmem, size = 0x200, scoped, tag = 'scoped memory for tpu_custom_call.1']
  %s0 = inlined_call_operand.vmem [shape: bf16[512,32], index: 0, kind: input, shape index: {}]
  %s1 = inlined_call_operand.vmem [shape: f32[512,8], index: 1, kind: input, shape index: {}]
  %s2 = inlined_call_operand.vmem [shape: bf16[32,128], index: 2, kind: input, shape index: {}]
  %s3 = inlined_call_operand.vmem [shape: bf16[1,128], index: 3, kind: input, shape index: {}]
  %s4 = inlined_call_operand.vmem [shape: bf16[128,64], index: 4, kind: input, shape index: {}]
  %s5 = inlined_call_operand.vmem [shape: bf16[1,64], index: 5, kind: input, shape index: {}]
  %s6 = inlined_call_operand.vmem [shape: bf16[64,16], index: 6, kind: input, shape index: {}]
  %s7 = inlined_call_operand.vmem [shape: f32[1,16], index: 7, kind: input, shape index: {}]
  %s8 = inlined_call_operand.vmem [shape: bf16[8,64], index: 8, kind: input, shape index: {}]
  %s9 = inlined_call_operand.vmem [shape: bf16[1,64], index: 9, kind: input, shape index: {}]
  %s10 = inlined_call_operand.vmem [shape: bf16[64,128], index: 10, kind: input, shape index: {}]
  %s11 = inlined_call_operand.vmem [shape: bf16[1,128], index: 11, kind: input, shape index: {}]
  %s12 = inlined_call_operand.vmem [shape: bf16[128,32], index: 12, kind: input, shape index: {}]
  %s13 = inlined_call_operand.vmem [shape: f32[1,32], index: 13, kind: input, shape index: {}]
  %s14 = inlined_call_operand.vmem [shape: bf16[32,128], index: 14, kind: input, shape index: {}]
  %s15 = inlined_call_operand.vmem [shape: bf16[1,128], index: 15, kind: input, shape index: {}]
  %s16 = inlined_call_operand.vmem [shape: bf16[128,64], index: 16, kind: input, shape index: {}]
  %s17 = inlined_call_operand.vmem [shape: bf16[1,64], index: 17, kind: input, shape index: {}]
  %s18 = inlined_call_operand.vmem [shape: f32[1,64], index: 18, kind: input, shape index: {}]
  %s19 = inlined_call_operand.<no memory space> [shape: f32[1,1], index: 19, kind: input, shape index: {}]
  %s20 = inlined_call_operand.hbm [shape: f32[512,128], index: 20, kind: output, shape index: {}]
  %s21 = sld [smem:[#allocation0]]
  $region113: #{tpu_custom_call.1} parent=0
    _
  %s23 = ssub.s32 1, %s21
  %s24 = scalar_select 0, %s23, %s21
  %v25 = vstv %s19
  %26 = vst [vmem:[#allocation2] sm:$0x1] %v25
  $region1: #{tpu_custom_call.1} parent=0
    #allocation3 [shape = 'u8[262144]{0}', space=vmem, size = 0x40000, scoped, tag = 'output window, operand 0']
    #allocation4 [shape = 's32[2]{0}', space=sflag, size = 0x8, scoped, tag = 'scoped memory for tpu_custom_call.1']
    %27 = vsyncpa [#allocation4], 0
    %s28 = scalar_lea.sflag [#allocation4], 1
    %29 = vsyncpa %s28, 0
    loop: start=0, step=1, limit=4
    $region2: #{tpu_custom_call.1} parent=1 // loop_pre_header
      _
    $region3: #{tpu_custom_call.1} parent=1 // loop_header
      %s31 = sphi 0, %s35
      %p32 = scmp.ge.s32.totalorder %s31, 4
      %s41 = sphi 0, %s43
      %s44 = sphi 0, %s41
      %s45 = sphi 0, %s44
      %s61 = sphi 0, %s45
      %s67 = sphi 0, %s69
      %s70 = sphi 0, %s67
      %s71 = sphi 0, %s70
      %s87 = sphi 0, %s71
      %s91 = sphi 0, %s91
      %s93 = sphi 0, %s91
      %s94 = sphi 0, %s93
      %s108 = sphi 0, %s94
      %s112 = sphi 0, %s112
      %s114 = sphi 0, %s112
      %s115 = sphi 0, %s114
      %s129 = sphi 0, %s115
      %s133 = sphi 0, %s133
      %s135 = sphi 0, %s133
      %s136 = sphi 0, %s135
      %s150 = sphi 0, %s136
      %s154 = sphi 0, %s154
      %s156 = sphi 0, %s154
      %s157 = sphi 0, %s156
      %s171 = sphi 0, %s157
      %s175 = sphi 0, %s175
      %s177 = sphi 0, %s175
      %s178 = sphi 0, %s177
      %s192 = sphi 0, %s178
      %s196 = sphi 0, %s196
      %s198 = sphi 0, %s196
      %s199 = sphi 0, %s198
      %s213 = sphi 0, %s199
      %s217 = sphi 0, %s217
      %s219 = sphi 0, %s217
      %s220 = sphi 0, %s219
      %s234 = sphi 0, %s220
      %s238 = sphi 0, %s238
      %s240 = sphi 0, %s238
      %s241 = sphi 0, %s240
      %s255 = sphi 0, %s241
      %s259 = sphi 0, %s259
      %s261 = sphi 0, %s259
      %s262 = sphi 0, %s261
      %s276 = sphi 0, %s262
      %s280 = sphi 0, %s280
      %s282 = sphi 0, %s280
      %s283 = sphi 0, %s282
      %s297 = sphi 0, %s283
      %s301 = sphi 0, %s301
      %s303 = sphi 0, %s301
      %s304 = sphi 0, %s303
      %s318 = sphi 0, %s304
      %s322 = sphi 0, %s322
      %s324 = sphi 0, %s322
      %s325 = sphi 0, %s324
      %s339 = sphi 0, %s325
      %s343 = sphi 0, %s343
      %s345 = sphi 0, %s343
      %s346 = sphi 0, %s345
      %s360 = sphi 0, %s346
      %s364 = sphi 0, %s364
      %s366 = sphi 0, %s364
      %s367 = sphi 0, %s366
      %s381 = sphi 0, %s367
      %s385 = sphi 0, %s385
      %s387 = sphi 0, %s385
      %s388 = sphi 0, %s387
      %s402 = sphi 0, %s388
      %s406 = sphi 0, %s406
      %s408 = sphi 0, %s406
      %s409 = sphi 0, %s408
      %s423 = sphi 0, %s409
      %s427 = sphi 0, %s427
      %s429 = sphi 0, %s427
      %s430 = sphi 0, %s429
      %s444 = sphi 0, %s430
      %s448 = sphi 0, %s448
      %s450 = sphi 0, %s448
      %s451 = sphi 0, %s450
      %s465 = sphi 0, %s451
      %s471 = sphi 0, %s473
      %s474 = sphi 0, %s471
      %s475 = sphi 0, %s474
      %s491 = sphi 0, %s475
    $region4: #{tpu_custom_call.1} parent=1 // loop_header_branch
      %34 = sbr.rel (%p32) target = $region8
    $region5: #{tpu_custom_call.1} parent=1 // loop_body
      %s36 = ssub.s32 %s31, 1
      %s37 = ssub.s32 %s31, 2
      %s38 = sadd.s32 %s31, 1
      %s39 = ssub.s32 %s31, %s38
      %p40 = scmp.eq.s32.totalorder %s39, 0
      %s42 = sadd.s32 %s41, 1
      %s43 = scalar_select %p40, %s41, %s42
      %p46 = pneg %p40
      %p47 = scmp.eq.s32.totalorder %s31, 1
      %p48 = por %p46, %p47
      %p49 = scmp.ne.s32.totalorder %s41, %s44
      %p50 = scmp.eq.s32.totalorder %s31, 0
      %p51 = por %p49, %p50
      %p52 = scmp.ne.s32.totalorder %s41, %s44
      %p53 = scmp.eq.s32.totalorder %s36, 1
      %p54 = por %p52, %p53
      %p55 = scmp.ne.s32.totalorder %s44, %s45
      %p56 = scmp.eq.s32.totalorder %s36, 0
      %p57 = por %p55, %p56
      %p58 = scmp.ne.s32.totalorder %s44, %s45
      %p59 = scmp.eq.s32.totalorder %s37, 1
      %p60 = por %p58, %p59
      %p62 = scmp.ne.s32.totalorder %s45, %s61
      %p63 = scmp.eq.s32.totalorder %s37, 0
      %p64 = por %p62, %p63
      %s65 = ssub.s32 %s31, %s38
      %p66 = scmp.eq.s32.totalorder %s65, 0
      %s68 = sadd.s32 %s67, 1
      %s69 = scalar_select %p66, %s67, %s68
      %p72 = pneg %p66
      %p73 = scmp.eq.s32.totalorder %s31, 1
      %p74 = por %p72, %p73
      %p75 = scmp.ne.s32.totalorder %s67, %s70
      %p76 = scmp.eq.s32.totalorder %s31, 0
      %p77 = por %p75, %p76
      %p78 = scmp.ne.s32.totalorder %s67, %s70
      %p79 = scmp.eq.s32.totalorder %s36, 1
      %p80 = por %p78, %p79
      %p81 = scmp.ne.s32.totalorder %s70, %s71
      %p82 = scmp.eq.s32.totalorder %s36, 0
      %p83 = por %p81, %p82
      %p84 = scmp.ne.s32.totalorder %s70, %s71
      %p85 = scmp.eq.s32.totalorder %s37, 1
      %p86 = por %p84, %p85
      %p88 = scmp.ne.s32.totalorder %s71, %s87
      %p89 = scmp.eq.s32.totalorder %s37, 0
      %p90 = por %p88, %p89
      %s92 = sadd.s32 %s91, 1
      %p95 = scmp.eq.s32.totalorder %s31, 1
      %p96 = scmp.ne.s32.totalorder %s91, %s93
      %p97 = scmp.eq.s32.totalorder %s31, 0
      %p98 = por %p96, %p97
      %p99 = scmp.ne.s32.totalorder %s91, %s93
      %p100 = scmp.eq.s32.totalorder %s36, 1
      %p101 = por %p99, %p100
      %p102 = scmp.ne.s32.totalorder %s93, %s94
      %p103 = scmp.eq.s32.totalorder %s36, 0
      %p104 = por %p102, %p103
      %p105 = scmp.ne.s32.totalorder %s93, %s94
      %p106 = scmp.eq.s32.totalorder %s37, 1
      %p107 = por %p105, %p106
      %p109 = scmp.ne.s32.totalorder %s94, %s108
      %p110 = scmp.eq.s32.totalorder %s37, 0
      %p111 = por %p109, %p110
      %s113 = sadd.s32 %s112, 1
      %p116 = scmp.eq.s32.totalorder %s31, 1
      %p117 = scmp.ne.s32.totalorder %s112, %s114
      %p118 = scmp.eq.s32.totalorder %s31, 0
      %p119 = por %p117, %p118
      %p120 = scmp.ne.s32.totalorder %s112, %s114
      %p121 = scmp.eq.s32.totalorder %s36, 1
      %p122 = por %p120, %p121
      %p123 = scmp.ne.s32.totalorder %s114, %s115
      %p124 = scmp.eq.s32.totalorder %s36, 0
      %p125 = por %p123, %p124
      %p126 = scmp.ne.s32.totalorder %s114, %s115
      %p127 = scmp.eq.s32.totalorder %s37, 1
      %p128 = por %p126, %p127
      %p130 = scmp.ne.s32.totalorder %s115, %s129
      %p131 = scmp.eq.s32.totalorder %s37, 0
      %p132 = por %p130, %p131
      %s134 = sadd.s32 %s133, 1
      %p137 = scmp.eq.s32.totalorder %s31, 1
      %p138 = scmp.ne.s32.totalorder %s133, %s135
      %p139 = scmp.eq.s32.totalorder %s31, 0
      %p140 = por %p138, %p139
      %p141 = scmp.ne.s32.totalorder %s133, %s135
      %p142 = scmp.eq.s32.totalorder %s36, 1
      %p143 = por %p141, %p142
      %p144 = scmp.ne.s32.totalorder %s135, %s136
      %p145 = scmp.eq.s32.totalorder %s36, 0
      %p146 = por %p144, %p145
      %p147 = scmp.ne.s32.totalorder %s135, %s136
      %p148 = scmp.eq.s32.totalorder %s37, 1
      %p149 = por %p147, %p148
      %p151 = scmp.ne.s32.totalorder %s136, %s150
      %p152 = scmp.eq.s32.totalorder %s37, 0
      %p153 = por %p151, %p152
      %s155 = sadd.s32 %s154, 1
      %p158 = scmp.eq.s32.totalorder %s31, 1
      %p159 = scmp.ne.s32.totalorder %s154, %s156
      %p160 = scmp.eq.s32.totalorder %s31, 0
      %p161 = por %p159, %p160
      %p162 = scmp.ne.s32.totalorder %s154, %s156
      %p163 = scmp.eq.s32.totalorder %s36, 1
      %p164 = por %p162, %p163
      %p165 = scmp.ne.s32.totalorder %s156, %s157
      %p166 = scmp.eq.s32.totalorder %s36, 0
      %p167 = por %p165, %p166
      %p168 = scmp.ne.s32.totalorder %s156, %s157
      %p169 = scmp.eq.s32.totalorder %s37, 1
      %p170 = por %p168, %p169
      %p172 = scmp.ne.s32.totalorder %s157, %s171
      %p173 = scmp.eq.s32.totalorder %s37, 0
      %p174 = por %p172, %p173
      %s176 = sadd.s32 %s175, 1
      %p179 = scmp.eq.s32.totalorder %s31, 1
      %p180 = scmp.ne.s32.totalorder %s175, %s177
      %p181 = scmp.eq.s32.totalorder %s31, 0
      %p182 = por %p180, %p181
      %p183 = scmp.ne.s32.totalorder %s175, %s177
      %p184 = scmp.eq.s32.totalorder %s36, 1
      %p185 = por %p183, %p184
      %p186 = scmp.ne.s32.totalorder %s177, %s178
      %p187 = scmp.eq.s32.totalorder %s36, 0
      %p188 = por %p186, %p187
      %p189 = scmp.ne.s32.totalorder %s177, %s178
      %p190 = scmp.eq.s32.totalorder %s37, 1
      %p191 = por %p189, %p190
      %p193 = scmp.ne.s32.totalorder %s178, %s192
      %p194 = scmp.eq.s32.totalorder %s37, 0
      %p195 = por %p193, %p194
      %s197 = sadd.s32 %s196, 1
      %p200 = scmp.eq.s32.totalorder %s31, 1
      %p201 = scmp.ne.s32.totalorder %s196, %s198
      %p202 = scmp.eq.s32.totalorder %s31, 0
      %p203 = por %p201, %p202
      %p204 = scmp.ne.s32.totalorder %s196, %s198
      %p205 = scmp.eq.s32.totalorder %s36, 1
      %p206 = por %p204, %p205
      %p207 = scmp.ne.s32.totalorder %s198, %s199
      %p208 = scmp.eq.s32.totalorder %s36, 0
      %p209 = por %p207, %p208
      %p210 = scmp.ne.s32.totalorder %s198, %s199
      %p211 = scmp.eq.s32.totalorder %s37, 1
      %p212 = por %p210, %p211
      %p214 = scmp.ne.s32.totalorder %s199, %s213
      %p215 = scmp.eq.s32.totalorder %s37, 0
      %p216 = por %p214, %p215
      %s218 = sadd.s32 %s217, 1
      %p221 = scmp.eq.s32.totalorder %s31, 1
      %p222 = scmp.ne.s32.totalorder %s217, %s219
      %p223 = scmp.eq.s32.totalorder %s31, 0
      %p224 = por %p222, %p223
      %p225 = scmp.ne.s32.totalorder %s217, %s219
      %p226 = scmp.eq.s32.totalorder %s36, 1
      %p227 = por %p225, %p226
      %p228 = scmp.ne.s32.totalorder %s219, %s220
      %p229 = scmp.eq.s32.totalorder %s36, 0
      %p230 = por %p228, %p229
      %p231 = scmp.ne.s32.totalorder %s219, %s220
      %p232 = scmp.eq.s32.totalorder %s37, 1
      %p233 = por %p231, %p232
      %p235 = scmp.ne.s32.totalorder %s220, %s234
      %p236 = scmp.eq.s32.totalorder %s37, 0
      %p237 = por %p235, %p236
      %s239 = sadd.s32 %s238, 1
      %p242 = scmp.eq.s32.totalorder %s31, 1
      %p243 = scmp.ne.s32.totalorder %s238, %s240
      %p244 = scmp.eq.s32.totalorder %s31, 0
      %p245 = por %p243, %p244
      %p246 = scmp.ne.s32.totalorder %s238, %s240
      %p247 = scmp.eq.s32.totalorder %s36, 1
      %p248 = por %p246, %p247
      %p249 = scmp.ne.s32.totalorder %s240, %s241
      %p250 = scmp.eq.s32.totalorder %s36, 0
      %p251 = por %p249, %p250
      %p252 = scmp.ne.s32.totalorder %s240, %s241
      %p253 = scmp.eq.s32.totalorder %s37, 1
      %p254 = por %p252, %p253
      %p256 = scmp.ne.s32.totalorder %s241, %s255
      %p257 = scmp.eq.s32.totalorder %s37, 0
      %p258 = por %p256, %p257
      %s260 = sadd.s32 %s259, 1
      %p263 = scmp.eq.s32.totalorder %s31, 1
      %p264 = scmp.ne.s32.totalorder %s259, %s261
      %p265 = scmp.eq.s32.totalorder %s31, 0
      %p266 = por %p264, %p265
      %p267 = scmp.ne.s32.totalorder %s259, %s261
      %p268 = scmp.eq.s32.totalorder %s36, 1
      %p269 = por %p267, %p268
      %p270 = scmp.ne.s32.totalorder %s261, %s262
      %p271 = scmp.eq.s32.totalorder %s36, 0
      %p272 = por %p270, %p271
      %p273 = scmp.ne.s32.totalorder %s261, %s262
      %p274 = scmp.eq.s32.totalorder %s37, 1
      %p275 = por %p273, %p274
      %p277 = scmp.ne.s32.totalorder %s262, %s276
      %p278 = scmp.eq.s32.totalorder %s37, 0
      %p279 = por %p277, %p278
      %s281 = sadd.s32 %s280, 1
      %p284 = scmp.eq.s32.totalorder %s31, 1
      %p285 = scmp.ne.s32.totalorder %s280, %s282
      %p286 = scmp.eq.s32.totalorder %s31, 0
      %p287 = por %p285, %p286
      %p288 = scmp.ne.s32.totalorder %s280, %s282
      %p289 = scmp.eq.s32.totalorder %s36, 1
      %p290 = por %p288, %p289
      %p291 = scmp.ne.s32.totalorder %s282, %s283
      %p292 = scmp.eq.s32.totalorder %s36, 0
      %p293 = por %p291, %p292
      %p294 = scmp.ne.s32.totalorder %s282, %s283
      %p295 = scmp.eq.s32.totalorder %s37, 1
      %p296 = por %p294, %p295
      %p298 = scmp.ne.s32.totalorder %s283, %s297
      %p299 = scmp.eq.s32.totalorder %s37, 0
      %p300 = por %p298, %p299
      %s302 = sadd.s32 %s301, 1
      %p305 = scmp.eq.s32.totalorder %s31, 1
      %p306 = scmp.ne.s32.totalorder %s301, %s303
      %p307 = scmp.eq.s32.totalorder %s31, 0
      %p308 = por %p306, %p307
      %p309 = scmp.ne.s32.totalorder %s301, %s303
      %p310 = scmp.eq.s32.totalorder %s36, 1
      %p311 = por %p309, %p310
      %p312 = scmp.ne.s32.totalorder %s303, %s304
      %p313 = scmp.eq.s32.totalorder %s36, 0
      %p314 = por %p312, %p313
      %p315 = scmp.ne.s32.totalorder %s303, %s304
      %p316 = scmp.eq.s32.totalorder %s37, 1
      %p317 = por %p315, %p316
      %p319 = scmp.ne.s32.totalorder %s304, %s318
      %p320 = scmp.eq.s32.totalorder %s37, 0
      %p321 = por %p319, %p320
      %s323 = sadd.s32 %s322, 1
      %p326 = scmp.eq.s32.totalorder %s31, 1
      %p327 = scmp.ne.s32.totalorder %s322, %s324
      %p328 = scmp.eq.s32.totalorder %s31, 0
      %p329 = por %p327, %p328
      %p330 = scmp.ne.s32.totalorder %s322, %s324
      %p331 = scmp.eq.s32.totalorder %s36, 1
      %p332 = por %p330, %p331
      %p333 = scmp.ne.s32.totalorder %s324, %s325
      %p334 = scmp.eq.s32.totalorder %s36, 0
      %p335 = por %p333, %p334
      %p336 = scmp.ne.s32.totalorder %s324, %s325
      %p337 = scmp.eq.s32.totalorder %s37, 1
      %p338 = por %p336, %p337
      %p340 = scmp.ne.s32.totalorder %s325, %s339
      %p341 = scmp.eq.s32.totalorder %s37, 0
      %p342 = por %p340, %p341
      %s344 = sadd.s32 %s343, 1
      %p347 = scmp.eq.s32.totalorder %s31, 1
      %p348 = scmp.ne.s32.totalorder %s343, %s345
      %p349 = scmp.eq.s32.totalorder %s31, 0
      %p350 = por %p348, %p349
      %p351 = scmp.ne.s32.totalorder %s343, %s345
      %p352 = scmp.eq.s32.totalorder %s36, 1
      %p353 = por %p351, %p352
      %p354 = scmp.ne.s32.totalorder %s345, %s346
      %p355 = scmp.eq.s32.totalorder %s36, 0
      %p356 = por %p354, %p355
      %p357 = scmp.ne.s32.totalorder %s345, %s346
      %p358 = scmp.eq.s32.totalorder %s37, 1
      %p359 = por %p357, %p358
      %p361 = scmp.ne.s32.totalorder %s346, %s360
      %p362 = scmp.eq.s32.totalorder %s37, 0
      %p363 = por %p361, %p362
      %s365 = sadd.s32 %s364, 1
      %p368 = scmp.eq.s32.totalorder %s31, 1
      %p369 = scmp.ne.s32.totalorder %s364, %s366
      %p370 = scmp.eq.s32.totalorder %s31, 0
      %p371 = por %p369, %p370
      %p372 = scmp.ne.s32.totalorder %s364, %s366
      %p373 = scmp.eq.s32.totalorder %s36, 1
      %p374 = por %p372, %p373
      %p375 = scmp.ne.s32.totalorder %s366, %s367
      %p376 = scmp.eq.s32.totalorder %s36, 0
      %p377 = por %p375, %p376
      %p378 = scmp.ne.s32.totalorder %s366, %s367
      %p379 = scmp.eq.s32.totalorder %s37, 1
      %p380 = por %p378, %p379
      %p382 = scmp.ne.s32.totalorder %s367, %s381
      %p383 = scmp.eq.s32.totalorder %s37, 0
      %p384 = por %p382, %p383
      %s386 = sadd.s32 %s385, 1
      %p389 = scmp.eq.s32.totalorder %s31, 1
      %p390 = scmp.ne.s32.totalorder %s385, %s387
      %p391 = scmp.eq.s32.totalorder %s31, 0
      %p392 = por %p390, %p391
      %p393 = scmp.ne.s32.totalorder %s385, %s387
      %p394 = scmp.eq.s32.totalorder %s36, 1
      %p395 = por %p393, %p394
      %p396 = scmp.ne.s32.totalorder %s387, %s388
      %p397 = scmp.eq.s32.totalorder %s36, 0
      %p398 = por %p396, %p397
      %p399 = scmp.ne.s32.totalorder %s387, %s388
      %p400 = scmp.eq.s32.totalorder %s37, 1
      %p401 = por %p399, %p400
      %p403 = scmp.ne.s32.totalorder %s388, %s402
      %p404 = scmp.eq.s32.totalorder %s37, 0
      %p405 = por %p403, %p404
      %s407 = sadd.s32 %s406, 1
      %p410 = scmp.eq.s32.totalorder %s31, 1
      %p411 = scmp.ne.s32.totalorder %s406, %s408
      %p412 = scmp.eq.s32.totalorder %s31, 0
      %p413 = por %p411, %p412
      %p414 = scmp.ne.s32.totalorder %s406, %s408
      %p415 = scmp.eq.s32.totalorder %s36, 1
      %p416 = por %p414, %p415
      %p417 = scmp.ne.s32.totalorder %s408, %s409
      %p418 = scmp.eq.s32.totalorder %s36, 0
      %p419 = por %p417, %p418
      %p420 = scmp.ne.s32.totalorder %s408, %s409
      %p421 = scmp.eq.s32.totalorder %s37, 1
      %p422 = por %p420, %p421
      %p424 = scmp.ne.s32.totalorder %s409, %s423
      %p425 = scmp.eq.s32.totalorder %s37, 0
      %p426 = por %p424, %p425
      %s428 = sadd.s32 %s427, 1
      %p431 = scmp.eq.s32.totalorder %s31, 1
      %p432 = scmp.ne.s32.totalorder %s427, %s429
      %p433 = scmp.eq.s32.totalorder %s31, 0
      %p434 = por %p432, %p433
      %p435 = scmp.ne.s32.totalorder %s427, %s429
      %p436 = scmp.eq.s32.totalorder %s36, 1
      %p437 = por %p435, %p436
      %p438 = scmp.ne.s32.totalorder %s429, %s430
      %p439 = scmp.eq.s32.totalorder %s36, 0
      %p440 = por %p438, %p439
      %p441 = scmp.ne.s32.totalorder %s429, %s430
      %p442 = scmp.eq.s32.totalorder %s37, 1
      %p443 = por %p441, %p442
      %p445 = scmp.ne.s32.totalorder %s430, %s444
      %p446 = scmp.eq.s32.totalorder %s37, 0
      %p447 = por %p445, %p446
      %s449 = sadd.s32 %s448, 1
      %p452 = scmp.eq.s32.totalorder %s31, 1
      %p453 = scmp.ne.s32.totalorder %s448, %s450
      %p454 = scmp.eq.s32.totalorder %s31, 0
      %p455 = por %p453, %p454
      %p456 = scmp.ne.s32.totalorder %s448, %s450
      %p457 = scmp.eq.s32.totalorder %s36, 1
      %p458 = por %p456, %p457
      %p459 = scmp.ne.s32.totalorder %s450, %s451
      %p460 = scmp.eq.s32.totalorder %s36, 0
      %p461 = por %p459, %p460
      %p462 = scmp.ne.s32.totalorder %s450, %s451
      %p463 = scmp.eq.s32.totalorder %s37, 1
      %p464 = por %p462, %p463
      %p466 = scmp.ne.s32.totalorder %s451, %s465
      %p467 = scmp.eq.s32.totalorder %s37, 0
      %p468 = por %p466, %p467
      %s469 = ssub.s32 %s31, %s38
      %p470 = scmp.eq.s32.totalorder %s469, 0
      %s472 = sadd.s32 %s471, 1
      %s473 = scalar_select %p470, %s471, %s472
      %p476 = pneg %p470
      %p477 = scmp.eq.s32.totalorder %s31, 1
      %p478 = por %p476, %p477
      %p479 = scmp.ne.s32.totalorder %s471, %s474
      %p480 = scmp.eq.s32.totalorder %s31, 0
      %p481 = por %p479, %p480
      %p482 = scmp.ne.s32.totalorder %s471, %s474
      %p483 = scmp.eq.s32.totalorder %s36, 1
      %p484 = por %p482, %p483
      %p485 = scmp.ne.s32.totalorder %s474, %s475
      %p486 = scmp.eq.s32.totalorder %s36, 0
      %p487 = por %p485, %p486
      %p488 = scmp.ne.s32.totalorder %s474, %s475
      %p489 = scmp.eq.s32.totalorder %s37, 1
      %p490 = por %p488, %p489
      %p492 = scmp.ne.s32.totalorder %s475, %s491
      %p493 = scmp.eq.s32.totalorder %s37, 0
      %p494 = por %p492, %p493
      %p495 = scmp.le.s32.totalorder 1, %s31
      %p496 = scmp.lt.s32.totalorder %s31, 3
      %p497 = pnand %p495, %p496
      %p498 = pneg %p497
      // Predicated region
      $region9: #{tpu_custom_call.1} parent=5 // pred_check
        _
      $region10: #{tpu_custom_call.1} parent=5 // pred_check_branch
        %500 = sbr.rel (%p497) target = $region12
      $region11: #{tpu_custom_call.1} parent=5 // pred_region
        %s501 = ssub.s32 %s31, 1
        // Predicated region
        $region13: #{tpu_custom_call.1} parent=11 // pred_check
          %p502 = pneg %p104
        $region14: #{tpu_custom_call.1} parent=11 // pred_check_branch
          %504 = sbr.rel (%p502) target = $region16
        $region15: #{tpu_custom_call.1} parent=11 // pred_region
          _
        $region16: #{tpu_custom_call.1} parent=11 // pred_fallthru
          _
        // Predicated region
        $region17: #{tpu_custom_call.1} parent=11 // pred_check
          %p505 = pneg %p125
        $region18: #{tpu_custom_call.1} parent=11 // pred_check_branch
          %507 = sbr.rel (%p505) target = $region20
        $region19: #{tpu_custom_call.1} parent=11 // pred_region
          _
        $region20: #{tpu_custom_call.1} parent=11 // pred_fallthru
          _
        // Predicated region
        $region21: #{tpu_custom_call.1} parent=11 // pred_check
          %p508 = pneg %p146
        $region22: #{tpu_custom_call.1} parent=11 // pred_check_branch
          %510 = sbr.rel (%p508) target = $region24
        $region23: #{tpu_custom_call.1} parent=11 // pred_region
          _
        $region24: #{tpu_custom_call.1} parent=11 // pred_fallthru
          _
        // Predicated region
        $region25: #{tpu_custom_call.1} parent=11 // pred_check
          %p511 = pneg %p167
        $region26: #{tpu_custom_call.1} parent=11 // pred_check_branch
          %513 = sbr.rel (%p511) target = $region28
        $region27: #{tpu_custom_call.1} parent=11 // pred_region
          _
        $region28: #{tpu_custom_call.1} parent=11 // pred_fallthru
          _
        // Predicated region
        $region29: #{tpu_custom_call.1} parent=11 // pred_check
          %p514 = pneg %p188
        $region30: #{tpu_custom_call.1} parent=11 // pred_check_branch
          %516 = sbr.rel (%p514) target = $region32
        $region31: #{tpu_custom_call.1} parent=11 // pred_region
          _
        $region32: #{tpu_custom_call.1} parent=11 // pred_fallthru
          _
        // Predicated region
        $region33: #{tpu_custom_call.1} parent=11 // pred_check
          %p517 = pneg %p209
        $region34: #{tpu_custom_call.1} parent=11 // pred_check_branch
          %519 = sbr.rel (%p517) target = $region36
        $region35: #{tpu_custom_call.1} parent=11 // pred_region
          _
        $region36: #{tpu_custom_call.1} parent=11 // pred_fallthru
          _
        // Predicated region
        $region37: #{tpu_custom_call.1} parent=11 // pred_check
          %p520 = pneg %p230
        $region38: #{tpu_custom_call.1} parent=11 // pred_check_branch
          %522 = sbr.rel (%p520) target = $region40
        $region39: #{tpu_custom_call.1} parent=11 // pred_region
          _
        $region40: #{tpu_custom_call.1} parent=11 // pred_fallthru
          _
        // Predicated region
        $region41: #{tpu_custom_call.1} parent=11 // pred_check
          %p523 = pneg %p251
        $region42: #{tpu_custom_call.1} parent=11 // pred_check_branch
          %525 = sbr.rel (%p523) target = $region44
        $region43: #{tpu_custom_call.1} parent=11 // pred_region
          _
        $region44: #{tpu_custom_call.1} parent=11 // pred_fallthru
          _
        // Predicated region
        $region45: #{tpu_custom_call.1} parent=11 // pred_check
          %p526 = pneg %p272
        $region46: #{tpu_custom_call.1} parent=11 // pred_check_branch
          %528 = sbr.rel (%p526) target = $region48
        $region47: #{tpu_custom_call.1} parent=11 // pred_region
          _
        $region48: #{tpu_custom_call.1} parent=11 // pred_fallthru
          _
        // Predicated region
        $region49: #{tpu_custom_call.1} parent=11 // pred_check
          %p529 = pneg %p293
        $region50: #{tpu_custom_call.1} parent=11 // pred_check_branch
          %531 = sbr.rel (%p529) target = $region52
        $region51: #{tpu_custom_call.1} parent=11 // pred_region
          _
        $region52: #{tpu_custom_call.1} parent=11 // pred_fallthru
          _
        // Predicated region
        $region53: #{tpu_custom_call.1} parent=11 // pred_check
          %p532 = pneg %p314
        $region54: #{tpu_custom_call.1} parent=11 // pred_check_branch
          %534 = sbr.rel (%p532) target = $region56
        $region55: #{tpu_custom_call.1} parent=11 // pred_region
          _
        $region56: #{tpu_custom_call.1} parent=11 // pred_fallthru
          _
        // Predicated region
        $region57: #{tpu_custom_call.1} parent=11 // pred_check
          %p535 = pneg %p335
        $region58: #{tpu_custom_call.1} parent=11 // pred_check_branch
          %537 = sbr.rel (%p535) target = $region60
        $region59: #{tpu_custom_call.1} parent=11 // pred_region
          _
        $region60: #{tpu_custom_call.1} parent=11 // pred_fallthru
          _
        // Predicated region
        $region61: #{tpu_custom_call.1} parent=11 // pred_check
          %p538 = pneg %p356
        $region62: #{tpu_custom_call.1} parent=11 // pred_check_branch
          %540 = sbr.rel (%p538) target = $region64
        $region63: #{tpu_custom_call.1} parent=11 // pred_region
          _
        $region64: #{tpu_custom_call.1} parent=11 // pred_fallthru
          _
        // Predicated region
        $region65: #{tpu_custom_call.1} parent=11 // pred_check
          %p541 = pneg %p377
        $region66: #{tpu_custom_call.1} parent=11 // pred_check_branch
          %543 = sbr.rel (%p541) target = $region68
        $region67: #{tpu_custom_call.1} parent=11 // pred_region
          _
        $region68: #{tpu_custom_call.1} parent=11 // pred_fallthru
          _
        // Predicated region
        $region69: #{tpu_custom_call.1} parent=11 // pred_check
          %p544 = pneg %p398
        $region70: #{tpu_custom_call.1} parent=11 // pred_check_branch
          %546 = sbr.rel (%p544) target = $region72
        $region71: #{tpu_custom_call.1} parent=11 // pred_region
          _
        $region72: #{tpu_custom_call.1} parent=11 // pred_fallthru
          _
        // Predicated region
        $region73: #{tpu_custom_call.1} parent=11 // pred_check
          %p547 = pneg %p419
        $region74: #{tpu_custom_call.1} parent=11 // pred_check_branch
          %549 = sbr.rel (%p547) target = $region76
        $region75: #{tpu_custom_call.1} parent=11 // pred_region
          _
        $region76: #{tpu_custom_call.1} parent=11 // pred_fallthru
          _
        // Predicated region
        $region77: #{tpu_custom_call.1} parent=11 // pred_check
          %p550 = pneg %p440
        $region78: #{tpu_custom_call.1} parent=11 // pred_check_branch
          %552 = sbr.rel (%p550) target = $region80
        $region79: #{tpu_custom_call.1} parent=11 // pred_region
          _
        $region80: #{tpu_custom_call.1} parent=11 // pred_fallthru
          _
        // Predicated region
        $region81: #{tpu_custom_call.1} parent=11 // pred_check
          %p553 = pneg %p461
        $region82: #{tpu_custom_call.1} parent=11 // pred_check_branch
          %555 = sbr.rel (%p553) target = $region84
        $region83: #{tpu_custom_call.1} parent=11 // pred_region
          _
        $region84: #{tpu_custom_call.1} parent=11 // pred_fallthru
          _
      $region12: #{tpu_custom_call.1} parent=5 // pred_fallthru
        _
      %p556 = scmp.lt.s32.totalorder %s31, 2
      // Predicated region
      $region85: #{tpu_custom_call.1} parent=5 // pred_check
        %p557 = pneg %p556
      $region86: #{tpu_custom_call.1} parent=5 // pred_check_branch
        %559 = sbr.rel (%p557) target = $region88
      $region87: #{tpu_custom_call.1} parent=5 // pred_region
        // Predicated region
        $region89: #{tpu_custom_call.1} parent=87 // pred_check
          %p560 = pneg %p51
        $region90: #{tpu_custom_call.1} parent=87 // pred_check_branch
          %562 = sbr.rel (%p560) target = $region92
        $region91: #{tpu_custom_call.1} parent=87 // pred_region
          %s563 = smul.u32 32, %s31
          %p564 = scmp.lt.s32.totalorder %s563, 63
          %s565 = scalar_select %p564, %s563, 63
          %s566 = smul.addr %s565, 4
          %s567 = scalar_lea.vmem %s0, %s566
          %s568 = smul.u32 32, %s31
        $region92: #{tpu_custom_call.1} parent=87 // pred_fallthru
          _
        // Predicated region
        $region93: #{tpu_custom_call.1} parent=87 // pred_check
          %p569 = pneg %p77
        $region94: #{tpu_custom_call.1} parent=87 // pred_check_branch
          %571 = sbr.rel (%p569) target = $region96
        $region95: #{tpu_custom_call.1} parent=87 // pred_region
          %s572 = smul.u32 32, %s31
          %p573 = scmp.lt.s32.totalorder %s572, 63
          %s574 = scalar_select %p573, %s572, 63
          %s575 = smul.addr %s574, 8
          %s576 = scalar_lea.vmem %s1, %s575
          %s577 = smul.u32 32, %s31
        $region96: #{tpu_custom_call.1} parent=87 // pred_fallthru
          _
      $region88: #{tpu_custom_call.1} parent=5 // pred_fallthru
        _
      %p578 = scmp.le.s32.totalorder 1, %s31
      %p579 = scmp.lt.s32.totalorder %s31, 3
      %p580 = pnand %p578, %p579
      %p581 = pneg %p580
      // Predicated region
      $region97: #{tpu_custom_call.1} parent=5 // pred_check
        _
      $region98: #{tpu_custom_call.1} parent=5 // pred_check_branch
        %583 = sbr.rel (%p580) target = $region100
      $region99: #{tpu_custom_call.1} parent=5 // pred_region
        %s584 = ssub.s32 %s31, 1
        %s585 = smul.u32 32, %s36
        %p586 = scmp.lt.s32.totalorder %s585, 63
        %s587 = scalar_select %p586, %s585, 63
        %s588 = smul.addr %s587, 4
        %s589 = scalar_lea.vmem %s0, %s588
        %p590 = pneg %p57
        %p591 = pneg %p54
        %s592 = smul.u32 32, %s36
        %p593 = scmp.lt.s32.totalorder %s592, 63
        %s594 = scalar_select %p593, %s592, 63
        %s595 = smul.addr %s594, 8
        %s596 = scalar_lea.vmem %s1, %s595
        %p597 = pneg %p83
        %p598 = pneg %p80
        %p599 = pneg %p104
        %p600 = pneg %p101
        %p601 = pneg %p125
        %p602 = pneg %p122
        %p603 = pneg %p146
        %p604 = pneg %p143
        %p605 = pneg %p167
        %p606 = pneg %p164
        %p607 = pneg %p188
        %p608 = pneg %p185
        %p609 = pneg %p209
        %p610 = pneg %p206
        %p611 = pneg %p230
        %p612 = pneg %p227
        %p613 = pneg %p251
        %p614 = pneg %p248
        %p615 = pneg %p272
        %p616 = pneg %p269
        %p617 = pneg %p293
        %p618 = pneg %p290
        %p619 = pneg %p314
        %p620 = pneg %p311
        %p621 = pneg %p335
        %p622 = pneg %p332
        %p623 = pneg %p356
        %p624 = pneg %p353
        %p625 = pneg %p377
        %p626 = pneg %p374
        %p627 = pneg %p398
        %p628 = pneg %p395
        %p629 = pneg %p419
        %p630 = pneg %p416
        %p631 = pneg %p440
        %p632 = pneg %p437
        %p633 = pneg %p461
        %p634 = pneg %p458
        %p635 = pneg %p487
        %p636 = pneg %p484
        %s637 = sand.u32 %s474, 1
        %s638 = scalar_lea.sflag [#allocation4], %s637
        %s639 = sand.u32 %s474, 1
        %s640 = smul.addr %s639, 256
        %s641 = scalar_lea.vmem [#allocation3], %s640
        %s642 = smul.u32 32, %s36
        %p643 = scmp.lt.s32.totalorder %s642, 63
        %s644 = scalar_select %p643, %s642, 63
        %s645 = smul.addr %s644, 4
        %s646 = scalar_lea.vmem %s0, %s645
        %s647 = smul.u32 32, %s36
        %s648 = smul.u32 32, %s36
        %p649 = scmp.lt.s32.totalorder %s648, 63
        %s650 = scalar_select %p649, %s648, 63
        %s651 = smul.addr %s650, 8
        %s652 = scalar_lea.vmem %s1, %s651
        %s653 = smul.u32 32, %s36
        %s654 = smul.u32 32, %s36
        %v657 = vld [vmem:[%s646] sm:$0xf]
        %v658 = vld [vmem:[%s646 + $0x4] sm:$0xf]
        %v659 = vld [vmem:[%s646 + $0x8] sm:$0xf]
        %v660 = vld [vmem:[%s646 + $0xc] sm:$0xf]
        %v661 = vld [vmem:[%s646 + $0x10] sm:$0xf]
        %v662 = vld [vmem:[%s646 + $0x14] sm:$0xf]
        %v663 = vld [vmem:[%s646 + $0x18] sm:$0xf]
        %v664 = vld [vmem:[%s646 + $0x1c] sm:$0xf]
        %v665 = vld [vmem:[%s646 + $0x20] sm:$0xf]
        %v666 = vld [vmem:[%s646 + $0x24] sm:$0xf]
        %v667 = vld [vmem:[%s646 + $0x28] sm:$0xf]
        %v668 = vld [vmem:[%s646 + $0x2c] sm:$0xf]
        %v669 = vld [vmem:[%s646 + $0x30] sm:$0xf]
        %v670 = vld [vmem:[%s646 + $0x34] sm:$0xf]
        %v671 = vld [vmem:[%s646 + $0x38] sm:$0xf]
        %v672 = vld [vmem:[%s646 + $0x3c] sm:$0xf]
        %v673 = vld [vmem:[%s646 + $0x40] sm:$0xf]
        %v674 = vld [vmem:[%s646 + $0x44] sm:$0xf]
        %v675 = vld [vmem:[%s646 + $0x48] sm:$0xf]
        %v676 = vld [vmem:[%s646 + $0x4c] sm:$0xf]
        %v677 = vld [vmem:[%s646 + $0x50] sm:$0xf]
        %v678 = vld [vmem:[%s646 + $0x54] sm:$0xf]
        %v679 = vld [vmem:[%s646 + $0x58] sm:$0xf]
        %v680 = vld [vmem:[%s646 + $0x5c] sm:$0xf]
        %v681 = vld [vmem:[%s646 + $0x60] sm:$0xf]
        %v682 = vld [vmem:[%s646 + $0x64] sm:$0xf]
        %v683 = vld [vmem:[%s646 + $0x68] sm:$0xf]
        %v684 = vld [vmem:[%s646 + $0x6c] sm:$0xf]
        %v685 = vld [vmem:[%s646 + $0x70] sm:$0xf]
        %v686 = vld [vmem:[%s646 + $0x74] sm:$0xf]
        %v687 = vld [vmem:[%s646 + $0x78] sm:$0xf]
        %v688 = vld [vmem:[%s646 + $0x7c] sm:$0xf]
        %v689 = vld [vmem:[%s2] sm:$0xf]
        %v690 = vld [vmem:[%s2 + $0x4] sm:$0xf]
        %v691 = vld [vmem:[%s2 + $0x8] sm:$0xf]
        %v692 = vld [vmem:[%s2 + $0xc] sm:$0xf]
        %v725 = vunpack.c.l.b16 %v657
        %v726 = vunpack.c.l.b16 %v658
        %v727 = vunpack.c.l.b16 %v659
        %v728 = vunpack.c.l.b16 %v660
        %v729 = vunpack.c.l.b16 %v661
        %v730 = vunpack.c.l.b16 %v662
        %v731 = vunpack.c.l.b16 %v663
        %v732 = vunpack.c.l.b16 %v664
        %v733 = vunpack.c.l.b16 %v665
        %v734 = vunpack.c.l.b16 %v666
        %v735 = vunpack.c.l.b16 %v667
        %v736 = vunpack.c.l.b16 %v668
        %v737 = vunpack.c.l.b16 %v669
        %v738 = vunpack.c.l.b16 %v670
        %v739 = vunpack.c.l.b16 %v671
        %v740 = vunpack.c.l.b16 %v672
        %v741 = vunpack.c.l.b16 %v673
        %v742 = vunpack.c.l.b16 %v674
        %v743 = vunpack.c.l.b16 %v675
        %v744 = vunpack.c.l.b16 %v676
        %v745 = vunpack.c.l.b16 %v677
        %v746 = vunpack.c.l.b16 %v678
        %v747 = vunpack.c.l.b16 %v679
        %v748 = vunpack.c.l.b16 %v680
        %v749 = vunpack.c.l.b16 %v681
        %v750 = vunpack.c.l.b16 %v682
        %v751 = vunpack.c.l.b16 %v683
        %v752 = vunpack.c.l.b16 %v684
        %v753 = vunpack.c.l.b16 %v685
        %v754 = vunpack.c.l.b16 %v686
        %v755 = vunpack.c.l.b16 %v687
        %v756 = vunpack.c.l.b16 %v688
        %v757 = vpack.c.b16 %v726, %v725
        %v758 = vpack.c.b16 %v728, %v727
        %v759 = vpack.c.b16 %v730, %v729
        %v760 = vpack.c.b16 %v732, %v731
        %v761 = vpack.c.b16 %v734, %v733
        %v762 = vpack.c.b16 %v736, %v735
        %v763 = vpack.c.b16 %v738, %v737
        %v764 = vpack.c.b16 %v740, %v739
        %v765 = vpack.c.b16 %v742, %v741
        %v766 = vpack.c.b16 %v744, %v743
        %v767 = vpack.c.b16 %v746, %v745
        %v768 = vpack.c.b16 %v748, %v747
        %v769 = vpack.c.b16 %v750, %v749
        %v770 = vpack.c.b16 %v752, %v751
        %v771 = vpack.c.b16 %v754, %v753
        %v772 = vpack.c.b16 %v756, %v755
        %v777 = vunpack.c.l.b16 %v689
        %v778 = vunpack.c.l.b16 %v690
        %v779 = vunpack.c.l.b16 %v691
        %v780 = vunpack.c.l.b16 %v692
        %v781 = vpack.c.b16 %v778, %v777
        %v782 = vpack.c.b16 %v780, %v779
        %vm785 = vcmask 261120
        %v787 = vsel %vm785, %v757, 0
        %v790 = vsel %vm785, %v758, 0
        %v793 = vsel %vm785, %v759, 0
        %v796 = vsel %vm785, %v760, 0
        %v799 = vsel %vm785, %v761, 0
        %v802 = vsel %vm785, %v762, 0
        %v805 = vsel %vm785, %v763, 0
        %v808 = vsel %vm785, %v764, 0
        %v811 = vsel %vm785, %v765, 0
        %v814 = vsel %vm785, %v766, 0
        %v817 = vsel %vm785, %v767, 0
        %v820 = vsel %vm785, %v768, 0
        %v823 = vsel %vm785, %v769, 0
        %v826 = vsel %vm785, %v770, 0
        %v829 = vsel %vm785, %v771, 0
        %v832 = vsel %vm785, %v772, 0
        %834 = vmatprep.subr.bf16.mxu0 0
        %835 = vmatpush1.bf16.msra.mxu0 0
        %836 = vmatprep.subr.bf16.mxu0 0
        %837 = vmatpush1.bf16.msra.mxu0 0
        %838 = vmatprep.subr.bf16.mxu0 0
        %839 = vmatpush1.bf16.msra.mxu0 0
        %840 = vmatprep.subr.bf16.mxu0 0
        %841 = vmatpush1.bf16.msra.mxu0 0
        %842 = vmatprep.subr.bf16.mxu0 0
        %843 = vmatpush1.bf16.msra.mxu0 0
        %844 = vmatprep.subr.bf16.mxu0 0
        %845 = vmatpush1.bf16.msra.mxu0 0
        %846 = vmatprep.subr.bf16.mxu0 0
        %847 = vmatpush1.bf16.msra.mxu0 %v782
        %848 = vmatprep.subr.bf16.mxu0 0
        %849 = vmatpush1.bf16.msra.mxu0 %v781
        %850 = vmatprep.subr.bf16.mxu0 0
        %851 = vmatpush2.bf16.msra.mxu0 0
        %852 = vmatprep.subr.bf16.mxu0 0
        %853 = vmatpush2.bf16.msra.mxu0 0
        %854 = vmatprep.subr.bf16.mxu0 0
        %855 = vmatpush2.bf16.msra.mxu0 0
        %856 = vmatprep.subr.bf16.mxu0 0
        %857 = vmatpush2.bf16.msra.mxu0 0
        %858 = vmatprep.subr.bf16.mxu0 0
        %859 = vmatpush2.bf16.msra.mxu0 0
        %860 = vmatprep.subr.bf16.mxu0 0
        %861 = vmatpush2.bf16.msra.mxu0 0
        %862 = vmatprep.subr.bf16.mxu0 0
        %863 = vmatpush2.bf16.msra.mxu0 0
        %864 = vmatprep.subr.bf16.mxu0 0
        %865 = vmatpush2.bf16.msra.mxu0 0
        %866 = vmatprep.mubr.bf16.mxu0 0
        %867 = vmatmul.mubr.bf16.gmra.mxu0 %v787
        %v868 = vpop.f32.mrf.mxu0
        %v869 = vadd.f32 0.0, %v868
        %v870 = vpop.f32.mrf.mxu0
        %v871 = vpop.f32.mrf.mxu0
        %v872 = vadd.f32 0.0, %v871
        %v873 = vpop.f32.mrf.mxu0
        %874 = vmatprep.mubr.bf16.mxu0 0
        %875 = vmatmul.mubr.bf16.gmra.mxu0 %v790
        %v876 = vpop.f32.mrf.mxu0
        %v877 = vadd.f32 0.0, %v876
        %v878 = vpop.f32.mrf.mxu0
        %v879 = vpop.f32.mrf.mxu0
        %v880 = vadd.f32 0.0, %v879
        %v881 = vpop.f32.mrf.mxu0
        %882 = vmatprep.mubr.bf16.mxu0 0
        %883 = vmatmul.mubr.bf16.gmra.mxu0 %v793
        %v884 = vpop.f32.mrf.mxu0
        %v885 = vadd.f32 0.0, %v884
        %v886 = vpop.f32.mrf.mxu0
        %v887 = vpop.f32.mrf.mxu0
        %v888 = vadd.f32 0.0, %v887
        %v889 = vpop.f32.mrf.mxu0
        %890 = vmatprep.mubr.bf16.mxu0 0
        %891 = vmatmul.mubr.bf16.gmra.mxu0 %v796
        %v892 = vpop.f32.mrf.mxu0
        %v893 = vadd.f32 0.0, %v892
        %v894 = vpop.f32.mrf.mxu0
        %v895 = vpop.f32.mrf.mxu0
        %v896 = vadd.f32 0.0, %v895
        %v897 = vpop.f32.mrf.mxu0
        %898 = vmatprep.mubr.bf16.mxu0 0
        %899 = vmatmul.mubr.bf16.gmra.mxu0 %v799
        %v900 = vpop.f32.mrf.mxu0
        %v901 = vadd.f32 0.0, %v900
        %v902 = vpop.f32.mrf.mxu0
        %v903 = vpop.f32.mrf.mxu0
        %v904 = vadd.f32 0.0, %v903
        %v905 = vpop.f32.mrf.mxu0
        %906 = vmatprep.mubr.bf16.mxu0 0
        %907 = vmatmul.mubr.bf16.gmra.mxu0 %v802
        %v908 = vpop.f32.mrf.mxu0
        %v909 = vadd.f32 0.0, %v908
        %v910 = vpop.f32.mrf.mxu0
        %v911 = vpop.f32.mrf.mxu0
        %v912 = vadd.f32 0.0, %v911
        %v913 = vpop.f32.mrf.mxu0
        %914 = vmatprep.mubr.bf16.mxu0 0
        %915 = vmatmul.mubr.bf16.gmra.mxu0 %v805
        %v916 = vpop.f32.mrf.mxu0
        %v917 = vadd.f32 0.0, %v916
        %v918 = vpop.f32.mrf.mxu0
        %v919 = vpop.f32.mrf.mxu0
        %v920 = vadd.f32 0.0, %v919
        %v921 = vpop.f32.mrf.mxu0
        %922 = vmatprep.mubr.bf16.mxu0 0
        %923 = vmatmul.mubr.bf16.gmra.mxu0 %v808
        %v924 = vpop.f32.mrf.mxu0
        %v925 = vadd.f32 0.0, %v924
        %v926 = vpop.f32.mrf.mxu0
        %v927 = vpop.f32.mrf.mxu0
        %v928 = vadd.f32 0.0, %v927
        %v929 = vpop.f32.mrf.mxu0
        %930 = vmatprep.mubr.bf16.mxu0 0
        %931 = vmatmul.mubr.bf16.gmra.mxu0 %v811
        %v932 = vpop.f32.mrf.mxu0
        %v933 = vadd.f32 0.0, %v932
        %v934 = vpop.f32.mrf.mxu0
        %v935 = vpop.f32.mrf.mxu0
        %v936 = vadd.f32 0.0, %v935
        %v937 = vpop.f32.mrf.mxu0
        %938 = vmatprep.mubr.bf16.mxu0 0
        %939 = vmatmul.mubr.bf16.gmra.mxu0 %v814
        %v940 = vpop.f32.mrf.mxu0
        %v941 = vadd.f32 0.0, %v940
        %v942 = vpop.f32.mrf.mxu0
        %v943 = vpop.f32.mrf.mxu0
        %v944 = vadd.f32 0.0, %v943
        %v945 = vpop.f32.mrf.mxu0
        %946 = vmatprep.mubr.bf16.mxu0 0
        %947 = vmatmul.mubr.bf16.gmra.mxu0 %v817
        %v948 = vpop.f32.mrf.mxu0
        %v949 = vadd.f32 0.0, %v948
        %v950 = vpop.f32.mrf.mxu0
        %v951 = vpop.f32.mrf.mxu0
        %v952 = vadd.f32 0.0, %v951
        %v953 = vpop.f32.mrf.mxu0
        %954 = vmatprep.mubr.bf16.mxu0 0
        %955 = vmatmul.mubr.bf16.gmra.mxu0 %v820
        %v956 = vpop.f32.mrf.mxu0
        %v957 = vadd.f32 0.0, %v956
        %v958 = vpop.f32.mrf.mxu0
        %v959 = vpop.f32.mrf.mxu0
        %v960 = vadd.f32 0.0, %v959
        %v961 = vpop.f32.mrf.mxu0
        %962 = vmatprep.mubr.bf16.mxu0 0
        %963 = vmatmul.mubr.bf16.gmra.mxu0 %v823
        %v964 = vpop.f32.mrf.mxu0
        %v965 = vadd.f32 0.0, %v964
        %v966 = vpop.f32.mrf.mxu0
        %v967 = vpop.f32.mrf.mxu0
        %v968 = vadd.f32 0.0, %v967
        %v969 = vpop.f32.mrf.mxu0
        %970 = vmatprep.mubr.bf16.mxu0 0
        %971 = vmatmul.mubr.bf16.gmra.mxu0 %v826
        %v972 = vpop.f32.mrf.mxu0
        %v973 = vadd.f32 0.0, %v972
        %v974 = vpop.f32.mrf.mxu0
        %v975 = vpop.f32.mrf.mxu0
        %v976 = vadd.f32 0.0, %v975
        %v977 = vpop.f32.mrf.mxu0
        %978 = vmatprep.mubr.bf16.mxu0 0
        %979 = vmatmul.mubr.bf16.gmra.mxu0 %v829
        %v980 = vpop.f32.mrf.mxu0
        %v981 = vadd.f32 0.0, %v980
        %v982 = vpop.f32.mrf.mxu0
        %v983 = vpop.f32.mrf.mxu0
        %v984 = vadd.f32 0.0, %v983
        %v985 = vpop.f32.mrf.mxu0
        %986 = vmatprep.mubr.bf16.mxu0 0
        %987 = vmatmul.mubr.bf16.gmra.mxu0 %v832
        %v988 = vpop.f32.mrf.mxu0
        %v989 = vadd.f32 0.0, %v988
        %v990 = vpop.f32.mrf.mxu0
        %v991 = vpop.f32.mrf.mxu0
        %v992 = vadd.f32 0.0, %v991
        %v993 = vpop.f32.mrf.mxu0
        %994 = vdwg.mxu0
        %v995 = vpack.c.bf16 %v872, %v869
        %v996 = vpack.c.bf16 %v880, %v877
        %v997 = vpack.c.bf16 %v888, %v885
        %v998 = vpack.c.bf16 %v896, %v893
        %v999 = vpack.c.bf16 %v904, %v901
        %v1000 = vpack.c.bf16 %v912, %v909
        %v1001 = vpack.c.bf16 %v920, %v917
        %v1002 = vpack.c.bf16 %v928, %v925
        %v1003 = vpack.c.bf16 %v936, %v933
        %v1004 = vpack.c.bf16 %v944, %v941
        %v1005 = vpack.c.bf16 %v952, %v949
        %v1006 = vpack.c.bf16 %v960, %v957
        %v1007 = vpack.c.bf16 %v968, %v965
        %v1008 = vpack.c.bf16 %v976, %v973
        %v1009 = vpack.c.bf16 %v984, %v981
        %v1010 = vpack.c.bf16 %v992, %v989
        %v1011 = vld [vmem:[%s3] sm:$0x1]
        %v1013 = vpack.i.b16 %v1011, %v1011
        %v1015 = vlaneseq
        %v1016 = vshrl.u32 %v1015, 7
        %v1017 = vsub.s32 0, %v1016
        %v1018 = vrot.slane %v1013, %v1017
        %v1019 = vadd.bf16 %v995, %v1018
        %v1020 = vadd.bf16 %v996, %v1018
        %v1021 = vadd.bf16 %v997, %v1018
        %v1022 = vadd.bf16 %v998, %v1018
        %v1023 = vadd.bf16 %v999, %v1018
        %v1024 = vadd.bf16 %v1000, %v1018
        %v1025 = vadd.bf16 %v1001, %v1018
        %v1026 = vadd.bf16 %v1002, %v1018
        %v1027 = vadd.bf16 %v1003, %v1018
        %v1028 = vadd.bf16 %v1004, %v1018
        %v1029 = vadd.bf16 %v1005, %v1018
        %v1030 = vadd.bf16 %v1006, %v1018
        %v1031 = vadd.bf16 %v1007, %v1018
        %v1032 = vadd.bf16 %v1008, %v1018
        %v1033 = vadd.bf16 %v1009, %v1018
        %v1034 = vadd.bf16 %v1010, %v1018
        %v1035 = vmax.bf16 %v1019, 0
        %v1036 = vmax.bf16 %v1020, 0
        %v1037 = vmax.bf16 %v1021, 0
        %v1038 = vmax.bf16 %v1022, 0
        %v1039 = vmax.bf16 %v1023, 0
        %v1040 = vmax.bf16 %v1024, 0
        %v1041 = vmax.bf16 %v1025, 0
        %v1042 = vmax.bf16 %v1026, 0
        %v1043 = vmax.bf16 %v1027, 0
        %v1044 = vmax.bf16 %v1028, 0
        %v1045 = vmax.bf16 %v1029, 0
        %v1046 = vmax.bf16 %v1030, 0
        %v1047 = vmax.bf16 %v1031, 0
        %v1048 = vmax.bf16 %v1032, 0
        %v1049 = vmax.bf16 %v1033, 0
        %v1050 = vmax.bf16 %v1034, 0
        %v1051 = vld [vmem:[%s4] sm:$0xf]
        %v1052 = vld [vmem:[%s4 + $0x4] sm:$0xf]
        %v1053 = vld [vmem:[%s4 + $0x8] sm:$0xf]
        %v1054 = vld [vmem:[%s4 + $0xc] sm:$0xf]
        %v1055 = vld [vmem:[%s4 + $0x10] sm:$0xf]
        %v1056 = vld [vmem:[%s4 + $0x14] sm:$0xf]
        %v1057 = vld [vmem:[%s4 + $0x18] sm:$0xf]
        %v1058 = vld [vmem:[%s4 + $0x1c] sm:$0xf]
        %v1059 = vld [vmem:[%s4 + $0x20] sm:$0xf]
        %v1060 = vld [vmem:[%s4 + $0x24] sm:$0xf]
        %v1061 = vld [vmem:[%s4 + $0x28] sm:$0xf]
        %v1062 = vld [vmem:[%s4 + $0x2c] sm:$0xf]
        %v1063 = vld [vmem:[%s4 + $0x30] sm:$0xf]
        %v1064 = vld [vmem:[%s4 + $0x34] sm:$0xf]
        %v1065 = vld [vmem:[%s4 + $0x38] sm:$0xf]
        %v1066 = vld [vmem:[%s4 + $0x3c] sm:$0xf]
        %v1083 = vunpack.c.l.b16 %v1051
        %v1084 = vunpack.c.l.b16 %v1052
        %v1085 = vunpack.c.l.b16 %v1053
        %v1086 = vunpack.c.l.b16 %v1054
        %v1087 = vunpack.c.l.b16 %v1055
        %v1088 = vunpack.c.l.b16 %v1056
        %v1089 = vunpack.c.l.b16 %v1057
        %v1090 = vunpack.c.l.b16 %v1058
        %v1091 = vunpack.c.l.b16 %v1059
        %v1092 = vunpack.c.l.b16 %v1060
        %v1093 = vunpack.c.l.b16 %v1061
        %v1094 = vunpack.c.l.b16 %v1062
        %v1095 = vunpack.c.l.b16 %v1063
        %v1096 = vunpack.c.l.b16 %v1064
        %v1097 = vunpack.c.l.b16 %v1065
        %v1098 = vunpack.c.l.b16 %v1066
        %v1099 = vpack.c.b16 %v1084, %v1083
        %v1100 = vpack.c.b16 %v1086, %v1085
        %v1101 = vpack.c.b16 %v1088, %v1087
        %v1102 = vpack.c.b16 %v1090, %v1089
        %v1103 = vpack.c.b16 %v1092, %v1091
        %v1104 = vpack.c.b16 %v1094, %v1093
        %v1105 = vpack.c.b16 %v1096, %v1095
        %v1106 = vpack.c.b16 %v1098, %v1097
        %1115 = vmatprep.subr.bf16.mxu0 0
        %1116 = vmatpush1.bf16.msra.mxu0 %v1106
        %1117 = vmatprep.subr.bf16.mxu0 0
        %1118 = vmatpush1.bf16.msra.mxu0 %v1105
        %1119 = vmatprep.subr.bf16.mxu0 0
        %1120 = vmatpush1.bf16.msra.mxu0 %v1104
        %1121 = vmatprep.subr.bf16.mxu0 0
        %1122 = vmatpush1.bf16.msra.mxu0 %v1103
        %1123 = vmatprep.subr.bf16.mxu0 0
        %1124 = vmatpush1.bf16.msra.mxu0 %v1102
        %1125 = vmatprep.subr.bf16.mxu0 0
        %1126 = vmatpush1.bf16.msra.mxu0 %v1101
        %1127 = vmatprep.subr.bf16.mxu0 0
        %1128 = vmatpush1.bf16.msra.mxu0 %v1100
        %1129 = vmatprep.subr.bf16.mxu0 0
        %1130 = vmatpush1.bf16.msra.mxu0 %v1099
        %1131 = vmatprep.subr.bf16.mxu0 0
        %1132 = vmatpush2.bf16.msra.mxu0 0
        %1133 = vmatprep.subr.bf16.mxu0 0
        %1134 = vmatpush2.bf16.msra.mxu0 0
        %1135 = vmatprep.subr.bf16.mxu0 0
        %1136 = vmatpush2.bf16.msra.mxu0 0
        %1137 = vmatprep.subr.bf16.mxu0 0
        %1138 = vmatpush2.bf16.msra.mxu0 0
        %1139 = vmatprep.subr.bf16.mxu0 0
        %1140 = vmatpush2.bf16.msra.mxu0 0
        %1141 = vmatprep.subr.bf16.mxu0 0
        %1142 = vmatpush2.bf16.msra.mxu0 0
        %1143 = vmatprep.subr.bf16.mxu0 0
        %1144 = vmatpush2.bf16.msra.mxu0 0
        %1145 = vmatprep.subr.bf16.mxu0 0
        %1146 = vmatpush2.bf16.msra.mxu0 0
        %1147 = vmatprep.mubr.bf16.mxu0 0
        %1148 = vmatmul.mubr.bf16.gmra.mxu0 %v1035
        %v1149 = vpop.f32.mrf.mxu0
        %v1150 = vadd.f32 0.0, %v1149
        %v1151 = vpop.f32.mrf.mxu0
        %v1152 = vpop.f32.mrf.mxu0
        %v1153 = vadd.f32 0.0, %v1152
        %v1154 = vpop.f32.mrf.mxu0
        %1155 = vmatprep.mubr.bf16.mxu0 0
        %1156 = vmatmul.mubr.bf16.gmra.mxu0 %v1036
        %v1157 = vpop.f32.mrf.mxu0
        %v1158 = vadd.f32 0.0, %v1157
        %v1159 = vpop.f32.mrf.mxu0
        %v1160 = vpop.f32.mrf.mxu0
        %v1161 = vadd.f32 0.0, %v1160
        %v1162 = vpop.f32.mrf.mxu0
        %1163 = vmatprep.mubr.bf16.mxu0 0
        %1164 = vmatmul.mubr.bf16.gmra.mxu0 %v1037
        %v1165 = vpop.f32.mrf.mxu0
        %v1166 = vadd.f32 0.0, %v1165
        %v1167 = vpop.f32.mrf.mxu0
        %v1168 = vpop.f32.mrf.mxu0
        %v1169 = vadd.f32 0.0, %v1168
        %v1170 = vpop.f32.mrf.mxu0
        %1171 = vmatprep.mubr.bf16.mxu0 0
        %1172 = vmatmul.mubr.bf16.gmra.mxu0 %v1038
        %v1173 = vpop.f32.mrf.mxu0
        %v1174 = vadd.f32 0.0, %v1173
        %v1175 = vpop.f32.mrf.mxu0
        %v1176 = vpop.f32.mrf.mxu0
        %v1177 = vadd.f32 0.0, %v1176
        %v1178 = vpop.f32.mrf.mxu0
        %1179 = vmatprep.mubr.bf16.mxu0 0
        %1180 = vmatmul.mubr.bf16.gmra.mxu0 %v1039
        %v1181 = vpop.f32.mrf.mxu0
        %v1182 = vadd.f32 0.0, %v1181
        %v1183 = vpop.f32.mrf.mxu0
        %v1184 = vpop.f32.mrf.mxu0
        %v1185 = vadd.f32 0.0, %v1184
        %v1186 = vpop.f32.mrf.mxu0
        %1187 = vmatprep.mubr.bf16.mxu0 0
        %1188 = vmatmul.mubr.bf16.gmra.mxu0 %v1040
        %v1189 = vpop.f32.mrf.mxu0
        %v1190 = vadd.f32 0.0, %v1189
        %v1191 = vpop.f32.mrf.mxu0
        %v1192 = vpop.f32.mrf.mxu0
        %v1193 = vadd.f32 0.0, %v1192
        %v1194 = vpop.f32.mrf.mxu0
        %1195 = vmatprep.mubr.bf16.mxu0 0
        %1196 = vmatmul.mubr.bf16.gmra.mxu0 %v1041
        %v1197 = vpop.f32.mrf.mxu0
        %v1198 = vadd.f32 0.0, %v1197
        %v1199 = vpop.f32.mrf.mxu0
        %v1200 = vpop.f32.mrf.mxu0
        %v1201 = vadd.f32 0.0, %v1200
        %v1202 = vpop.f32.mrf.mxu0
        %1203 = vmatprep.mubr.bf16.mxu0 0
        %1204 = vmatmul.mubr.bf16.gmra.mxu0 %v1042
        %v1205 = vpop.f32.mrf.mxu0
        %v1206 = vadd.f32 0.0, %v1205
        %v1207 = vpop.f32.mrf.mxu0
        %v1208 = vpop.f32.mrf.mxu0
        %v1209 = vadd.f32 0.0, %v1208
        %v1210 = vpop.f32.mrf.mxu0
        %1211 = vmatprep.mubr.bf16.mxu0 0
        %1212 = vmatmul.mubr.bf16.gmra.mxu0 %v1043
        %v1213 = vpop.f32.mrf.mxu0
        %v1214 = vadd.f32 0.0, %v1213
        %v1215 = vpop.f32.mrf.mxu0
        %v1216 = vpop.f32.mrf.mxu0
        %v1217 = vadd.f32 0.0, %v1216
        %v1218 = vpop.f32.mrf.mxu0
        %1219 = vmatprep.mubr.bf16.mxu0 0
        %1220 = vmatmul.mubr.bf16.gmra.mxu0 %v1044
        %v1221 = vpop.f32.mrf.mxu0
        %v1222 = vadd.f32 0.0, %v1221
        %v1223 = vpop.f32.mrf.mxu0
        %v1224 = vpop.f32.mrf.mxu0
        %v1225 = vadd.f32 0.0, %v1224
        %v1226 = vpop.f32.mrf.mxu0
        %1227 = vmatprep.mubr.bf16.mxu0 0
        %1228 = vmatmul.mubr.bf16.gmra.mxu0 %v1045
        %v1229 = vpop.f32.mrf.mxu0
        %v1230 = vadd.f32 0.0, %v1229
        %v1231 = vpop.f32.mrf.mxu0
        %v1232 = vpop.f32.mrf.mxu0
        %v1233 = vadd.f32 0.0, %v1232
        %v1234 = vpop.f32.mrf.mxu0
        %1235 = vmatprep.mubr.bf16.mxu0 0
        %1236 = vmatmul.mubr.bf16.gmra.mxu0 %v1046
        %v1237 = vpop.f32.mrf.mxu0
        %v1238 = vadd.f32 0.0, %v1237
        %v1239 = vpop.f32.mrf.mxu0
        %v1240 = vpop.f32.mrf.mxu0
        %v1241 = vadd.f32 0.0, %v1240
        %v1242 = vpop.f32.mrf.mxu0
        %1243 = vmatprep.mubr.bf16.mxu0 0
        %1244 = vmatmul.mubr.bf16.gmra.mxu0 %v1047
        %v1245 = vpop.f32.mrf.mxu0
        %v1246 = vadd.f32 0.0, %v1245
        %v1247 = vpop.f32.mrf.mxu0
        %v1248 = vpop.f32.mrf.mxu0
        %v1249 = vadd.f32 0.0, %v1248
        %v1250 = vpop.f32.mrf.mxu0
        %1251 = vmatprep.mubr.bf16.mxu0 0
        %1252 = vmatmul.mubr.bf16.gmra.mxu0 %v1048
        %v1253 = vpop.f32.mrf.mxu0
        %v1254 = vadd.f32 0.0, %v1253
        %v1255 = vpop.f32.mrf.mxu0
        %v1256 = vpop.f32.mrf.mxu0
        %v1257 = vadd.f32 0.0, %v1256
        %v1258 = vpop.f32.mrf.mxu0
        %1259 = vmatprep.mubr.bf16.mxu0 0
        %1260 = vmatmul.mubr.bf16.gmra.mxu0 %v1049
        %v1261 = vpop.f32.mrf.mxu0
        %v1262 = vadd.f32 0.0, %v1261
        %v1263 = vpop.f32.mrf.mxu0
        %v1264 = vpop.f32.mrf.mxu0
        %v1265 = vadd.f32 0.0, %v1264
        %v1266 = vpop.f32.mrf.mxu0
        %1267 = vmatprep.mubr.bf16.mxu0 0
        %1268 = vmatmul.mubr.bf16.gmra.mxu0 %v1050
        %v1269 = vpop.f32.mrf.mxu0
        %v1270 = vadd.f32 0.0, %v1269
        %v1271 = vpop.f32.mrf.mxu0
        %v1272 = vpop.f32.mrf.mxu0
        %v1273 = vadd.f32 0.0, %v1272
        %v1274 = vpop.f32.mrf.mxu0
        %1275 = vdwg.mxu0
        %v1276 = vpack.c.bf16 %v1153, %v1150
        %v1277 = vpack.c.bf16 %v1161, %v1158
        %v1278 = vpack.c.bf16 %v1169, %v1166
        %v1279 = vpack.c.bf16 %v1177, %v1174
        %v1280 = vpack.c.bf16 %v1185, %v1182
        %v1281 = vpack.c.bf16 %v1193, %v1190
        %v1282 = vpack.c.bf16 %v1201, %v1198
        %v1283 = vpack.c.bf16 %v1209, %v1206
        %v1284 = vpack.c.bf16 %v1217, %v1214
        %v1285 = vpack.c.bf16 %v1225, %v1222
        %v1286 = vpack.c.bf16 %v1233, %v1230
        %v1287 = vpack.c.bf16 %v1241, %v1238
        %v1288 = vpack.c.bf16 %v1249, %v1246
        %v1289 = vpack.c.bf16 %v1257, %v1254
        %v1290 = vpack.c.bf16 %v1265, %v1262
        %v1291 = vpack.c.bf16 %v1273, %v1270
        %v1292 = vld [vmem:[%s5] sm:$0x1]
        %v1294 = vpack.i.b16 %v1292, %v1292
        %v1296 = vlaneseq
        %v1297 = vshrl.u32 %v1296, 7
        %v1298 = vsub.s32 0, %v1297
        %v1299 = vrot.slane %v1294, %v1298
        %v1300 = vadd.bf16 %v1276, %v1299
        %v1301 = vadd.bf16 %v1277, %v1299
        %v1302 = vadd.bf16 %v1278, %v1299
        %v1303 = vadd.bf16 %v1279, %v1299
        %v1304 = vadd.bf16 %v1280, %v1299
        %v1305 = vadd.bf16 %v1281, %v1299
        %v1306 = vadd.bf16 %v1282, %v1299
        %v1307 = vadd.bf16 %v1283, %v1299
        %v1308 = vadd.bf16 %v1284, %v1299
        %v1309 = vadd.bf16 %v1285, %v1299
        %v1310 = vadd.bf16 %v1286, %v1299
        %v1311 = vadd.bf16 %v1287, %v1299
        %v1312 = vadd.bf16 %v1288, %v1299
        %v1313 = vadd.bf16 %v1289, %v1299
        %v1314 = vadd.bf16 %v1290, %v1299
        %v1315 = vadd.bf16 %v1291, %v1299
        %v1316 = vmax.bf16 %v1300, 0
        %v1317 = vmax.bf16 %v1301, 0
        %v1318 = vmax.bf16 %v1302, 0
        %v1319 = vmax.bf16 %v1303, 0
        %v1320 = vmax.bf16 %v1304, 0
        %v1321 = vmax.bf16 %v1305, 0
        %v1322 = vmax.bf16 %v1306, 0
        %v1323 = vmax.bf16 %v1307, 0
        %v1324 = vmax.bf16 %v1308, 0
        %v1325 = vmax.bf16 %v1309, 0
        %v1326 = vmax.bf16 %v1310, 0
        %v1327 = vmax.bf16 %v1311, 0
        %v1328 = vmax.bf16 %v1312, 0
        %v1329 = vmax.bf16 %v1313, 0
        %v1330 = vmax.bf16 %v1314, 0
        %v1331 = vmax.bf16 %v1315, 0
        %v1332 = vld [vmem:[%s6] sm:$0xf]
        %v1333 = vld [vmem:[%s6 + $0x4] sm:$0xf]
        %v1334 = vld [vmem:[%s6 + $0x8] sm:$0xf]
        %v1335 = vld [vmem:[%s6 + $0xc] sm:$0xf]
        %v1336 = vld [vmem:[%s6 + $0x10] sm:$0xf]
        %v1337 = vld [vmem:[%s6 + $0x14] sm:$0xf]
        %v1338 = vld [vmem:[%s6 + $0x18] sm:$0xf]
        %v1339 = vld [vmem:[%s6 + $0x1c] sm:$0xf]
        %v1340 = vld [vmem:[%s7] sm:$0x1]
        %v1342 = vlaneseq
        %v1343 = vshrl.u32 %v1342, 7
        %v1344 = vsub.s32 0, %v1343
        %v1345 = vrot.slane %v1340, %v1344
        %v1355 = vunpack.c.l.b16 %v1332
        %v1356 = vunpack.c.l.b16 %v1333
        %v1357 = vunpack.c.l.b16 %v1334
        %v1358 = vunpack.c.l.b16 %v1335
        %v1359 = vunpack.c.l.b16 %v1336
        %v1360 = vunpack.c.l.b16 %v1337
        %v1361 = vunpack.c.l.b16 %v1338
        %v1362 = vunpack.c.l.b16 %v1339
        %v1363 = vpack.c.b16 %v1356, %v1355
        %v1364 = vpack.c.b16 %v1358, %v1357
        %v1365 = vpack.c.b16 %v1360, %v1359
        %v1366 = vpack.c.b16 %v1362, %v1361
        %vm1371 = vcmask 523264
        %v1373 = vsel %vm1371, %v1316, 0
        %v1376 = vsel %vm1371, %v1317, 0
        %v1379 = vsel %vm1371, %v1318, 0
        %v1382 = vsel %vm1371, %v1319, 0
        %v1385 = vsel %vm1371, %v1320, 0
        %v1388 = vsel %vm1371, %v1321, 0
        %v1391 = vsel %vm1371, %v1322, 0
        %v1394 = vsel %vm1371, %v1323, 0
        %v1397 = vsel %vm1371, %v1324, 0
        %v1400 = vsel %vm1371, %v1325, 0
        %v1403 = vsel %vm1371, %v1326, 0
        %v1406 = vsel %vm1371, %v1327, 0
        %v1409 = vsel %vm1371, %v1328, 0
        %v1412 = vsel %vm1371, %v1329, 0
        %v1415 = vsel %vm1371, %v1330, 0
        %v1418 = vsel %vm1371, %v1331, 0
        %1420 = vmatprep.subr.bf16.mxu0 0
        %1421 = vmatpush1.bf16.msra.mxu0 0
        %1422 = vmatprep.subr.bf16.mxu0 0
        %1423 = vmatpush1.bf16.msra.mxu0 0
        %1424 = vmatprep.subr.bf16.mxu0 0
        %1425 = vmatpush1.bf16.msra.mxu0 0
        %1426 = vmatprep.subr.bf16.mxu0 0
        %1427 = vmatpush1.bf16.msra.mxu0 0
        %1428 = vmatprep.subr.bf16.mxu0 0
        %1429 = vmatpush1.bf16.msra.mxu0 %v1366
        %1430 = vmatprep.subr.bf16.mxu0 0
        %1431 = vmatpush1.bf16.msra.mxu0 %v1365
        %1432 = vmatprep.subr.bf16.mxu0 0
        %1433 = vmatpush1.bf16.msra.mxu0 %v1364
        %1434 = vmatprep.subr.bf16.mxu0 0
        %1435 = vmatpush1.bf16.msra.mxu0 %v1363
        %1436 = vmatprep.subr.bf16.mxu0 0
        %1437 = vmatpush2.bf16.msra.mxu0 0
        %1438 = vmatprep.subr.bf16.mxu0 0
        %1439 = vmatpush2.bf16.msra.mxu0 0
        %1440 = vmatprep.subr.bf16.mxu0 0
        %1441 = vmatpush2.bf16.msra.mxu0 0
        %1442 = vmatprep.subr.bf16.mxu0 0
        %1443 = vmatpush2.bf16.msra.mxu0 0
        %1444 = vmatprep.subr.bf16.mxu0 0
        %1445 = vmatpush2.bf16.msra.mxu0 0
        %1446 = vmatprep.subr.bf16.mxu0 0
        %1447 = vmatpush2.bf16.msra.mxu0 0
        %1448 = vmatprep.subr.bf16.mxu0 0
        %1449 = vmatpush2.bf16.msra.mxu0 0
        %1450 = vmatprep.subr.bf16.mxu0 0
        %1451 = vmatpush2.bf16.msra.mxu0 0
        %1452 = vmatprep.mubr.bf16.mxu0 0
        %1453 = vmatmul.mubr.bf16.gmra.mxu0 %v1373
        %v1454 = vpop.f32.mrf.mxu0
        %v1455 = vadd.f32 %v1345, %v1454
        %v1456 = vpop.f32.mrf.mxu0
        %v1457 = vpop.f32.mrf.mxu0
        %v1458 = vadd.f32 %v1345, %v1457
        %v1459 = vpop.f32.mrf.mxu0
        %1460 = vmatprep.mubr.bf16.mxu0 0
        %1461 = vmatmul.mubr.bf16.gmra.mxu0 %v1376
        %v1462 = vpop.f32.mrf.mxu0
        %v1463 = vadd.f32 %v1345, %v1462
        %v1464 = vpop.f32.mrf.mxu0
        %v1465 = vpop.f32.mrf.mxu0
        %v1466 = vadd.f32 %v1345, %v1465
        %v1467 = vpop.f32.mrf.mxu0
        %1468 = vmatprep.mubr.bf16.mxu0 0
        %1469 = vmatmul.mubr.bf16.gmra.mxu0 %v1379
        %v1470 = vpop.f32.mrf.mxu0
        %v1471 = vadd.f32 %v1345, %v1470
        %v1472 = vpop.f32.mrf.mxu0
        %v1473 = vpop.f32.mrf.mxu0
        %v1474 = vadd.f32 %v1345, %v1473
        %v1475 = vpop.f32.mrf.mxu0
        %1476 = vmatprep.mubr.bf16.mxu0 0
        %1477 = vmatmul.mubr.bf16.gmra.mxu0 %v1382
        %v1478 = vpop.f32.mrf.mxu0
        %v1479 = vadd.f32 %v1345, %v1478
        %v1480 = vpop.f32.mrf.mxu0
        %v1481 = vpop.f32.mrf.mxu0
        %v1482 = vadd.f32 %v1345, %v1481
        %v1483 = vpop.f32.mrf.mxu0
        %1484 = vmatprep.mubr.bf16.mxu0 0
        %1485 = vmatmul.mubr.bf16.gmra.mxu0 %v1385
        %v1486 = vpop.f32.mrf.mxu0
        %v1487 = vadd.f32 %v1345, %v1486
        %v1488 = vpop.f32.mrf.mxu0
        %v1489 = vpop.f32.mrf.mxu0
        %v1490 = vadd.f32 %v1345, %v1489
        %v1491 = vpop.f32.mrf.mxu0
        %1492 = vmatprep.mubr.bf16.mxu0 0
        %1493 = vmatmul.mubr.bf16.gmra.mxu0 %v1388
        %v1494 = vpop.f32.mrf.mxu0
        %v1495 = vadd.f32 %v1345, %v1494
        %v1496 = vpop.f32.mrf.mxu0
        %v1497 = vpop.f32.mrf.mxu0
        %v1498 = vadd.f32 %v1345, %v1497
        %v1499 = vpop.f32.mrf.mxu0
        %1500 = vmatprep.mubr.bf16.mxu0 0
        %1501 = vmatmul.mubr.bf16.gmra.mxu0 %v1391
        %v1502 = vpop.f32.mrf.mxu0
        %v1503 = vadd.f32 %v1345, %v1502
        %v1504 = vpop.f32.mrf.mxu0
        %v1505 = vpop.f32.mrf.mxu0
        %v1506 = vadd.f32 %v1345, %v1505
        %v1507 = vpop.f32.mrf.mxu0
        %1508 = vmatprep.mubr.bf16.mxu0 0
        %1509 = vmatmul.mubr.bf16.gmra.mxu0 %v1394
        %v1510 = vpop.f32.mrf.mxu0
        %v1511 = vadd.f32 %v1345, %v1510
        %v1512 = vpop.f32.mrf.mxu0
        %v1513 = vpop.f32.mrf.mxu0
        %v1514 = vadd.f32 %v1345, %v1513
        %v1515 = vpop.f32.mrf.mxu0
        %1516 = vmatprep.mubr.bf16.mxu0 0
        %1517 = vmatmul.mubr.bf16.gmra.mxu0 %v1397
        %v1518 = vpop.f32.mrf.mxu0
        %v1519 = vadd.f32 %v1345, %v1518
        %v1520 = vpop.f32.mrf.mxu0
        %v1521 = vpop.f32.mrf.mxu0
        %v1522 = vadd.f32 %v1345, %v1521
        %v1523 = vpop.f32.mrf.mxu0
        %1524 = vmatprep.mubr.bf16.mxu0 0
        %1525 = vmatmul.mubr.bf16.gmra.mxu0 %v1400
        %v1526 = vpop.f32.mrf.mxu0
        %v1527 = vadd.f32 %v1345, %v1526
        %v1528 = vpop.f32.mrf.mxu0
        %v1529 = vpop.f32.mrf.mxu0
        %v1530 = vadd.f32 %v1345, %v1529
        %v1531 = vpop.f32.mrf.mxu0
        %1532 = vmatprep.mubr.bf16.mxu0 0
        %1533 = vmatmul.mubr.bf16.gmra.mxu0 %v1403
        %v1534 = vpop.f32.mrf.mxu0
        %v1535 = vadd.f32 %v1345, %v1534
        %v1536 = vpop.f32.mrf.mxu0
        %v1537 = vpop.f32.mrf.mxu0
        %v1538 = vadd.f32 %v1345, %v1537
        %v1539 = vpop.f32.mrf.mxu0
        %1540 = vmatprep.mubr.bf16.mxu0 0
        %1541 = vmatmul.mubr.bf16.gmra.mxu0 %v1406
        %v1542 = vpop.f32.mrf.mxu0
        %v1543 = vadd.f32 %v1345, %v1542
        %v1544 = vpop.f32.mrf.mxu0
        %v1545 = vpop.f32.mrf.mxu0
        %v1546 = vadd.f32 %v1345, %v1545
        %v1547 = vpop.f32.mrf.mxu0
        %1548 = vmatprep.mubr.bf16.mxu0 0
        %1549 = vmatmul.mubr.bf16.gmra.mxu0 %v1409
        %v1550 = vpop.f32.mrf.mxu0
        %v1551 = vadd.f32 %v1345, %v1550
        %v1552 = vpop.f32.mrf.mxu0
        %v1553 = vpop.f32.mrf.mxu0
        %v1554 = vadd.f32 %v1345, %v1553
        %v1555 = vpop.f32.mrf.mxu0
        %1556 = vmatprep.mubr.bf16.mxu0 0
        %1557 = vmatmul.mubr.bf16.gmra.mxu0 %v1412
        %v1558 = vpop.f32.mrf.mxu0
        %v1559 = vadd.f32 %v1345, %v1558
        %v1560 = vpop.f32.mrf.mxu0
        %v1561 = vpop.f32.mrf.mxu0
        %v1562 = vadd.f32 %v1345, %v1561
        %v1563 = vpop.f32.mrf.mxu0
        %1564 = vmatprep.mubr.bf16.mxu0 0
        %1565 = vmatmul.mubr.bf16.gmra.mxu0 %v1415
        %v1566 = vpop.f32.mrf.mxu0
        %v1567 = vadd.f32 %v1345, %v1566
        %v1568 = vpop.f32.mrf.mxu0
        %v1569 = vpop.f32.mrf.mxu0
        %v1570 = vadd.f32 %v1345, %v1569
        %v1571 = vpop.f32.mrf.mxu0
        %1572 = vmatprep.mubr.bf16.mxu0 0
        %1573 = vmatmul.mubr.bf16.gmra.mxu0 %v1418
        %v1574 = vpop.f32.mrf.mxu0
        %v1575 = vadd.f32 %v1345, %v1574
        %v1576 = vpop.f32.mrf.mxu0
        %v1577 = vpop.f32.mrf.mxu0
        %v1578 = vadd.f32 %v1345, %v1577
        %v1579 = vpop.f32.mrf.mxu0
        %1580 = vdwg.mxu0
        %v1581 = vld [vmem:[%s652] sm:$0xff]
        %v1582 = vld [vmem:[%s652 + $0x8] sm:$0xff]
        %v1583 = vld [vmem:[%s652 + $0x10] sm:$0xff]
        %v1584 = vld [vmem:[%s652 + $0x18] sm:$0xff]
        %v1585 = vld [vmem:[%s652 + $0x20] sm:$0xff]
        %v1586 = vld [vmem:[%s652 + $0x28] sm:$0xff]
        %v1587 = vld [vmem:[%s652 + $0x30] sm:$0xff]
        %v1588 = vld [vmem:[%s652 + $0x38] sm:$0xff]
        %v1589 = vld [vmem:[%s652 + $0x40] sm:$0xff]
        %v1590 = vld [vmem:[%s652 + $0x48] sm:$0xff]
        %v1591 = vld [vmem:[%s652 + $0x50] sm:$0xff]
        %v1592 = vld [vmem:[%s652 + $0x58] sm:$0xff]
        %v1593 = vld [vmem:[%s652 + $0x60] sm:$0xff]
        %v1594 = vld [vmem:[%s652 + $0x68] sm:$0xff]
        %v1595 = vld [vmem:[%s652 + $0x70] sm:$0xff]
        %v1596 = vld [vmem:[%s652 + $0x78] sm:$0xff]
        %v1597 = vld [vmem:[%s652 + $0x80] sm:$0xff]
        %v1598 = vld [vmem:[%s652 + $0x88] sm:$0xff]
        %v1599 = vld [vmem:[%s652 + $0x90] sm:$0xff]
        %v1600 = vld [vmem:[%s652 + $0x98] sm:$0xff]
        %v1601 = vld [vmem:[%s652 + $0xa0] sm:$0xff]
        %v1602 = vld [vmem:[%s652 + $0xa8] sm:$0xff]
        %v1603 = vld [vmem:[%s652 + $0xb0] sm:$0xff]
        %v1604 = vld [vmem:[%s652 + $0xb8] sm:$0xff]
        %v1605 = vld [vmem:[%s652 + $0xc0] sm:$0xff]
        %v1606 = vld [vmem:[%s652 + $0xc8] sm:$0xff]
        %v1607 = vld [vmem:[%s652 + $0xd0] sm:$0xff]
        %v1608 = vld [vmem:[%s652 + $0xd8] sm:$0xff]
        %v1609 = vld [vmem:[%s652 + $0xe0] sm:$0xff]
        %v1610 = vld [vmem:[%s652 + $0xe8] sm:$0xff]
        %v1611 = vld [vmem:[%s652 + $0xf0] sm:$0xff]
        %v1612 = vld [vmem:[%s652 + $0xf8] sm:$0xff]
        %v1613 = vmul.f32 %v1455, 0.5
        %v1614 = vmul.f32 %v1458, 0.5
        %v1615 = vmul.f32 %v1463, 0.5
        %v1616 = vmul.f32 %v1466, 0.5
        %v1617 = vmul.f32 %v1471, 0.5
        %v1618 = vmul.f32 %v1474, 0.5
        %v1619 = vmul.f32 %v1479, 0.5
        %v1620 = vmul.f32 %v1482, 0.5
        %v1621 = vmul.f32 %v1487, 0.5
        %v1622 = vmul.f32 %v1490, 0.5
        %v1623 = vmul.f32 %v1495, 0.5
        %v1624 = vmul.f32 %v1498, 0.5
        %v1625 = vmul.f32 %v1503, 0.5
        %v1626 = vmul.f32 %v1506, 0.5
        %v1627 = vmul.f32 %v1511, 0.5
        %v1628 = vmul.f32 %v1514, 0.5
        %v1629 = vmul.f32 %v1519, 0.5
        %v1630 = vmul.f32 %v1522, 0.5
        %v1631 = vmul.f32 %v1527, 0.5
        %v1632 = vmul.f32 %v1530, 0.5
        %v1633 = vmul.f32 %v1535, 0.5
        %v1634 = vmul.f32 %v1538, 0.5
        %v1635 = vmul.f32 %v1543, 0.5
        %v1636 = vmul.f32 %v1546, 0.5
        %v1637 = vmul.f32 %v1551, 0.5
        %v1638 = vmul.f32 %v1554, 0.5
        %v1639 = vmul.f32 %v1559, 0.5
        %v1640 = vmul.f32 %v1562, 0.5
        %v1641 = vmul.f32 %v1567, 0.5
        %v1642 = vmul.f32 %v1570, 0.5
        %v1643 = vmul.f32 %v1575, 0.5
        %v1644 = vmul.f32 %v1578, 0.5
        %v1645 = vmul.f32 %v1613, 1.442695
        %v1646 = vpow.pop %v1645
        %v1647 = vmul.f32 %v1614, 1.442695
        %v1648 = vpow.pop %v1647
        %v1649 = vmul.f32 %v1615, 1.442695
        %v1650 = vpow.pop %v1649
        %v1651 = vmul.f32 %v1616, 1.442695
        %v1652 = vpow.pop %v1651
        %v1653 = vmul.f32 %v1617, 1.442695
        %v1654 = vpow.pop %v1653
        %v1655 = vmul.f32 %v1618, 1.442695
        %v1656 = vpow.pop %v1655
        %v1657 = vmul.f32 %v1619, 1.442695
        %v1658 = vpow.pop %v1657
        %v1659 = vmul.f32 %v1620, 1.442695
        %v1660 = vpow.pop %v1659
        %v1661 = vmul.f32 %v1621, 1.442695
        %v1662 = vpow.pop %v1661
        %v1663 = vmul.f32 %v1622, 1.442695
        %v1664 = vpow.pop %v1663
        %v1665 = vmul.f32 %v1623, 1.442695
        %v1666 = vpow.pop %v1665
        %v1667 = vmul.f32 %v1624, 1.442695
        %v1668 = vpow.pop %v1667
        %v1669 = vmul.f32 %v1625, 1.442695
        %v1670 = vpow.pop %v1669
        %v1671 = vmul.f32 %v1626, 1.442695
        %v1672 = vpow.pop %v1671
        %v1673 = vmul.f32 %v1627, 1.442695
        %v1674 = vpow.pop %v1673
        %v1675 = vmul.f32 %v1628, 1.442695
        %v1676 = vpow.pop %v1675
        %v1677 = vmul.f32 %v1629, 1.442695
        %v1678 = vpow.pop %v1677
        %v1679 = vmul.f32 %v1630, 1.442695
        %v1680 = vpow.pop %v1679
        %v1681 = vmul.f32 %v1631, 1.442695
        %v1682 = vpow.pop %v1681
        %v1683 = vmul.f32 %v1632, 1.442695
        %v1684 = vpow.pop %v1683
        %v1685 = vmul.f32 %v1633, 1.442695
        %v1686 = vpow.pop %v1685
        %v1687 = vmul.f32 %v1634, 1.442695
        %v1688 = vpow.pop %v1687
        %v1689 = vmul.f32 %v1635, 1.442695
        %v1690 = vpow.pop %v1689
        %v1691 = vmul.f32 %v1636, 1.442695
        %v1692 = vpow.pop %v1691
        %v1693 = vmul.f32 %v1637, 1.442695
        %v1694 = vpow.pop %v1693
        %v1695 = vmul.f32 %v1638, 1.442695
        %v1696 = vpow.pop %v1695
        %v1697 = vmul.f32 %v1639, 1.442695
        %v1698 = vpow.pop %v1697
        %v1699 = vmul.f32 %v1640, 1.442695
        %v1700 = vpow.pop %v1699
        %v1701 = vmul.f32 %v1641, 1.442695
        %v1702 = vpow.pop %v1701
        %v1703 = vmul.f32 %v1642, 1.442695
        %v1704 = vpow.pop %v1703
        %v1705 = vmul.f32 %v1643, 1.442695
        %v1706 = vpow.pop %v1705
        %v1707 = vmul.f32 %v1644, 1.442695
        %v1708 = vpow.pop %v1707
        %1741 = vrot.lane.b32.xlu0 %v1646, 120
        %v1742 = vpop.permute.xlu0 %1741
        %1743 = vrot.lane.b32.xlu0 %v1648, 120
        %v1744 = vpop.permute.xlu0 %1743
        %1745 = vrot.lane.b32.xlu0 %v1650, 120
        %v1746 = vpop.permute.xlu0 %1745
        %1747 = vrot.lane.b32.xlu0 %v1652, 120
        %v1748 = vpop.permute.xlu0 %1747
        %1749 = vrot.lane.b32.xlu0 %v1654, 120
        %v1750 = vpop.permute.xlu0 %1749
        %1751 = vrot.lane.b32.xlu0 %v1656, 120
        %v1752 = vpop.permute.xlu0 %1751
        %1753 = vrot.lane.b32.xlu0 %v1658, 120
        %v1754 = vpop.permute.xlu0 %1753
        %1755 = vrot.lane.b32.xlu0 %v1660, 120
        %v1756 = vpop.permute.xlu0 %1755
        %1757 = vrot.lane.b32.xlu0 %v1662, 120
        %v1758 = vpop.permute.xlu0 %1757
        %1759 = vrot.lane.b32.xlu0 %v1664, 120
        %v1760 = vpop.permute.xlu0 %1759
        %1761 = vrot.lane.b32.xlu0 %v1666, 120
        %v1762 = vpop.permute.xlu0 %1761
        %1763 = vrot.lane.b32.xlu0 %v1668, 120
        %v1764 = vpop.permute.xlu0 %1763
        %1765 = vrot.lane.b32.xlu0 %v1670, 120
        %v1766 = vpop.permute.xlu0 %1765
        %1767 = vrot.lane.b32.xlu0 %v1672, 120
        %v1768 = vpop.permute.xlu0 %1767
        %1769 = vrot.lane.b32.xlu0 %v1674, 120
        %v1770 = vpop.permute.xlu0 %1769
        %1771 = vrot.lane.b32.xlu0 %v1676, 120
        %v1772 = vpop.permute.xlu0 %1771
        %1773 = vrot.lane.b32.xlu0 %v1678, 120
        %v1774 = vpop.permute.xlu0 %1773
        %1775 = vrot.lane.b32.xlu0 %v1680, 120
        %v1776 = vpop.permute.xlu0 %1775
        %1777 = vrot.lane.b32.xlu0 %v1682, 120
        %v1778 = vpop.permute.xlu0 %1777
        %1779 = vrot.lane.b32.xlu0 %v1684, 120
        %v1780 = vpop.permute.xlu0 %1779
        %1781 = vrot.lane.b32.xlu0 %v1686, 120
        %v1782 = vpop.permute.xlu0 %1781
        %1783 = vrot.lane.b32.xlu0 %v1688, 120
        %v1784 = vpop.permute.xlu0 %1783
        %1785 = vrot.lane.b32.xlu0 %v1690, 120
        %v1786 = vpop.permute.xlu0 %1785
        %1787 = vrot.lane.b32.xlu0 %v1692, 120
        %v1788 = vpop.permute.xlu0 %1787
        %1789 = vrot.lane.b32.xlu0 %v1694, 120
        %v1790 = vpop.permute.xlu0 %1789
        %1791 = vrot.lane.b32.xlu0 %v1696, 120
        %v1792 = vpop.permute.xlu0 %1791
        %1793 = vrot.lane.b32.xlu0 %v1698, 120
        %v1794 = vpop.permute.xlu0 %1793
        %1795 = vrot.lane.b32.xlu0 %v1700, 120
        %v1796 = vpop.permute.xlu0 %1795
        %1797 = vrot.lane.b32.xlu0 %v1702, 120
        %v1798 = vpop.permute.xlu0 %1797
        %1799 = vrot.lane.b32.xlu0 %v1704, 120
        %v1800 = vpop.permute.xlu0 %1799
        %1801 = vrot.lane.b32.xlu0 %v1706, 120
        %v1802 = vpop.permute.xlu0 %1801
        %1803 = vrot.lane.b32.xlu0 %v1708, 120
        %v1804 = vpop.permute.xlu0 %1803
        %v1837 = vmul.f32 %v1581, %v1742
        %v1838 = vmul.f32 %v1582, %v1744
        %v1839 = vmul.f32 %v1583, %v1746
        %v1840 = vmul.f32 %v1584, %v1748
        %v1841 = vmul.f32 %v1585, %v1750
        %v1842 = vmul.f32 %v1586, %v1752
        %v1843 = vmul.f32 %v1587, %v1754
        %v1844 = vmul.f32 %v1588, %v1756
        %v1845 = vmul.f32 %v1589, %v1758
        %v1846 = vmul.f32 %v1590, %v1760
        %v1847 = vmul.f32 %v1591, %v1762
        %v1848 = vmul.f32 %v1592, %v1764
        %v1849 = vmul.f32 %v1593, %v1766
        %v1850 = vmul.f32 %v1594, %v1768
        %v1851 = vmul.f32 %v1595, %v1770
        %v1852 = vmul.f32 %v1596, %v1772
        %v1853 = vmul.f32 %v1597, %v1774
        %v1854 = vmul.f32 %v1598, %v1776
        %v1855 = vmul.f32 %v1599, %v1778
        %v1856 = vmul.f32 %v1600, %v1780
        %v1857 = vmul.f32 %v1601, %v1782
        %v1858 = vmul.f32 %v1602, %v1784
        %v1859 = vmul.f32 %v1603, %v1786
        %v1860 = vmul.f32 %v1604, %v1788
        %v1861 = vmul.f32 %v1605, %v1790
        %v1862 = vmul.f32 %v1606, %v1792
        %v1863 = vmul.f32 %v1607, %v1794
        %v1864 = vmul.f32 %v1608, %v1796
        %v1865 = vmul.f32 %v1609, %v1798
        %v1866 = vmul.f32 %v1610, %v1800
        %v1867 = vmul.f32 %v1611, %v1802
        %v1868 = vmul.f32 %v1612, %v1804
        %v1869 = vadd.f32 %v1455, %v1837
        %v1870 = vadd.f32 %v1458, %v1838
        %v1871 = vadd.f32 %v1463, %v1839
        %v1872 = vadd.f32 %v1466, %v1840
        %v1873 = vadd.f32 %v1471, %v1841
        %v1874 = vadd.f32 %v1474, %v1842
        %v1875 = vadd.f32 %v1479, %v1843
        %v1876 = vadd.f32 %v1482, %v1844
        %v1877 = vadd.f32 %v1487, %v1845
        %v1878 = vadd.f32 %v1490, %v1846
        %v1879 = vadd.f32 %v1495, %v1847
        %v1880 = vadd.f32 %v1498, %v1848
        %v1881 = vadd.f32 %v1503, %v1849
        %v1882 = vadd.f32 %v1506, %v1850
        %v1883 = vadd.f32 %v1511, %v1851
        %v1884 = vadd.f32 %v1514, %v1852
        %v1885 = vadd.f32 %v1519, %v1853
        %v1886 = vadd.f32 %v1522, %v1854
        %v1887 = vadd.f32 %v1527, %v1855
        %v1888 = vadd.f32 %v1530, %v1856
        %v1889 = vadd.f32 %v1535, %v1857
        %v1890 = vadd.f32 %v1538, %v1858
        %v1891 = vadd.f32 %v1543, %v1859
        %v1892 = vadd.f32 %v1546, %v1860
        %v1893 = vadd.f32 %v1551, %v1861
        %v1894 = vadd.f32 %v1554, %v1862
        %v1895 = vadd.f32 %v1559, %v1863
        %v1896 = vadd.f32 %v1562, %v1864
        %v1897 = vadd.f32 %v1567, %v1865
        %v1898 = vadd.f32 %v1570, %v1866
        %v1899 = vadd.f32 %v1575, %v1867
        %v1900 = vadd.f32 %v1578, %v1868
        %v1901 = vpack.c.bf16 %v1870, %v1869
        %v1902 = vpack.c.bf16 %v1872, %v1871
        %v1903 = vpack.c.bf16 %v1874, %v1873
        %v1904 = vpack.c.bf16 %v1876, %v1875
        %v1905 = vpack.c.bf16 %v1878, %v1877
        %v1906 = vpack.c.bf16 %v1880, %v1879
        %v1907 = vpack.c.bf16 %v1882, %v1881
        %v1908 = vpack.c.bf16 %v1884, %v1883
        %v1909 = vpack.c.bf16 %v1886, %v1885
        %v1910 = vpack.c.bf16 %v1888, %v1887
        %v1911 = vpack.c.bf16 %v1890, %v1889
        %v1912 = vpack.c.bf16 %v1892, %v1891
        %v1913 = vpack.c.bf16 %v1894, %v1893
        %v1914 = vpack.c.bf16 %v1896, %v1895
        %v1915 = vpack.c.bf16 %v1898, %v1897
        %v1916 = vpack.c.bf16 %v1900, %v1899
        %v1917 = vld [vmem:[%s8] sm:$0xf]
        %vm1918 = vcmask 64512
        %v1920 = vsel %vm1918, %v1901, 0
        %v1923 = vsel %vm1918, %v1902, 0
        %v1926 = vsel %vm1918, %v1903, 0
        %v1929 = vsel %vm1918, %v1904, 0
        %v1932 = vsel %vm1918, %v1905, 0
        %v1935 = vsel %vm1918, %v1906, 0
        %v1938 = vsel %vm1918, %v1907, 0
        %v1941 = vsel %vm1918, %v1908, 0
        %v1944 = vsel %vm1918, %v1909, 0
        %v1947 = vsel %vm1918, %v1910, 0
        %v1950 = vsel %vm1918, %v1911, 0
        %v1953 = vsel %vm1918, %v1912, 0
        %v1956 = vsel %vm1918, %v1913, 0
        %v1959 = vsel %vm1918, %v1914, 0
        %v1962 = vsel %vm1918, %v1915, 0
        %v1965 = vsel %vm1918, %v1916, 0
        %vm1967 = vcmask 1043456
        %v1969 = vsel %vm1967, %v1917, 0
        %1971 = vmatprep.subr.bf16.mxu0 0
        %1972 = vmatpush1.bf16.msra.mxu0 0
        %1973 = vmatprep.subr.bf16.mxu0 0
        %1974 = vmatpush1.bf16.msra.mxu0 0
        %1975 = vmatprep.subr.bf16.mxu0 0
        %1976 = vmatpush1.bf16.msra.mxu0 0
        %1977 = vmatprep.subr.bf16.mxu0 0
        %1978 = vmatpush1.bf16.msra.mxu0 0
        %1979 = vmatprep.subr.bf16.mxu0 0
        %1980 = vmatpush1.bf16.msra.mxu0 0
        %1981 = vmatprep.subr.bf16.mxu0 0
        %1982 = vmatpush1.bf16.msra.mxu0 0
        %1983 = vmatprep.subr.bf16.mxu0 0
        %1984 = vmatpush1.bf16.msra.mxu0 0
        %1985 = vmatprep.subr.bf16.mxu0 0
        %1986 = vmatpush1.bf16.msra.mxu0 %v1969
        %1987 = vmatprep.subr.bf16.mxu0 0
        %1988 = vmatpush2.bf16.msra.mxu0 0
        %1989 = vmatprep.subr.bf16.mxu0 0
        %1990 = vmatpush2.bf16.msra.mxu0 0
        %1991 = vmatprep.subr.bf16.mxu0 0
        %1992 = vmatpush2.bf16.msra.mxu0 0
        %1993 = vmatprep.subr.bf16.mxu0 0
        %1994 = vmatpush2.bf16.msra.mxu0 0
        %1995 = vmatprep.subr.bf16.mxu0 0
        %1996 = vmatpush2.bf16.msra.mxu0 0
        %1997 = vmatprep.subr.bf16.mxu0 0
        %1998 = vmatpush2.bf16.msra.mxu0 0
        %1999 = vmatprep.subr.bf16.mxu0 0
        %2000 = vmatpush2.bf16.msra.mxu0 0
        %2001 = vmatprep.subr.bf16.mxu0 0
        %2002 = vmatpush2.bf16.msra.mxu0 0
        %2003 = vmatprep.mubr.bf16.mxu0 0
        %2004 = vmatmul.mubr.bf16.gmra.mxu0 %v1920
        %v2005 = vpop.f32.mrf.mxu0
        %v2006 = vadd.f32 0.0, %v2005
        %v2007 = vpop.f32.mrf.mxu0
        %v2008 = vpop.f32.mrf.mxu0
        %v2009 = vadd.f32 0.0, %v2008
        %v2010 = vpop.f32.mrf.mxu0
        %2011 = vmatprep.mubr.bf16.mxu0 0
        %2012 = vmatmul.mubr.bf16.gmra.mxu0 %v1923
        %v2013 = vpop.f32.mrf.mxu0
        %v2014 = vadd.f32 0.0, %v2013
        %v2015 = vpop.f32.mrf.mxu0
        %v2016 = vpop.f32.mrf.mxu0
        %v2017 = vadd.f32 0.0, %v2016
        %v2018 = vpop.f32.mrf.mxu0
        %2019 = vmatprep.mubr.bf16.mxu0 0
        %2020 = vmatmul.mubr.bf16.gmra.mxu0 %v1926
        %v2021 = vpop.f32.mrf.mxu0
        %v2022 = vadd.f32 0.0, %v2021
        %v2023 = vpop.f32.mrf.mxu0
        %v2024 = vpop.f32.mrf.mxu0
        %v2025 = vadd.f32 0.0, %v2024
        %v2026 = vpop.f32.mrf.mxu0
        %2027 = vmatprep.mubr.bf16.mxu0 0
        %2028 = vmatmul.mubr.bf16.gmra.mxu0 %v1929
        %v2029 = vpop.f32.mrf.mxu0
        %v2030 = vadd.f32 0.0, %v2029
        %v2031 = vpop.f32.mrf.mxu0
        %v2032 = vpop.f32.mrf.mxu0
        %v2033 = vadd.f32 0.0, %v2032
        %v2034 = vpop.f32.mrf.mxu0
        %2035 = vmatprep.mubr.bf16.mxu0 0
        %2036 = vmatmul.mubr.bf16.gmra.mxu0 %v1932
        %v2037 = vpop.f32.mrf.mxu0
        %v2038 = vadd.f32 0.0, %v2037
        %v2039 = vpop.f32.mrf.mxu0
        %v2040 = vpop.f32.mrf.mxu0
        %v2041 = vadd.f32 0.0, %v2040
        %v2042 = vpop.f32.mrf.mxu0
        %2043 = vmatprep.mubr.bf16.mxu0 0
        %2044 = vmatmul.mubr.bf16.gmra.mxu0 %v1935
        %v2045 = vpop.f32.mrf.mxu0
        %v2046 = vadd.f32 0.0, %v2045
        %v2047 = vpop.f32.mrf.mxu0
        %v2048 = vpop.f32.mrf.mxu0
        %v2049 = vadd.f32 0.0, %v2048
        %v2050 = vpop.f32.mrf.mxu0
        %2051 = vmatprep.mubr.bf16.mxu0 0
        %2052 = vmatmul.mubr.bf16.gmra.mxu0 %v1938
        %v2053 = vpop.f32.mrf.mxu0
        %v2054 = vadd.f32 0.0, %v2053
        %v2055 = vpop.f32.mrf.mxu0
        %v2056 = vpop.f32.mrf.mxu0
        %v2057 = vadd.f32 0.0, %v2056
        %v2058 = vpop.f32.mrf.mxu0
        %2059 = vmatprep.mubr.bf16.mxu0 0
        %2060 = vmatmul.mubr.bf16.gmra.mxu0 %v1941
        %v2061 = vpop.f32.mrf.mxu0
        %v2062 = vadd.f32 0.0, %v2061
        %v2063 = vpop.f32.mrf.mxu0
        %v2064 = vpop.f32.mrf.mxu0
        %v2065 = vadd.f32 0.0, %v2064
        %v2066 = vpop.f32.mrf.mxu0
        %2067 = vmatprep.mubr.bf16.mxu0 0
        %2068 = vmatmul.mubr.bf16.gmra.mxu0 %v1944
        %v2069 = vpop.f32.mrf.mxu0
        %v2070 = vadd.f32 0.0, %v2069
        %v2071 = vpop.f32.mrf.mxu0
        %v2072 = vpop.f32.mrf.mxu0
        %v2073 = vadd.f32 0.0, %v2072
        %v2074 = vpop.f32.mrf.mxu0
        %2075 = vmatprep.mubr.bf16.mxu0 0
        %2076 = vmatmul.mubr.bf16.gmra.mxu0 %v1947
        %v2077 = vpop.f32.mrf.mxu0
        %v2078 = vadd.f32 0.0, %v2077
        %v2079 = vpop.f32.mrf.mxu0
        %v2080 = vpop.f32.mrf.mxu0
        %v2081 = vadd.f32 0.0, %v2080
        %v2082 = vpop.f32.mrf.mxu0
        %2083 = vmatprep.mubr.bf16.mxu0 0
        %2084 = vmatmul.mubr.bf16.gmra.mxu0 %v1950
        %v2085 = vpop.f32.mrf.mxu0
        %v2086 = vadd.f32 0.0, %v2085
        %v2087 = vpop.f32.mrf.mxu0
        %v2088 = vpop.f32.mrf.mxu0
        %v2089 = vadd.f32 0.0, %v2088
        %v2090 = vpop.f32.mrf.mxu0
        %2091 = vmatprep.mubr.bf16.mxu0 0
        %2092 = vmatmul.mubr.bf16.gmra.mxu0 %v1953
        %v2093 = vpop.f32.mrf.mxu0
        %v2094 = vadd.f32 0.0, %v2093
        %v2095 = vpop.f32.mrf.mxu0
        %v2096 = vpop.f32.mrf.mxu0
        %v2097 = vadd.f32 0.0, %v2096
        %v2098 = vpop.f32.mrf.mxu0
        %2099 = vmatprep.mubr.bf16.mxu0 0
        %2100 = vmatmul.mubr.bf16.gmra.mxu0 %v1956
        %v2101 = vpop.f32.mrf.mxu0
        %v2102 = vadd.f32 0.0, %v2101
        %v2103 = vpop.f32.mrf.mxu0
        %v2104 = vpop.f32.mrf.mxu0
        %v2105 = vadd.f32 0.0, %v2104
        %v2106 = vpop.f32.mrf.mxu0
        %2107 = vmatprep.mubr.bf16.mxu0 0
        %2108 = vmatmul.mubr.bf16.gmra.mxu0 %v1959
        %v2109 = vpop.f32.mrf.mxu0
        %v2110 = vadd.f32 0.0, %v2109
        %v2111 = vpop.f32.mrf.mxu0
        %v2112 = vpop.f32.mrf.mxu0
        %v2113 = vadd.f32 0.0, %v2112
        %v2114 = vpop.f32.mrf.mxu0
        %2115 = vmatprep.mubr.bf16.mxu0 0
        %2116 = vmatmul.mubr.bf16.gmra.mxu0 %v1962
        %v2117 = vpop.f32.mrf.mxu0
        %v2118 = vadd.f32 0.0, %v2117
        %v2119 = vpop.f32.mrf.mxu0
        %v2120 = vpop.f32.mrf.mxu0
        %v2121 = vadd.f32 0.0, %v2120
        %v2122 = vpop.f32.mrf.mxu0
        %2123 = vmatprep.mubr.bf16.mxu0 0
        %2124 = vmatmul.mubr.bf16.gmra.mxu0 %v1965
        %v2125 = vpop.f32.mrf.mxu0
        %v2126 = vadd.f32 0.0, %v2125
        %v2127 = vpop.f32.mrf.mxu0
        %v2128 = vpop.f32.mrf.mxu0
        %v2129 = vadd.f32 0.0, %v2128
        %v2130 = vpop.f32.mrf.mxu0
        %2131 = vdwg.mxu0
        %v2132 = vpack.c.bf16 %v2009, %v2006
        %v2133 = vpack.c.bf16 %v2017, %v2014
        %v2134 = vpack.c.bf16 %v2025, %v2022
        %v2135 = vpack.c.bf16 %v2033, %v2030
        %v2136 = vpack.c.bf16 %v2041, %v2038
        %v2137 = vpack.c.bf16 %v2049, %v2046
        %v2138 = vpack.c.bf16 %v2057, %v2054
        %v2139 = vpack.c.bf16 %v2065, %v2062
        %v2140 = vpack.c.bf16 %v2073, %v2070
        %v2141 = vpack.c.bf16 %v2081, %v2078
        %v2142 = vpack.c.bf16 %v2089, %v2086
        %v2143 = vpack.c.bf16 %v2097, %v2094
        %v2144 = vpack.c.bf16 %v2105, %v2102
        %v2145 = vpack.c.bf16 %v2113, %v2110
        %v2146 = vpack.c.bf16 %v2121, %v2118
        %v2147 = vpack.c.bf16 %v2129, %v2126
        %v2148 = vld [vmem:[%s9] sm:$0x1]
        %v2150 = vpack.i.b16 %v2148, %v2148
        %v2152 = vlaneseq
        %v2153 = vshrl.u32 %v2152, 7
        %v2154 = vsub.s32 0, %v2153
        %v2155 = vrot.slane %v2150, %v2154
        %v2156 = vadd.bf16 %v2132, %v2155
        %v2157 = vadd.bf16 %v2133, %v2155
        %v2158 = vadd.bf16 %v2134, %v2155
        %v2159 = vadd.bf16 %v2135, %v2155
        %v2160 = vadd.bf16 %v2136, %v2155
        %v2161 = vadd.bf16 %v2137, %v2155
        %v2162 = vadd.bf16 %v2138, %v2155
        %v2163 = vadd.bf16 %v2139, %v2155
        %v2164 = vadd.bf16 %v2140, %v2155
        %v2165 = vadd.bf16 %v2141, %v2155
        %v2166 = vadd.bf16 %v2142, %v2155
        %v2167 = vadd.bf16 %v2143, %v2155
        %v2168 = vadd.bf16 %v2144, %v2155
        %v2169 = vadd.bf16 %v2145, %v2155
        %v2170 = vadd.bf16 %v2146, %v2155
        %v2171 = vadd.bf16 %v2147, %v2155
        %v2172 = vmax.bf16 %v2156, 0
        %v2173 = vmax.bf16 %v2157, 0
        %v2174 = vmax.bf16 %v2158, 0
        %v2175 = vmax.bf16 %v2159, 0
        %v2176 = vmax.bf16 %v2160, 0
        %v2177 = vmax.bf16 %v2161, 0
        %v2178 = vmax.bf16 %v2162, 0
        %v2179 = vmax.bf16 %v2163, 0
        %v2180 = vmax.bf16 %v2164, 0
        %v2181 = vmax.bf16 %v2165, 0
        %v2182 = vmax.bf16 %v2166, 0
        %v2183 = vmax.bf16 %v2167, 0
        %v2184 = vmax.bf16 %v2168, 0
        %v2185 = vmax.bf16 %v2169, 0
        %v2186 = vmax.bf16 %v2170, 0
        %v2187 = vmax.bf16 %v2171, 0
        %v2188 = vld [vmem:[%s10] sm:$0xf]
        %v2189 = vld [vmem:[%s10 + $0x4] sm:$0xf]
        %v2190 = vld [vmem:[%s10 + $0x8] sm:$0xf]
        %v2191 = vld [vmem:[%s10 + $0xc] sm:$0xf]
        %v2192 = vld [vmem:[%s10 + $0x10] sm:$0xf]
        %v2193 = vld [vmem:[%s10 + $0x14] sm:$0xf]
        %v2194 = vld [vmem:[%s10 + $0x18] sm:$0xf]
        %v2195 = vld [vmem:[%s10 + $0x1c] sm:$0xf]
        %v2204 = vunpack.c.l.b16 %v2188
        %v2205 = vunpack.c.l.b16 %v2189
        %v2206 = vunpack.c.l.b16 %v2190
        %v2207 = vunpack.c.l.b16 %v2191
        %v2208 = vunpack.c.l.b16 %v2192
        %v2209 = vunpack.c.l.b16 %v2193
        %v2210 = vunpack.c.l.b16 %v2194
        %v2211 = vunpack.c.l.b16 %v2195
        %v2212 = vpack.c.b16 %v2205, %v2204
        %v2213 = vpack.c.b16 %v2207, %v2206
        %v2214 = vpack.c.b16 %v2209, %v2208
        %v2215 = vpack.c.b16 %v2211, %v2210
        %v2221 = vsel %vm1371, %v2172, 0
        %v2224 = vsel %vm1371, %v2173, 0
        %v2227 = vsel %vm1371, %v2174, 0
        %v2230 = vsel %vm1371, %v2175, 0
        %v2233 = vsel %vm1371, %v2176, 0
        %v2236 = vsel %vm1371, %v2177, 0
        %v2239 = vsel %vm1371, %v2178, 0
        %v2242 = vsel %vm1371, %v2179, 0
        %v2245 = vsel %vm1371, %v2180, 0
        %v2248 = vsel %vm1371, %v2181, 0
        %v2251 = vsel %vm1371, %v2182, 0
        %v2254 = vsel %vm1371, %v2183, 0
        %v2257 = vsel %vm1371, %v2184, 0
        %v2260 = vsel %vm1371, %v2185, 0
        %v2263 = vsel %vm1371, %v2186, 0
        %v2266 = vsel %vm1371, %v2187, 0
        %2268 = vmatprep.subr.bf16.mxu0 0
        %2269 = vmatpush1.bf16.msra.mxu0 0
        %2270 = vmatprep.subr.bf16.mxu0 0
        %2271 = vmatpush1.bf16.msra.mxu0 0
        %2272 = vmatprep.subr.bf16.mxu0 0
        %2273 = vmatpush1.bf16.msra.mxu0 0
        %2274 = vmatprep.subr.bf16.mxu0 0
        %2275 = vmatpush1.bf16.msra.mxu0 0
        %2276 = vmatprep.subr.bf16.mxu0 0
        %2277 = vmatpush1.bf16.msra.mxu0 %v2215
        %2278 = vmatprep.subr.bf16.mxu0 0
        %2279 = vmatpush1.bf16.msra.mxu0 %v2214
        %2280 = vmatprep.subr.bf16.mxu0 0
        %2281 = vmatpush1.bf16.msra.mxu0 %v2213
        %2282 = vmatprep.subr.bf16.mxu0 0
        %2283 = vmatpush1.bf16.msra.mxu0 %v2212
        %2284 = vmatprep.subr.bf16.mxu0 0
        %2285 = vmatpush2.bf16.msra.mxu0 0
        %2286 = vmatprep.subr.bf16.mxu0 0
        %2287 = vmatpush2.bf16.msra.mxu0 0
        %2288 = vmatprep.subr.bf16.mxu0 0
        %2289 = vmatpush2.bf16.msra.mxu0 0
        %2290 = vmatprep.subr.bf16.mxu0 0
        %2291 = vmatpush2.bf16.msra.mxu0 0
        %2292 = vmatprep.subr.bf16.mxu0 0
        %2293 = vmatpush2.bf16.msra.mxu0 0
        %2294 = vmatprep.subr.bf16.mxu0 0
        %2295 = vmatpush2.bf16.msra.mxu0 0
        %2296 = vmatprep.subr.bf16.mxu0 0
        %2297 = vmatpush2.bf16.msra.mxu0 0
        %2298 = vmatprep.subr.bf16.mxu0 0
        %2299 = vmatpush2.bf16.msra.mxu0 0
        %2300 = vmatprep.mubr.bf16.mxu0 0
        %2301 = vmatmul.mubr.bf16.gmra.mxu0 %v2221
        %v2302 = vpop.f32.mrf.mxu0
        %v2303 = vadd.f32 0.0, %v2302
        %v2304 = vpop.f32.mrf.mxu0
        %v2305 = vpop.f32.mrf.mxu0
        %v2306 = vadd.f32 0.0, %v2305
        %v2307 = vpop.f32.mrf.mxu0
        %2308 = vmatprep.mubr.bf16.mxu0 0
        %2309 = vmatmul.mubr.bf16.gmra.mxu0 %v2224
        %v2310 = vpop.f32.mrf.mxu0
        %v2311 = vadd.f32 0.0, %v2310
        %v2312 = vpop.f32.mrf.mxu0
        %v2313 = vpop.f32.mrf.mxu0
        %v2314 = vadd.f32 0.0, %v2313
        %v2315 = vpop.f32.mrf.mxu0
        %2316 = vmatprep.mubr.bf16.mxu0 0
        %2317 = vmatmul.mubr.bf16.gmra.mxu0 %v2227
        %v2318 = vpop.f32.mrf.mxu0
        %v2319 = vadd.f32 0.0, %v2318
        %v2320 = vpop.f32.mrf.mxu0
        %v2321 = vpop.f32.mrf.mxu0
        %v2322 = vadd.f32 0.0, %v2321
        %v2323 = vpop.f32.mrf.mxu0
        %2324 = vmatprep.mubr.bf16.mxu0 0
        %2325 = vmatmul.mubr.bf16.gmra.mxu0 %v2230
        %v2326 = vpop.f32.mrf.mxu0
        %v2327 = vadd.f32 0.0, %v2326
        %v2328 = vpop.f32.mrf.mxu0
        %v2329 = vpop.f32.mrf.mxu0
        %v2330 = vadd.f32 0.0, %v2329
        %v2331 = vpop.f32.mrf.mxu0
        %2332 = vmatprep.mubr.bf16.mxu0 0
        %2333 = vmatmul.mubr.bf16.gmra.mxu0 %v2233
        %v2334 = vpop.f32.mrf.mxu0
        %v2335 = vadd.f32 0.0, %v2334
        %v2336 = vpop.f32.mrf.mxu0
        %v2337 = vpop.f32.mrf.mxu0
        %v2338 = vadd.f32 0.0, %v2337
        %v2339 = vpop.f32.mrf.mxu0
        %2340 = vmatprep.mubr.bf16.mxu0 0
        %2341 = vmatmul.mubr.bf16.gmra.mxu0 %v2236
        %v2342 = vpop.f32.mrf.mxu0
        %v2343 = vadd.f32 0.0, %v2342
        %v2344 = vpop.f32.mrf.mxu0
        %v2345 = vpop.f32.mrf.mxu0
        %v2346 = vadd.f32 0.0, %v2345
        %v2347 = vpop.f32.mrf.mxu0
        %2348 = vmatprep.mubr.bf16.mxu0 0
        %2349 = vmatmul.mubr.bf16.gmra.mxu0 %v2239
        %v2350 = vpop.f32.mrf.mxu0
        %v2351 = vadd.f32 0.0, %v2350
        %v2352 = vpop.f32.mrf.mxu0
        %v2353 = vpop.f32.mrf.mxu0
        %v2354 = vadd.f32 0.0, %v2353
        %v2355 = vpop.f32.mrf.mxu0
        %2356 = vmatprep.mubr.bf16.mxu0 0
        %2357 = vmatmul.mubr.bf16.gmra.mxu0 %v2242
        %v2358 = vpop.f32.mrf.mxu0
        %v2359 = vadd.f32 0.0, %v2358
        %v2360 = vpop.f32.mrf.mxu0
        %v2361 = vpop.f32.mrf.mxu0
        %v2362 = vadd.f32 0.0, %v2361
        %v2363 = vpop.f32.mrf.mxu0
        %2364 = vmatprep.mubr.bf16.mxu0 0
        %2365 = vmatmul.mubr.bf16.gmra.mxu0 %v2245
        %v2366 = vpop.f32.mrf.mxu0
        %v2367 = vadd.f32 0.0, %v2366
        %v2368 = vpop.f32.mrf.mxu0
        %v2369 = vpop.f32.mrf.mxu0
        %v2370 = vadd.f32 0.0, %v2369
        %v2371 = vpop.f32.mrf.mxu0
        %2372 = vmatprep.mubr.bf16.mxu0 0
        %2373 = vmatmul.mubr.bf16.gmra.mxu0 %v2248
        %v2374 = vpop.f32.mrf.mxu0
        %v2375 = vadd.f32 0.0, %v2374
        %v2376 = vpop.f32.mrf.mxu0
        %v2377 = vpop.f32.mrf.mxu0
        %v2378 = vadd.f32 0.0, %v2377
        %v2379 = vpop.f32.mrf.mxu0
        %2380 = vmatprep.mubr.bf16.mxu0 0
        %2381 = vmatmul.mubr.bf16.gmra.mxu0 %v2251
        %v2382 = vpop.f32.mrf.mxu0
        %v2383 = vadd.f32 0.0, %v2382
        %v2384 = vpop.f32.mrf.mxu0
        %v2385 = vpop.f32.mrf.mxu0
        %v2386 = vadd.f32 0.0, %v2385
        %v2387 = vpop.f32.mrf.mxu0
        %2388 = vmatprep.mubr.bf16.mxu0 0
        %2389 = vmatmul.mubr.bf16.gmra.mxu0 %v2254
        %v2390 = vpop.f32.mrf.mxu0
        %v2391 = vadd.f32 0.0, %v2390
        %v2392 = vpop.f32.mrf.mxu0
        %v2393 = vpop.f32.mrf.mxu0
        %v2394 = vadd.f32 0.0, %v2393
        %v2395 = vpop.f32.mrf.mxu0
        %2396 = vmatprep.mubr.bf16.mxu0 0
        %2397 = vmatmul.mubr.bf16.gmra.mxu0 %v2257
        %v2398 = vpop.f32.mrf.mxu0
        %v2399 = vadd.f32 0.0, %v2398
        %v2400 = vpop.f32.mrf.mxu0
        %v2401 = vpop.f32.mrf.mxu0
        %v2402 = vadd.f32 0.0, %v2401
        %v2403 = vpop.f32.mrf.mxu0
        %2404 = vmatprep.mubr.bf16.mxu0 0
        %2405 = vmatmul.mubr.bf16.gmra.mxu0 %v2260
        %v2406 = vpop.f32.mrf.mxu0
        %v2407 = vadd.f32 0.0, %v2406
        %v2408 = vpop.f32.mrf.mxu0
        %v2409 = vpop.f32.mrf.mxu0
        %v2410 = vadd.f32 0.0, %v2409
        %v2411 = vpop.f32.mrf.mxu0
        %2412 = vmatprep.mubr.bf16.mxu0 0
        %2413 = vmatmul.mubr.bf16.gmra.mxu0 %v2263
        %v2414 = vpop.f32.mrf.mxu0
        %v2415 = vadd.f32 0.0, %v2414
        %v2416 = vpop.f32.mrf.mxu0
        %v2417 = vpop.f32.mrf.mxu0
        %v2418 = vadd.f32 0.0, %v2417
        %v2419 = vpop.f32.mrf.mxu0
        %2420 = vmatprep.mubr.bf16.mxu0 0
        %2421 = vmatmul.mubr.bf16.gmra.mxu0 %v2266
        %v2422 = vpop.f32.mrf.mxu0
        %v2423 = vadd.f32 0.0, %v2422
        %v2424 = vpop.f32.mrf.mxu0
        %v2425 = vpop.f32.mrf.mxu0
        %v2426 = vadd.f32 0.0, %v2425
        %v2427 = vpop.f32.mrf.mxu0
        %2428 = vdwg.mxu0
        %v2429 = vpack.c.bf16 %v2306, %v2303
        %v2430 = vpack.c.bf16 %v2314, %v2311
        %v2431 = vpack.c.bf16 %v2322, %v2319
        %v2432 = vpack.c.bf16 %v2330, %v2327
        %v2433 = vpack.c.bf16 %v2338, %v2335
        %v2434 = vpack.c.bf16 %v2346, %v2343
        %v2435 = vpack.c.bf16 %v2354, %v2351
        %v2436 = vpack.c.bf16 %v2362, %v2359
        %v2437 = vpack.c.bf16 %v2370, %v2367
        %v2438 = vpack.c.bf16 %v2378, %v2375
        %v2439 = vpack.c.bf16 %v2386, %v2383
        %v2440 = vpack.c.bf16 %v2394, %v2391
        %v2441 = vpack.c.bf16 %v2402, %v2399
        %v2442 = vpack.c.bf16 %v2410, %v2407
        %v2443 = vpack.c.bf16 %v2418, %v2415
        %v2444 = vpack.c.bf16 %v2426, %v2423
        %v2445 = vld [vmem:[%s11] sm:$0x1]
        %v2447 = vpack.i.b16 %v2445, %v2445
        %v2449 = vlaneseq
        %v2450 = vshrl.u32 %v2449, 7
        %v2451 = vsub.s32 0, %v2450
        %v2452 = vrot.slane %v2447, %v2451
        %v2453 = vadd.bf16 %v2429, %v2452
        %v2454 = vadd.bf16 %v2430, %v2452
        %v2455 = vadd.bf16 %v2431, %v2452
        %v2456 = vadd.bf16 %v2432, %v2452
        %v2457 = vadd.bf16 %v2433, %v2452
        %v2458 = vadd.bf16 %v2434, %v2452
        %v2459 = vadd.bf16 %v2435, %v2452
        %v2460 = vadd.bf16 %v2436, %v2452
        %v2461 = vadd.bf16 %v2437, %v2452
        %v2462 = vadd.bf16 %v2438, %v2452
        %v2463 = vadd.bf16 %v2439, %v2452
        %v2464 = vadd.bf16 %v2440, %v2452
        %v2465 = vadd.bf16 %v2441, %v2452
        %v2466 = vadd.bf16 %v2442, %v2452
        %v2467 = vadd.bf16 %v2443, %v2452
        %v2468 = vadd.bf16 %v2444, %v2452
        %v2469 = vmax.bf16 %v2453, 0
        %v2470 = vmax.bf16 %v2454, 0
        %v2471 = vmax.bf16 %v2455, 0
        %v2472 = vmax.bf16 %v2456, 0
        %v2473 = vmax.bf16 %v2457, 0
        %v2474 = vmax.bf16 %v2458, 0
        %v2475 = vmax.bf16 %v2459, 0
        %v2476 = vmax.bf16 %v2460, 0
        %v2477 = vmax.bf16 %v2461, 0
        %v2478 = vmax.bf16 %v2462, 0
        %v2479 = vmax.bf16 %v2463, 0
        %v2480 = vmax.bf16 %v2464, 0
        %v2481 = vmax.bf16 %v2465, 0
        %v2482 = vmax.bf16 %v2466, 0
        %v2483 = vmax.bf16 %v2467, 0
        %v2484 = vmax.bf16 %v2468, 0
        %v2485 = vld [vmem:[%s12] sm:$0xf]
        %v2486 = vld [vmem:[%s12 + $0x4] sm:$0xf]
        %v2487 = vld [vmem:[%s12 + $0x8] sm:$0xf]
        %v2488 = vld [vmem:[%s12 + $0xc] sm:$0xf]
        %v2489 = vld [vmem:[%s12 + $0x10] sm:$0xf]
        %v2490 = vld [vmem:[%s12 + $0x14] sm:$0xf]
        %v2491 = vld [vmem:[%s12 + $0x18] sm:$0xf]
        %v2492 = vld [vmem:[%s12 + $0x1c] sm:$0xf]
        %v2493 = vld [vmem:[%s12 + $0x20] sm:$0xf]
        %v2494 = vld [vmem:[%s12 + $0x24] sm:$0xf]
        %v2495 = vld [vmem:[%s12 + $0x28] sm:$0xf]
        %v2496 = vld [vmem:[%s12 + $0x2c] sm:$0xf]
        %v2497 = vld [vmem:[%s12 + $0x30] sm:$0xf]
        %v2498 = vld [vmem:[%s12 + $0x34] sm:$0xf]
        %v2499 = vld [vmem:[%s12 + $0x38] sm:$0xf]
        %v2500 = vld [vmem:[%s12 + $0x3c] sm:$0xf]
        %v2501 = vld [vmem:[%s13] sm:$0x1]
        %v2503 = vlaneseq
        %v2504 = vshrl.u32 %v2503, 7
        %v2505 = vsub.s32 0, %v2504
        %v2506 = vrot.slane %v2501, %v2505
        %v2524 = vunpack.c.l.b16 %v2485
        %v2525 = vunpack.c.l.b16 %v2486
        %v2526 = vunpack.c.l.b16 %v2487
        %v2527 = vunpack.c.l.b16 %v2488
        %v2528 = vunpack.c.l.b16 %v2489
        %v2529 = vunpack.c.l.b16 %v2490
        %v2530 = vunpack.c.l.b16 %v2491
        %v2531 = vunpack.c.l.b16 %v2492
        %v2532 = vunpack.c.l.b16 %v2493
        %v2533 = vunpack.c.l.b16 %v2494
        %v2534 = vunpack.c.l.b16 %v2495
        %v2535 = vunpack.c.l.b16 %v2496
        %v2536 = vunpack.c.l.b16 %v2497
        %v2537 = vunpack.c.l.b16 %v2498
        %v2538 = vunpack.c.l.b16 %v2499
        %v2539 = vunpack.c.l.b16 %v2500
        %v2540 = vpack.c.b16 %v2525, %v2524
        %v2541 = vpack.c.b16 %v2527, %v2526
        %v2542 = vpack.c.b16 %v2529, %v2528
        %v2543 = vpack.c.b16 %v2531, %v2530
        %v2544 = vpack.c.b16 %v2533, %v2532
        %v2545 = vpack.c.b16 %v2535, %v2534
        %v2546 = vpack.c.b16 %v2537, %v2536
        %v2547 = vpack.c.b16 %v2539, %v2538
        %2556 = vmatprep.subr.bf16.mxu0 0
        %2557 = vmatpush1.bf16.msra.mxu0 %v2547
        %2558 = vmatprep.subr.bf16.mxu0 0
        %2559 = vmatpush1.bf16.msra.mxu0 %v2546
        %2560 = vmatprep.subr.bf16.mxu0 0
        %2561 = vmatpush1.bf16.msra.mxu0 %v2545
        %2562 = vmatprep.subr.bf16.mxu0 0
        %2563 = vmatpush1.bf16.msra.mxu0 %v2544
        %2564 = vmatprep.subr.bf16.mxu0 0
        %2565 = vmatpush1.bf16.msra.mxu0 %v2543
        %2566 = vmatprep.subr.bf16.mxu0 0
        %2567 = vmatpush1.bf16.msra.mxu0 %v2542
        %2568 = vmatprep.subr.bf16.mxu0 0
        %2569 = vmatpush1.bf16.msra.mxu0 %v2541
        %2570 = vmatprep.subr.bf16.mxu0 0
        %2571 = vmatpush1.bf16.msra.mxu0 %v2540
        %2572 = vmatprep.subr.bf16.mxu0 0
        %2573 = vmatpush2.bf16.msra.mxu0 0
        %2574 = vmatprep.subr.bf16.mxu0 0
        %2575 = vmatpush2.bf16.msra.mxu0 0
        %2576 = vmatprep.subr.bf16.mxu0 0
        %2577 = vmatpush2.bf16.msra.mxu0 0
        %2578 = vmatprep.subr.bf16.mxu0 0
        %2579 = vmatpush2.bf16.msra.mxu0 0
        %2580 = vmatprep.subr.bf16.mxu0 0
        %2581 = vmatpush2.bf16.msra.mxu0 0
        %2582 = vmatprep.subr.bf16.mxu0 0
        %2583 = vmatpush2.bf16.msra.mxu0 0
        %2584 = vmatprep.subr.bf16.mxu0 0
        %2585 = vmatpush2.bf16.msra.mxu0 0
        %2586 = vmatprep.subr.bf16.mxu0 0
        %2587 = vmatpush2.bf16.msra.mxu0 0
        %2588 = vmatprep.mubr.bf16.mxu0 0
        %2589 = vmatmul.mubr.bf16.gmra.mxu0 %v2469
        %v2590 = vpop.f32.mrf.mxu0
        %v2591 = vadd.f32 %v2506, %v2590
        %v2592 = vpop.f32.mrf.mxu0
        %v2593 = vpop.f32.mrf.mxu0
        %v2594 = vadd.f32 %v2506, %v2593
        %v2595 = vpop.f32.mrf.mxu0
        %2596 = vmatprep.mubr.bf16.mxu0 0
        %2597 = vmatmul.mubr.bf16.gmra.mxu0 %v2470
        %v2598 = vpop.f32.mrf.mxu0
        %v2599 = vadd.f32 %v2506, %v2598
        %v2600 = vpop.f32.mrf.mxu0
        %v2601 = vpop.f32.mrf.mxu0
        %v2602 = vadd.f32 %v2506, %v2601
        %v2603 = vpop.f32.mrf.mxu0
        %2604 = vmatprep.mubr.bf16.mxu0 0
        %2605 = vmatmul.mubr.bf16.gmra.mxu0 %v2471
        %v2606 = vpop.f32.mrf.mxu0
        %v2607 = vadd.f32 %v2506, %v2606
        %v2608 = vpop.f32.mrf.mxu0
        %v2609 = vpop.f32.mrf.mxu0
        %v2610 = vadd.f32 %v2506, %v2609
        %v2611 = vpop.f32.mrf.mxu0
        %2612 = vmatprep.mubr.bf16.mxu0 0
        %2613 = vmatmul.mubr.bf16.gmra.mxu0 %v2472
        %v2614 = vpop.f32.mrf.mxu0
        %v2615 = vadd.f32 %v2506, %v2614
        %v2616 = vpop.f32.mrf.mxu0
        %v2617 = vpop.f32.mrf.mxu0
        %v2618 = vadd.f32 %v2506, %v2617
        %v2619 = vpop.f32.mrf.mxu0
        %2620 = vmatprep.mubr.bf16.mxu0 0
        %2621 = vmatmul.mubr.bf16.gmra.mxu0 %v2473
        %v2622 = vpop.f32.mrf.mxu0
        %v2623 = vadd.f32 %v2506, %v2622
        %v2624 = vpop.f32.mrf.mxu0
        %v2625 = vpop.f32.mrf.mxu0
        %v2626 = vadd.f32 %v2506, %v2625
        %v2627 = vpop.f32.mrf.mxu0
        %2628 = vmatprep.mubr.bf16.mxu0 0
        %2629 = vmatmul.mubr.bf16.gmra.mxu0 %v2474
        %v2630 = vpop.f32.mrf.mxu0
        %v2631 = vadd.f32 %v2506, %v2630
        %v2632 = vpop.f32.mrf.mxu0
        %v2633 = vpop.f32.mrf.mxu0
        %v2634 = vadd.f32 %v2506, %v2633
        %v2635 = vpop.f32.mrf.mxu0
        %2636 = vmatprep.mubr.bf16.mxu0 0
        %2637 = vmatmul.mubr.bf16.gmra.mxu0 %v2475
        %v2638 = vpop.f32.mrf.mxu0
        %v2639 = vadd.f32 %v2506, %v2638
        %v2640 = vpop.f32.mrf.mxu0
        %v2641 = vpop.f32.mrf.mxu0
        %v2642 = vadd.f32 %v2506, %v2641
        %v2643 = vpop.f32.mrf.mxu0
        %2644 = vmatprep.mubr.bf16.mxu0 0
        %2645 = vmatmul.mubr.bf16.gmra.mxu0 %v2476
        %v2646 = vpop.f32.mrf.mxu0
        %v2647 = vadd.f32 %v2506, %v2646
        %v2648 = vpop.f32.mrf.mxu0
        %v2649 = vpop.f32.mrf.mxu0
        %v2650 = vadd.f32 %v2506, %v2649
        %v2651 = vpop.f32.mrf.mxu0
        %2652 = vmatprep.mubr.bf16.mxu0 0
        %2653 = vmatmul.mubr.bf16.gmra.mxu0 %v2477
        %v2654 = vpop.f32.mrf.mxu0
        %v2655 = vadd.f32 %v2506, %v2654
        %v2656 = vpop.f32.mrf.mxu0
        %v2657 = vpop.f32.mrf.mxu0
        %v2658 = vadd.f32 %v2506, %v2657
        %v2659 = vpop.f32.mrf.mxu0
        %2660 = vmatprep.mubr.bf16.mxu0 0
        %2661 = vmatmul.mubr.bf16.gmra.mxu0 %v2478
        %v2662 = vpop.f32.mrf.mxu0
        %v2663 = vadd.f32 %v2506, %v2662
        %v2664 = vpop.f32.mrf.mxu0
        %v2665 = vpop.f32.mrf.mxu0
        %v2666 = vadd.f32 %v2506, %v2665
        %v2667 = vpop.f32.mrf.mxu0
        %2668 = vmatprep.mubr.bf16.mxu0 0
        %2669 = vmatmul.mubr.bf16.gmra.mxu0 %v2479
        %v2670 = vpop.f32.mrf.mxu0
        %v2671 = vadd.f32 %v2506, %v2670
        %v2672 = vpop.f32.mrf.mxu0
        %v2673 = vpop.f32.mrf.mxu0
        %v2674 = vadd.f32 %v2506, %v2673
        %v2675 = vpop.f32.mrf.mxu0
        %2676 = vmatprep.mubr.bf16.mxu0 0
        %2677 = vmatmul.mubr.bf16.gmra.mxu0 %v2480
        %v2678 = vpop.f32.mrf.mxu0
        %v2679 = vadd.f32 %v2506, %v2678
        %v2680 = vpop.f32.mrf.mxu0
        %v2681 = vpop.f32.mrf.mxu0
        %v2682 = vadd.f32 %v2506, %v2681
        %v2683 = vpop.f32.mrf.mxu0
        %2684 = vmatprep.mubr.bf16.mxu0 0
        %2685 = vmatmul.mubr.bf16.gmra.mxu0 %v2481
        %v2686 = vpop.f32.mrf.mxu0
        %v2687 = vadd.f32 %v2506, %v2686
        %v2688 = vpop.f32.mrf.mxu0
        %v2689 = vpop.f32.mrf.mxu0
        %v2690 = vadd.f32 %v2506, %v2689
        %v2691 = vpop.f32.mrf.mxu0
        %2692 = vmatprep.mubr.bf16.mxu0 0
        %2693 = vmatmul.mubr.bf16.gmra.mxu0 %v2482
        %v2694 = vpop.f32.mrf.mxu0
        %v2695 = vadd.f32 %v2506, %v2694
        %v2696 = vpop.f32.mrf.mxu0
        %v2697 = vpop.f32.mrf.mxu0
        %v2698 = vadd.f32 %v2506, %v2697
        %v2699 = vpop.f32.mrf.mxu0
        %2700 = vmatprep.mubr.bf16.mxu0 0
        %2701 = vmatmul.mubr.bf16.gmra.mxu0 %v2483
        %v2702 = vpop.f32.mrf.mxu0
        %v2703 = vadd.f32 %v2506, %v2702
        %v2704 = vpop.f32.mrf.mxu0
        %v2705 = vpop.f32.mrf.mxu0
        %v2706 = vadd.f32 %v2506, %v2705
        %v2707 = vpop.f32.mrf.mxu0
        %2708 = vmatprep.mubr.bf16.mxu0 0
        %2709 = vmatmul.mubr.bf16.gmra.mxu0 %v2484
        %v2710 = vpop.f32.mrf.mxu0
        %v2711 = vadd.f32 %v2506, %v2710
        %v2712 = vpop.f32.mrf.mxu0
        %v2713 = vpop.f32.mrf.mxu0
        %v2714 = vadd.f32 %v2506, %v2713
        %v2715 = vpop.f32.mrf.mxu0
        %2716 = vdwg.mxu0
        %v2717 = vpack.c.bf16 %v2594, %v2591
        %v2718 = vpack.c.bf16 %v2602, %v2599
        %v2719 = vpack.c.bf16 %v2610, %v2607
        %v2720 = vpack.c.bf16 %v2618, %v2615
        %v2721 = vpack.c.bf16 %v2626, %v2623
        %v2722 = vpack.c.bf16 %v2634, %v2631
        %v2723 = vpack.c.bf16 %v2642, %v2639
        %v2724 = vpack.c.bf16 %v2650, %v2647
        %v2725 = vpack.c.bf16 %v2658, %v2655
        %v2726 = vpack.c.bf16 %v2666, %v2663
        %v2727 = vpack.c.bf16 %v2674, %v2671
        %v2728 = vpack.c.bf16 %v2682, %v2679
        %v2729 = vpack.c.bf16 %v2690, %v2687
        %v2730 = vpack.c.bf16 %v2698, %v2695
        %v2731 = vpack.c.bf16 %v2706, %v2703
        %v2732 = vpack.c.bf16 %v2714, %v2711
        %v2733 = vld [vmem:[%s14] sm:$0xf]
        %v2734 = vld [vmem:[%s14 + $0x4] sm:$0xf]
        %v2735 = vld [vmem:[%s14 + $0x8] sm:$0xf]
        %v2736 = vld [vmem:[%s14 + $0xc] sm:$0xf]
        %v2741 = vunpack.c.l.b16 %v2733
        %v2742 = vunpack.c.l.b16 %v2734
        %v2743 = vunpack.c.l.b16 %v2735
        %v2744 = vunpack.c.l.b16 %v2736
        %v2745 = vpack.c.b16 %v2742, %v2741
        %v2746 = vpack.c.b16 %v2744, %v2743
        %v2750 = vsel %vm785, %v2717, 0
        %v2753 = vsel %vm785, %v2718, 0
        %v2756 = vsel %vm785, %v2719, 0
        %v2759 = vsel %vm785, %v2720, 0
        %v2762 = vsel %vm785, %v2721, 0
        %v2765 = vsel %vm785, %v2722, 0
        %v2768 = vsel %vm785, %v2723, 0
        %v2771 = vsel %vm785, %v2724, 0
        %v2774 = vsel %vm785, %v2725, 0
        %v2777 = vsel %vm785, %v2726, 0
        %v2780 = vsel %vm785, %v2727, 0
        %v2783 = vsel %vm785, %v2728, 0
        %v2786 = vsel %vm785, %v2729, 0
        %v2789 = vsel %vm785, %v2730, 0
        %v2792 = vsel %vm785, %v2731, 0
        %v2795 = vsel %vm785, %v2732, 0
        %2797 = vmatprep.subr.bf16.mxu0 0
        %2798 = vmatpush1.bf16.msra.mxu0 0
        %2799 = vmatprep.subr.bf16.mxu0 0
        %2800 = vmatpush1.bf16.msra.mxu0 0
        %2801 = vmatprep.subr.bf16.mxu0 0
        %2802 = vmatpush1.bf16.msra.mxu0 0
        %2803 = vmatprep.subr.bf16.mxu0 0
        %2804 = vmatpush1.bf16.msra.mxu0 0
        %2805 = vmatprep.subr.bf16.mxu0 0
        %2806 = vmatpush1.bf16.msra.mxu0 0
        %2807 = vmatprep.subr.bf16.mxu0 0
        %2808 = vmatpush1.bf16.msra.mxu0 0
        %2809 = vmatprep.subr.bf16.mxu0 0
        %2810 = vmatpush1.bf16.msra.mxu0 %v2746
        %2811 = vmatprep.subr.bf16.mxu0 0
        %2812 = vmatpush1.bf16.msra.mxu0 %v2745
        %2813 = vmatprep.subr.bf16.mxu0 0
        %2814 = vmatpush2.bf16.msra.mxu0 0
        %2815 = vmatprep.subr.bf16.mxu0 0
        %2816 = vmatpush2.bf16.msra.mxu0 0
        %2817 = vmatprep.subr.bf16.mxu0 0
        %2818 = vmatpush2.bf16.msra.mxu0 0
        %2819 = vmatprep.subr.bf16.mxu0 0
        %2820 = vmatpush2.bf16.msra.mxu0 0
        %2821 = vmatprep.subr.bf16.mxu0 0
        %2822 = vmatpush2.bf16.msra.mxu0 0
        %2823 = vmatprep.subr.bf16.mxu0 0
        %2824 = vmatpush2.bf16.msra.mxu0 0
        %2825 = vmatprep.subr.bf16.mxu0 0
        %2826 = vmatpush2.bf16.msra.mxu0 0
        %2827 = vmatprep.subr.bf16.mxu0 0
        %2828 = vmatpush2.bf16.msra.mxu0 0
        %2829 = vmatprep.mubr.bf16.mxu0 0
        %2830 = vmatmul.mubr.bf16.gmra.mxu0 %v2750
        %v2831 = vpop.f32.mrf.mxu0
        %v2832 = vadd.f32 0.0, %v2831
        %v2833 = vpop.f32.mrf.mxu0
        %v2834 = vpop.f32.mrf.mxu0
        %v2835 = vadd.f32 0.0, %v2834
        %v2836 = vpop.f32.mrf.mxu0
        %2837 = vmatprep.mubr.bf16.mxu0 0
        %2838 = vmatmul.mubr.bf16.gmra.mxu0 %v2753
        %v2839 = vpop.f32.mrf.mxu0
        %v2840 = vadd.f32 0.0, %v2839
        %v2841 = vpop.f32.mrf.mxu0
        %v2842 = vpop.f32.mrf.mxu0
        %v2843 = vadd.f32 0.0, %v2842
        %v2844 = vpop.f32.mrf.mxu0
        %2845 = vmatprep.mubr.bf16.mxu0 0
        %2846 = vmatmul.mubr.bf16.gmra.mxu0 %v2756
        %v2847 = vpop.f32.mrf.mxu0
        %v2848 = vadd.f32 0.0, %v2847
        %v2849 = vpop.f32.mrf.mxu0
        %v2850 = vpop.f32.mrf.mxu0
        %v2851 = vadd.f32 0.0, %v2850
        %v2852 = vpop.f32.mrf.mxu0
        %2853 = vmatprep.mubr.bf16.mxu0 0
        %2854 = vmatmul.mubr.bf16.gmra.mxu0 %v2759
        %v2855 = vpop.f32.mrf.mxu0
        %v2856 = vadd.f32 0.0, %v2855
        %v2857 = vpop.f32.mrf.mxu0
        %v2858 = vpop.f32.mrf.mxu0
        %v2859 = vadd.f32 0.0, %v2858
        %v2860 = vpop.f32.mrf.mxu0
        %2861 = vmatprep.mubr.bf16.mxu0 0
        %2862 = vmatmul.mubr.bf16.gmra.mxu0 %v2762
        %v2863 = vpop.f32.mrf.mxu0
        %v2864 = vadd.f32 0.0, %v2863
        %v2865 = vpop.f32.mrf.mxu0
        %v2866 = vpop.f32.mrf.mxu0
        %v2867 = vadd.f32 0.0, %v2866
        %v2868 = vpop.f32.mrf.mxu0
        %2869 = vmatprep.mubr.bf16.mxu0 0
        %2870 = vmatmul.mubr.bf16.gmra.mxu0 %v2765
        %v2871 = vpop.f32.mrf.mxu0
        %v2872 = vadd.f32 0.0, %v2871
        %v2873 = vpop.f32.mrf.mxu0
        %v2874 = vpop.f32.mrf.mxu0
        %v2875 = vadd.f32 0.0, %v2874
        %v2876 = vpop.f32.mrf.mxu0
        %2877 = vmatprep.mubr.bf16.mxu0 0
        %2878 = vmatmul.mubr.bf16.gmra.mxu0 %v2768
        %v2879 = vpop.f32.mrf.mxu0
        %v2880 = vadd.f32 0.0, %v2879
        %v2881 = vpop.f32.mrf.mxu0
        %v2882 = vpop.f32.mrf.mxu0
        %v2883 = vadd.f32 0.0, %v2882
        %v2884 = vpop.f32.mrf.mxu0
        %2885 = vmatprep.mubr.bf16.mxu0 0
        %2886 = vmatmul.mubr.bf16.gmra.mxu0 %v2771
        %v2887 = vpop.f32.mrf.mxu0
        %v2888 = vadd.f32 0.0, %v2887
        %v2889 = vpop.f32.mrf.mxu0
        %v2890 = vpop.f32.mrf.mxu0
        %v2891 = vadd.f32 0.0, %v2890
        %v2892 = vpop.f32.mrf.mxu0
        %2893 = vmatprep.mubr.bf16.mxu0 0
        %2894 = vmatmul.mubr.bf16.gmra.mxu0 %v2774
        %v2895 = vpop.f32.mrf.mxu0
        %v2896 = vadd.f32 0.0, %v2895
        %v2897 = vpop.f32.mrf.mxu0
        %v2898 = vpop.f32.mrf.mxu0
        %v2899 = vadd.f32 0.0, %v2898
        %v2900 = vpop.f32.mrf.mxu0
        %2901 = vmatprep.mubr.bf16.mxu0 0
        %2902 = vmatmul.mubr.bf16.gmra.mxu0 %v2777
        %v2903 = vpop.f32.mrf.mxu0
        %v2904 = vadd.f32 0.0, %v2903
        %v2905 = vpop.f32.mrf.mxu0
        %v2906 = vpop.f32.mrf.mxu0
        %v2907 = vadd.f32 0.0, %v2906
        %v2908 = vpop.f32.mrf.mxu0
        %2909 = vmatprep.mubr.bf16.mxu0 0
        %2910 = vmatmul.mubr.bf16.gmra.mxu0 %v2780
        %v2911 = vpop.f32.mrf.mxu0
        %v2912 = vadd.f32 0.0, %v2911
        %v2913 = vpop.f32.mrf.mxu0
        %v2914 = vpop.f32.mrf.mxu0
        %v2915 = vadd.f32 0.0, %v2914
        %v2916 = vpop.f32.mrf.mxu0
        %2917 = vmatprep.mubr.bf16.mxu0 0
        %2918 = vmatmul.mubr.bf16.gmra.mxu0 %v2783
        %v2919 = vpop.f32.mrf.mxu0
        %v2920 = vadd.f32 0.0, %v2919
        %v2921 = vpop.f32.mrf.mxu0
        %v2922 = vpop.f32.mrf.mxu0
        %v2923 = vadd.f32 0.0, %v2922
        %v2924 = vpop.f32.mrf.mxu0
        %2925 = vmatprep.mubr.bf16.mxu0 0
        %2926 = vmatmul.mubr.bf16.gmra.mxu0 %v2786
        %v2927 = vpop.f32.mrf.mxu0
        %v2928 = vadd.f32 0.0, %v2927
        %v2929 = vpop.f32.mrf.mxu0
        %v2930 = vpop.f32.mrf.mxu0
        %v2931 = vadd.f32 0.0, %v2930
        %v2932 = vpop.f32.mrf.mxu0
        %2933 = vmatprep.mubr.bf16.mxu0 0
        %2934 = vmatmul.mubr.bf16.gmra.mxu0 %v2789
        %v2935 = vpop.f32.mrf.mxu0
        %v2936 = vadd.f32 0.0, %v2935
        %v2937 = vpop.f32.mrf.mxu0
        %v2938 = vpop.f32.mrf.mxu0
        %v2939 = vadd.f32 0.0, %v2938
        %v2940 = vpop.f32.mrf.mxu0
        %2941 = vmatprep.mubr.bf16.mxu0 0
        %2942 = vmatmul.mubr.bf16.gmra.mxu0 %v2792
        %v2943 = vpop.f32.mrf.mxu0
        %v2944 = vadd.f32 0.0, %v2943
        %v2945 = vpop.f32.mrf.mxu0
        %v2946 = vpop.f32.mrf.mxu0
        %v2947 = vadd.f32 0.0, %v2946
        %v2948 = vpop.f32.mrf.mxu0
        %2949 = vmatprep.mubr.bf16.mxu0 0
        %2950 = vmatmul.mubr.bf16.gmra.mxu0 %v2795
        %v2951 = vpop.f32.mrf.mxu0
        %v2952 = vadd.f32 0.0, %v2951
        %v2953 = vpop.f32.mrf.mxu0
        %v2954 = vpop.f32.mrf.mxu0
        %v2955 = vadd.f32 0.0, %v2954
        %v2956 = vpop.f32.mrf.mxu0
        %2957 = vdwg.mxu0
        %v2958 = vpack.c.bf16 %v2835, %v2832
        %v2959 = vpack.c.bf16 %v2843, %v2840
        %v2960 = vpack.c.bf16 %v2851, %v2848
        %v2961 = vpack.c.bf16 %v2859, %v2856
        %v2962 = vpack.c.bf16 %v2867, %v2864
        %v2963 = vpack.c.bf16 %v2875, %v2872
        %v2964 = vpack.c.bf16 %v2883, %v2880
        %v2965 = vpack.c.bf16 %v2891, %v2888
        %v2966 = vpack.c.bf16 %v2899, %v2896
        %v2967 = vpack.c.bf16 %v2907, %v2904
        %v2968 = vpack.c.bf16 %v2915, %v2912
        %v2969 = vpack.c.bf16 %v2923, %v2920
        %v2970 = vpack.c.bf16 %v2931, %v2928
        %v2971 = vpack.c.bf16 %v2939, %v2936
        %v2972 = vpack.c.bf16 %v2947, %v2944
        %v2973 = vpack.c.bf16 %v2955, %v2952
        %v2974 = vld [vmem:[%s15] sm:$0x1]
        %v2976 = vpack.i.b16 %v2974, %v2974
        %v2978 = vlaneseq
        %v2979 = vshrl.u32 %v2978, 7
        %v2980 = vsub.s32 0, %v2979
        %v2981 = vrot.slane %v2976, %v2980
        %v2982 = vadd.bf16 %v2958, %v2981
        %v2983 = vadd.bf16 %v2959, %v2981
        %v2984 = vadd.bf16 %v2960, %v2981
        %v2985 = vadd.bf16 %v2961, %v2981
        %v2986 = vadd.bf16 %v2962, %v2981
        %v2987 = vadd.bf16 %v2963, %v2981
        %v2988 = vadd.bf16 %v2964, %v2981
        %v2989 = vadd.bf16 %v2965, %v2981
        %v2990 = vadd.bf16 %v2966, %v2981
        %v2991 = vadd.bf16 %v2967, %v2981
        %v2992 = vadd.bf16 %v2968, %v2981
        %v2993 = vadd.bf16 %v2969, %v2981
        %v2994 = vadd.bf16 %v2970, %v2981
        %v2995 = vadd.bf16 %v2971, %v2981
        %v2996 = vadd.bf16 %v2972, %v2981
        %v2997 = vadd.bf16 %v2973, %v2981
        %v2998 = vmul.bf16 %v2982, 1045249613
        %v2999 = vmul.bf16 %v2983, 1045249613
        %v3000 = vmul.bf16 %v2984, 1045249613
        %v3001 = vmul.bf16 %v2985, 1045249613
        %v3002 = vmul.bf16 %v2986, 1045249613
        %v3003 = vmul.bf16 %v2987, 1045249613
        %v3004 = vmul.bf16 %v2988, 1045249613
        %v3005 = vmul.bf16 %v2989, 1045249613
        %v3006 = vmul.bf16 %v2990, 1045249613
        %v3007 = vmul.bf16 %v2991, 1045249613
        %v3008 = vmul.bf16 %v2992, 1045249613
        %v3009 = vmul.bf16 %v2993, 1045249613
        %v3010 = vmul.bf16 %v2994, 1045249613
        %v3011 = vmul.bf16 %v2995, 1045249613
        %v3012 = vmul.bf16 %v2996, 1045249613
        %v3013 = vmul.bf16 %v2997, 1045249613
        %v3014 = vmax.bf16 %v2982, %v2998
        %v3015 = vmax.bf16 %v2983, %v2999
        %v3016 = vmax.bf16 %v2984, %v3000
        %v3017 = vmax.bf16 %v2985, %v3001
        %v3018 = vmax.bf16 %v2986, %v3002
        %v3019 = vmax.bf16 %v2987, %v3003
        %v3020 = vmax.bf16 %v2988, %v3004
        %v3021 = vmax.bf16 %v2989, %v3005
        %v3022 = vmax.bf16 %v2990, %v3006
        %v3023 = vmax.bf16 %v2991, %v3007
        %v3024 = vmax.bf16 %v2992, %v3008
        %v3025 = vmax.bf16 %v2993, %v3009
        %v3026 = vmax.bf16 %v2994, %v3010
        %v3027 = vmax.bf16 %v2995, %v3011
        %v3028 = vmax.bf16 %v2996, %v3012
        %v3029 = vmax.bf16 %v2997, %v3013
        %v3030 = vld [vmem:[%s16] sm:$0xf]
        %v3031 = vld [vmem:[%s16 + $0x4] sm:$0xf]
        %v3032 = vld [vmem:[%s16 + $0x8] sm:$0xf]
        %v3033 = vld [vmem:[%s16 + $0xc] sm:$0xf]
        %v3034 = vld [vmem:[%s16 + $0x10] sm:$0xf]
        %v3035 = vld [vmem:[%s16 + $0x14] sm:$0xf]
        %v3036 = vld [vmem:[%s16 + $0x18] sm:$0xf]
        %v3037 = vld [vmem:[%s16 + $0x1c] sm:$0xf]
        %v3038 = vld [vmem:[%s16 + $0x20] sm:$0xf]
        %v3039 = vld [vmem:[%s16 + $0x24] sm:$0xf]
        %v3040 = vld [vmem:[%s16 + $0x28] sm:$0xf]
        %v3041 = vld [vmem:[%s16 + $0x2c] sm:$0xf]
        %v3042 = vld [vmem:[%s16 + $0x30] sm:$0xf]
        %v3043 = vld [vmem:[%s16 + $0x34] sm:$0xf]
        %v3044 = vld [vmem:[%s16 + $0x38] sm:$0xf]
        %v3045 = vld [vmem:[%s16 + $0x3c] sm:$0xf]
        %v3062 = vunpack.c.l.b16 %v3030
        %v3063 = vunpack.c.l.b16 %v3031
        %v3064 = vunpack.c.l.b16 %v3032
        %v3065 = vunpack.c.l.b16 %v3033
        %v3066 = vunpack.c.l.b16 %v3034
        %v3067 = vunpack.c.l.b16 %v3035
        %v3068 = vunpack.c.l.b16 %v3036
        %v3069 = vunpack.c.l.b16 %v3037
        %v3070 = vunpack.c.l.b16 %v3038
        %v3071 = vunpack.c.l.b16 %v3039
        %v3072 = vunpack.c.l.b16 %v3040
        %v3073 = vunpack.c.l.b16 %v3041
        %v3074 = vunpack.c.l.b16 %v3042
        %v3075 = vunpack.c.l.b16 %v3043
        %v3076 = vunpack.c.l.b16 %v3044
        %v3077 = vunpack.c.l.b16 %v3045
        %v3078 = vpack.c.b16 %v3063, %v3062
        %v3079 = vpack.c.b16 %v3065, %v3064
        %v3080 = vpack.c.b16 %v3067, %v3066
        %v3081 = vpack.c.b16 %v3069, %v3068
        %v3082 = vpack.c.b16 %v3071, %v3070
        %v3083 = vpack.c.b16 %v3073, %v3072
        %v3084 = vpack.c.b16 %v3075, %v3074
        %v3085 = vpack.c.b16 %v3077, %v3076
        %3094 = vmatprep.subr.bf16.mxu0 0
        %3095 = vmatpush1.bf16.msra.mxu0 %v3085
        %3096 = vmatprep.subr.bf16.mxu0 0
        %3097 = vmatpush1.bf16.msra.mxu0 %v3084
        %3098 = vmatprep.subr.bf16.mxu0 0
        %3099 = vmatpush1.bf16.msra.mxu0 %v3083
        %3100 = vmatprep.subr.bf16.mxu0 0
        %3101 = vmatpush1.bf16.msra.mxu0 %v3082
        %3102 = vmatprep.subr.bf16.mxu0 0
        %3103 = vmatpush1.bf16.msra.mxu0 %v3081
        %3104 = vmatprep.subr.bf16.mxu0 0
        %3105 = vmatpush1.bf16.msra.mxu0 %v3080
        %3106 = vmatprep.subr.bf16.mxu0 0
        %3107 = vmatpush1.bf16.msra.mxu0 %v3079
        %3108 = vmatprep.subr.bf16.mxu0 0
        %3109 = vmatpush1.bf16.msra.mxu0 %v3078
        %3110 = vmatprep.subr.bf16.mxu0 0
        %3111 = vmatpush2.bf16.msra.mxu0 0
        %3112 = vmatprep.subr.bf16.mxu0 0
        %3113 = vmatpush2.bf16.msra.mxu0 0
        %3114 = vmatprep.subr.bf16.mxu0 0
        %3115 = vmatpush2.bf16.msra.mxu0 0
        %3116 = vmatprep.subr.bf16.mxu0 0
        %3117 = vmatpush2.bf16.msra.mxu0 0
        %3118 = vmatprep.subr.bf16.mxu0 0
        %3119 = vmatpush2.bf16.msra.mxu0 0
        %3120 = vmatprep.subr.bf16.mxu0 0
        %3121 = vmatpush2.bf16.msra.mxu0 0
        %3122 = vmatprep.subr.bf16.mxu0 0
        %3123 = vmatpush2.bf16.msra.mxu0 0
        %3124 = vmatprep.subr.bf16.mxu0 0
        %3125 = vmatpush2.bf16.msra.mxu0 0
        %3126 = vmatprep.mubr.bf16.mxu0 0
        %3127 = vmatmul.mubr.bf16.gmra.mxu0 %v3014
        %v3128 = vpop.f32.mrf.mxu0
        %v3129 = vadd.f32 0.0, %v3128
        %v3130 = vpop.f32.mrf.mxu0
        %v3131 = vpop.f32.mrf.mxu0
        %v3132 = vadd.f32 0.0, %v3131
        %v3133 = vpop.f32.mrf.mxu0
        %3134 = vmatprep.mubr.bf16.mxu0 0
        %3135 = vmatmul.mubr.bf16.gmra.mxu0 %v3015
        %v3136 = vpop.f32.mrf.mxu0
        %v3137 = vadd.f32 0.0, %v3136
        %v3138 = vpop.f32.mrf.mxu0
        %v3139 = vpop.f32.mrf.mxu0
        %v3140 = vadd.f32 0.0, %v3139
        %v3141 = vpop.f32.mrf.mxu0
        %3142 = vmatprep.mubr.bf16.mxu0 0
        %3143 = vmatmul.mubr.bf16.gmra.mxu0 %v3016
        %v3144 = vpop.f32.mrf.mxu0
        %v3145 = vadd.f32 0.0, %v3144
        %v3146 = vpop.f32.mrf.mxu0
        %v3147 = vpop.f32.mrf.mxu0
        %v3148 = vadd.f32 0.0, %v3147
        %v3149 = vpop.f32.mrf.mxu0
        %3150 = vmatprep.mubr.bf16.mxu0 0
        %3151 = vmatmul.mubr.bf16.gmra.mxu0 %v3017
        %v3152 = vpop.f32.mrf.mxu0
        %v3153 = vadd.f32 0.0, %v3152
        %v3154 = vpop.f32.mrf.mxu0
        %v3155 = vpop.f32.mrf.mxu0
        %v3156 = vadd.f32 0.0, %v3155
        %v3157 = vpop.f32.mrf.mxu0
        %3158 = vmatprep.mubr.bf16.mxu0 0
        %3159 = vmatmul.mubr.bf16.gmra.mxu0 %v3018
        %v3160 = vpop.f32.mrf.mxu0
        %v3161 = vadd.f32 0.0, %v3160
        %v3162 = vpop.f32.mrf.mxu0
        %v3163 = vpop.f32.mrf.mxu0
        %v3164 = vadd.f32 0.0, %v3163
        %v3165 = vpop.f32.mrf.mxu0
        %3166 = vmatprep.mubr.bf16.mxu0 0
        %3167 = vmatmul.mubr.bf16.gmra.mxu0 %v3019
        %v3168 = vpop.f32.mrf.mxu0
        %v3169 = vadd.f32 0.0, %v3168
        %v3170 = vpop.f32.mrf.mxu0
        %v3171 = vpop.f32.mrf.mxu0
        %v3172 = vadd.f32 0.0, %v3171
        %v3173 = vpop.f32.mrf.mxu0
        %3174 = vmatprep.mubr.bf16.mxu0 0
        %3175 = vmatmul.mubr.bf16.gmra.mxu0 %v3020
        %v3176 = vpop.f32.mrf.mxu0
        %v3177 = vadd.f32 0.0, %v3176
        %v3178 = vpop.f32.mrf.mxu0
        %v3179 = vpop.f32.mrf.mxu0
        %v3180 = vadd.f32 0.0, %v3179
        %v3181 = vpop.f32.mrf.mxu0
        %3182 = vmatprep.mubr.bf16.mxu0 0
        %3183 = vmatmul.mubr.bf16.gmra.mxu0 %v3021
        %v3184 = vpop.f32.mrf.mxu0
        %v3185 = vadd.f32 0.0, %v3184
        %v3186 = vpop.f32.mrf.mxu0
        %v3187 = vpop.f32.mrf.mxu0
        %v3188 = vadd.f32 0.0, %v3187
        %v3189 = vpop.f32.mrf.mxu0
        %3190 = vmatprep.mubr.bf16.mxu0 0
        %3191 = vmatmul.mubr.bf16.gmra.mxu0 %v3022
        %v3192 = vpop.f32.mrf.mxu0
        %v3193 = vadd.f32 0.0, %v3192
        %v3194 = vpop.f32.mrf.mxu0
        %v3195 = vpop.f32.mrf.mxu0
        %v3196 = vadd.f32 0.0, %v3195
        %v3197 = vpop.f32.mrf.mxu0
        %3198 = vmatprep.mubr.bf16.mxu0 0
        %3199 = vmatmul.mubr.bf16.gmra.mxu0 %v3023
        %v3200 = vpop.f32.mrf.mxu0
        %v3201 = vadd.f32 0.0, %v3200
        %v3202 = vpop.f32.mrf.mxu0
        %v3203 = vpop.f32.mrf.mxu0
        %v3204 = vadd.f32 0.0, %v3203
        %v3205 = vpop.f32.mrf.mxu0
        %3206 = vmatprep.mubr.bf16.mxu0 0
        %3207 = vmatmul.mubr.bf16.gmra.mxu0 %v3024
        %v3208 = vpop.f32.mrf.mxu0
        %v3209 = vadd.f32 0.0, %v3208
        %v3210 = vpop.f32.mrf.mxu0
        %v3211 = vpop.f32.mrf.mxu0
        %v3212 = vadd.f32 0.0, %v3211
        %v3213 = vpop.f32.mrf.mxu0
        %3214 = vmatprep.mubr.bf16.mxu0 0
        %3215 = vmatmul.mubr.bf16.gmra.mxu0 %v3025
        %v3216 = vpop.f32.mrf.mxu0
        %v3217 = vadd.f32 0.0, %v3216
        %v3218 = vpop.f32.mrf.mxu0
        %v3219 = vpop.f32.mrf.mxu0
        %v3220 = vadd.f32 0.0, %v3219
        %v3221 = vpop.f32.mrf.mxu0
        %3222 = vmatprep.mubr.bf16.mxu0 0
        %3223 = vmatmul.mubr.bf16.gmra.mxu0 %v3026
        %v3224 = vpop.f32.mrf.mxu0
        %v3225 = vadd.f32 0.0, %v3224
        %v3226 = vpop.f32.mrf.mxu0
        %v3227 = vpop.f32.mrf.mxu0
        %v3228 = vadd.f32 0.0, %v3227
        %v3229 = vpop.f32.mrf.mxu0
        %3230 = vmatprep.mubr.bf16.mxu0 0
        %3231 = vmatmul.mubr.bf16.gmra.mxu0 %v3027
        %v3232 = vpop.f32.mrf.mxu0
        %v3233 = vadd.f32 0.0, %v3232
        %v3234 = vpop.f32.mrf.mxu0
        %v3235 = vpop.f32.mrf.mxu0
        %v3236 = vadd.f32 0.0, %v3235
        %v3237 = vpop.f32.mrf.mxu0
        %3238 = vmatprep.mubr.bf16.mxu0 0
        %3239 = vmatmul.mubr.bf16.gmra.mxu0 %v3028
        %v3240 = vpop.f32.mrf.mxu0
        %v3241 = vadd.f32 0.0, %v3240
        %v3242 = vpop.f32.mrf.mxu0
        %v3243 = vpop.f32.mrf.mxu0
        %v3244 = vadd.f32 0.0, %v3243
        %v3245 = vpop.f32.mrf.mxu0
        %3246 = vmatprep.mubr.bf16.mxu0 0
        %3247 = vmatmul.mubr.bf16.gmra.mxu0 %v3029
        %v3248 = vpop.f32.mrf.mxu0
        %v3249 = vadd.f32 0.0, %v3248
        %v3250 = vpop.f32.mrf.mxu0
        %v3251 = vpop.f32.mrf.mxu0
        %v3252 = vadd.f32 0.0, %v3251
        %v3253 = vpop.f32.mrf.mxu0
        %3254 = vdwg.mxu0
        %v3255 = vpack.c.bf16 %v3132, %v3129
        %v3256 = vpack.c.bf16 %v3140, %v3137
        %v3257 = vpack.c.bf16 %v3148, %v3145
        %v3258 = vpack.c.bf16 %v3156, %v3153
        %v3259 = vpack.c.bf16 %v3164, %v3161
        %v3260 = vpack.c.bf16 %v3172, %v3169
        %v3261 = vpack.c.bf16 %v3180, %v3177
        %v3262 = vpack.c.bf16 %v3188, %v3185
        %v3263 = vpack.c.bf16 %v3196, %v3193
        %v3264 = vpack.c.bf16 %v3204, %v3201
        %v3265 = vpack.c.bf16 %v3212, %v3209
        %v3266 = vpack.c.bf16 %v3220, %v3217
        %v3267 = vpack.c.bf16 %v3228, %v3225
        %v3268 = vpack.c.bf16 %v3236, %v3233
        %v3269 = vpack.c.bf16 %v3244, %v3241
        %v3270 = vpack.c.bf16 %v3252, %v3249
        %v3271 = vld [vmem:[%s17] sm:$0x1]
        %v3273 = vpack.i.b16 %v3271, %v3271
        %v3275 = vlaneseq
        %v3276 = vshrl.u32 %v3275, 7
        %v3277 = vsub.s32 0, %v3276
        %v3278 = vrot.slane %v3273, %v3277
        %v3279 = vadd.bf16 %v3255, %v3278
        %v3280 = vadd.bf16 %v3256, %v3278
        %v3281 = vadd.bf16 %v3257, %v3278
        %v3282 = vadd.bf16 %v3258, %v3278
        %v3283 = vadd.bf16 %v3259, %v3278
        %v3284 = vadd.bf16 %v3260, %v3278
        %v3285 = vadd.bf16 %v3261, %v3278
        %v3286 = vadd.bf16 %v3262, %v3278
        %v3287 = vadd.bf16 %v3263, %v3278
        %v3288 = vadd.bf16 %v3264, %v3278
        %v3289 = vadd.bf16 %v3265, %v3278
        %v3290 = vadd.bf16 %v3266, %v3278
        %v3291 = vadd.bf16 %v3267, %v3278
        %v3292 = vadd.bf16 %v3268, %v3278
        %v3293 = vadd.bf16 %v3269, %v3278
        %v3294 = vadd.bf16 %v3270, %v3278
        %v3295 = vmul.bf16 %v3279, 1045249613
        %v3296 = vmul.bf16 %v3280, 1045249613
        %v3297 = vmul.bf16 %v3281, 1045249613
        %v3298 = vmul.bf16 %v3282, 1045249613
        %v3299 = vmul.bf16 %v3283, 1045249613
        %v3300 = vmul.bf16 %v3284, 1045249613
        %v3301 = vmul.bf16 %v3285, 1045249613
        %v3302 = vmul.bf16 %v3286, 1045249613
        %v3303 = vmul.bf16 %v3287, 1045249613
        %v3304 = vmul.bf16 %v3288, 1045249613
        %v3305 = vmul.bf16 %v3289, 1045249613
        %v3306 = vmul.bf16 %v3290, 1045249613
        %v3307 = vmul.bf16 %v3291, 1045249613
        %v3308 = vmul.bf16 %v3292, 1045249613
        %v3309 = vmul.bf16 %v3293, 1045249613
        %v3310 = vmul.bf16 %v3294, 1045249613
        %v3311 = vmax.bf16 %v3279, %v3295
        %v3312 = vmax.bf16 %v3280, %v3296
        %v3313 = vmax.bf16 %v3281, %v3297
        %v3314 = vmax.bf16 %v3282, %v3298
        %v3315 = vmax.bf16 %v3283, %v3299
        %v3316 = vmax.bf16 %v3284, %v3300
        %v3317 = vmax.bf16 %v3285, %v3301
        %v3318 = vmax.bf16 %v3286, %v3302
        %v3319 = vmax.bf16 %v3287, %v3303
        %v3320 = vmax.bf16 %v3288, %v3304
        %v3321 = vmax.bf16 %v3289, %v3305
        %v3322 = vmax.bf16 %v3290, %v3306
        %v3323 = vmax.bf16 %v3291, %v3307
        %v3324 = vmax.bf16 %v3292, %v3308
        %v3325 = vmax.bf16 %v3293, %v3309
        %v3326 = vmax.bf16 %v3294, %v3310
        %v3327 = vunpack.c.l.bf16 %v3311
        %v3328 = vunpack.c.h.bf16 %v3311
        %v3329 = vunpack.c.l.bf16 %v3312
        %v3330 = vunpack.c.h.bf16 %v3312
        %v3331 = vunpack.c.l.bf16 %v3313
        %v3332 = vunpack.c.h.bf16 %v3313
        %v3333 = vunpack.c.l.bf16 %v3314
        %v3334 = vunpack.c.h.bf16 %v3314
        %v3335 = vunpack.c.l.bf16 %v3315
        %v3336 = vunpack.c.h.bf16 %v3315
        %v3337 = vunpack.c.l.bf16 %v3316
        %v3338 = vunpack.c.h.bf16 %v3316
        %v3339 = vunpack.c.l.bf16 %v3317
        %v3340 = vunpack.c.h.bf16 %v3317
        %v3341 = vunpack.c.l.bf16 %v3318
        %v3342 = vunpack.c.h.bf16 %v3318
        %v3343 = vunpack.c.l.bf16 %v3319
        %v3344 = vunpack.c.h.bf16 %v3319
        %v3345 = vunpack.c.l.bf16 %v3320
        %v3346 = vunpack.c.h.bf16 %v3320
        %v3347 = vunpack.c.l.bf16 %v3321
        %v3348 = vunpack.c.h.bf16 %v3321
        %v3349 = vunpack.c.l.bf16 %v3322
        %v3350 = vunpack.c.h.bf16 %v3322
        %v3351 = vunpack.c.l.bf16 %v3323
        %v3352 = vunpack.c.h.bf16 %v3323
        %v3353 = vunpack.c.l.bf16 %v3324
        %v3354 = vunpack.c.h.bf16 %v3324
        %v3355 = vunpack.c.l.bf16 %v3325
        %v3356 = vunpack.c.h.bf16 %v3325
        %v3357 = vunpack.c.l.bf16 %v3326
        %v3358 = vunpack.c.h.bf16 %v3326
        %v3359 = vld [vmem:[%s18] sm:$0x1]
        %v3361 = vlaneseq
        %v3362 = vshrl.u32 %v3361, 7
        %v3363 = vsub.s32 0, %v3362
        %v3364 = vrot.slane %v3359, %v3363
        %v3366 = vmul.f32 %v3327, %v3364
        %v3367 = vmul.f32 %v3328, %v3364
        %v3368 = vmul.f32 %v3329, %v3364
        %v3369 = vmul.f32 %v3330, %v3364
        %v3370 = vmul.f32 %v3331, %v3364
        %v3371 = vmul.f32 %v3332, %v3364
        %v3372 = vmul.f32 %v3333, %v3364
        %v3373 = vmul.f32 %v3334, %v3364
        %v3374 = vmul.f32 %v3335, %v3364
        %v3375 = vmul.f32 %v3336, %v3364
        %v3376 = vmul.f32 %v3337, %v3364
        %v3377 = vmul.f32 %v3338, %v3364
        %v3378 = vmul.f32 %v3339, %v3364
        %v3379 = vmul.f32 %v3340, %v3364
        %v3380 = vmul.f32 %v3341, %v3364
        %v3381 = vmul.f32 %v3342, %v3364
        %v3382 = vmul.f32 %v3343, %v3364
        %v3383 = vmul.f32 %v3344, %v3364
        %v3384 = vmul.f32 %v3345, %v3364
        %v3385 = vmul.f32 %v3346, %v3364
        %v3386 = vmul.f32 %v3347, %v3364
        %v3387 = vmul.f32 %v3348, %v3364
        %v3388 = vmul.f32 %v3349, %v3364
        %v3389 = vmul.f32 %v3350, %v3364
        %v3390 = vmul.f32 %v3351, %v3364
        %v3391 = vmul.f32 %v3352, %v3364
        %v3392 = vmul.f32 %v3353, %v3364
        %v3393 = vmul.f32 %v3354, %v3364
        %v3394 = vmul.f32 %v3355, %v3364
        %v3395 = vmul.f32 %v3356, %v3364
        %v3396 = vmul.f32 %v3357, %v3364
        %v3397 = vmul.f32 %v3358, %v3364
        %v3398 = vsel %vm1371, %v3366, 0.0
        %3399 = vadd.xlane.f32.xlu0 %v3398
        %v3400 = vpop.xlane.xlu0 %3399
        %v3401 = vsel %vm1371, %v3367, 0.0
        %3402 = vadd.xlane.f32.xlu0 %v3401
        %v3403 = vpop.xlane.xlu0 %3402
        %v3404 = vsel %vm1371, %v3368, 0.0
        %3405 = vadd.xlane.f32.xlu0 %v3404
        %v3406 = vpop.xlane.xlu0 %3405
        %v3407 = vsel %vm1371, %v3369, 0.0
        %3408 = vadd.xlane.f32.xlu0 %v3407
        %v3409 = vpop.xlane.xlu0 %3408
        %v3410 = vsel %vm1371, %v3370, 0.0
        %3411 = vadd.xlane.f32.xlu0 %v3410
        %v3412 = vpop.xlane.xlu0 %3411
        %v3413 = vsel %vm1371, %v3371, 0.0
        %3414 = vadd.xlane.f32.xlu0 %v3413
        %v3415 = vpop.xlane.xlu0 %3414
        %v3416 = vsel %vm1371, %v3372, 0.0
        %3417 = vadd.xlane.f32.xlu0 %v3416
        %v3418 = vpop.xlane.xlu0 %3417
        %v3419 = vsel %vm1371, %v3373, 0.0
        %3420 = vadd.xlane.f32.xlu0 %v3419
        %v3421 = vpop.xlane.xlu0 %3420
        %v3422 = vsel %vm1371, %v3374, 0.0
        %3423 = vadd.xlane.f32.xlu0 %v3422
        %v3424 = vpop.xlane.xlu0 %3423
        %v3425 = vsel %vm1371, %v3375, 0.0
        %3426 = vadd.xlane.f32.xlu0 %v3425
        %v3427 = vpop.xlane.xlu0 %3426
        %v3428 = vsel %vm1371, %v3376, 0.0
        %3429 = vadd.xlane.f32.xlu0 %v3428
        %v3430 = vpop.xlane.xlu0 %3429
        %v3431 = vsel %vm1371, %v3377, 0.0
        %3432 = vadd.xlane.f32.xlu0 %v3431
        %v3433 = vpop.xlane.xlu0 %3432
        %v3434 = vsel %vm1371, %v3378, 0.0
        %3435 = vadd.xlane.f32.xlu0 %v3434
        %v3436 = vpop.xlane.xlu0 %3435
        %v3437 = vsel %vm1371, %v3379, 0.0
        %3438 = vadd.xlane.f32.xlu0 %v3437
        %v3439 = vpop.xlane.xlu0 %3438
        %v3440 = vsel %vm1371, %v3380, 0.0
        %3441 = vadd.xlane.f32.xlu0 %v3440
        %v3442 = vpop.xlane.xlu0 %3441
        %v3443 = vsel %vm1371, %v3381, 0.0
        %3444 = vadd.xlane.f32.xlu0 %v3443
        %v3445 = vpop.xlane.xlu0 %3444
        %v3446 = vsel %vm1371, %v3382, 0.0
        %3447 = vadd.xlane.f32.xlu0 %v3446
        %v3448 = vpop.xlane.xlu0 %3447
        %v3449 = vsel %vm1371, %v3383, 0.0
        %3450 = vadd.xlane.f32.xlu0 %v3449
        %v3451 = vpop.xlane.xlu0 %3450
        %v3452 = vsel %vm1371, %v3384, 0.0
        %3453 = vadd.xlane.f32.xlu0 %v3452
        %v3454 = vpop.xlane.xlu0 %3453
        %v3455 = vsel %vm1371, %v3385, 0.0
        %3456 = vadd.xlane.f32.xlu0 %v3455
        %v3457 = vpop.xlane.xlu0 %3456
        %v3458 = vsel %vm1371, %v3386, 0.0
        %3459 = vadd.xlane.f32.xlu0 %v3458
        %v3460 = vpop.xlane.xlu0 %3459
        %v3461 = vsel %vm1371, %v3387, 0.0
        %3462 = vadd.xlane.f32.xlu0 %v3461
        %v3463 = vpop.xlane.xlu0 %3462
        %v3464 = vsel %vm1371, %v3388, 0.0
        %3465 = vadd.xlane.f32.xlu0 %v3464
        %v3466 = vpop.xlane.xlu0 %3465
        %v3467 = vsel %vm1371, %v3389, 0.0
        %3468 = vadd.xlane.f32.xlu0 %v3467
        %v3469 = vpop.xlane.xlu0 %3468
        %v3470 = vsel %vm1371, %v3390, 0.0
        %3471 = vadd.xlane.f32.xlu0 %v3470
        %v3472 = vpop.xlane.xlu0 %3471
        %v3473 = vsel %vm1371, %v3391, 0.0
        %3474 = vadd.xlane.f32.xlu0 %v3473
        %v3475 = vpop.xlane.xlu0 %3474
        %v3476 = vsel %vm1371, %v3392, 0.0
        %3477 = vadd.xlane.f32.xlu0 %v3476
        %v3478 = vpop.xlane.xlu0 %3477
        %v3479 = vsel %vm1371, %v3393, 0.0
        %3480 = vadd.xlane.f32.xlu0 %v3479
        %v3481 = vpop.xlane.xlu0 %3480
        %v3482 = vsel %vm1371, %v3394, 0.0
        %3483 = vadd.xlane.f32.xlu0 %v3482
        %v3484 = vpop.xlane.xlu0 %3483
        %v3485 = vsel %vm1371, %v3395, 0.0
        %3486 = vadd.xlane.f32.xlu0 %v3485
        %v3487 = vpop.xlane.xlu0 %3486
        %v3488 = vsel %vm1371, %v3396, 0.0
        %3489 = vadd.xlane.f32.xlu0 %v3488
        %v3490 = vpop.xlane.xlu0 %3489
        %v3491 = vsel %vm1371, %v3397, 0.0
        %3492 = vadd.xlane.f32.xlu0 %v3491
        %v3493 = vpop.xlane.xlu0 %3492
        %v3494 = vld [vmem:[#allocation2] sm:$0x1]
        %v3496 = vlaneseq
        %v3497 = vshrl.u32 %v3496, 7
        %v3498 = vsub.s32 0, %v3497
        %v3499 = vrot.slane %v3494, %v3498
        %v3501 = vadd.f32 %v3400, %v3499
        %v3502 = vadd.f32 %v3403, %v3499
        %v3503 = vadd.f32 %v3406, %v3499
        %v3504 = vadd.f32 %v3409, %v3499
        %v3505 = vadd.f32 %v3412, %v3499
        %v3506 = vadd.f32 %v3415, %v3499
        %v3507 = vadd.f32 %v3418, %v3499
        %v3508 = vadd.f32 %v3421, %v3499
        %v3509 = vadd.f32 %v3424, %v3499
        %v3510 = vadd.f32 %v3427, %v3499
        %v3511 = vadd.f32 %v3430, %v3499
        %v3512 = vadd.f32 %v3433, %v3499
        %v3513 = vadd.f32 %v3436, %v3499
        %v3514 = vadd.f32 %v3439, %v3499
        %v3515 = vadd.f32 %v3442, %v3499
        %v3516 = vadd.f32 %v3445, %v3499
        %v3517 = vadd.f32 %v3448, %v3499
        %v3518 = vadd.f32 %v3451, %v3499
        %v3519 = vadd.f32 %v3454, %v3499
        %v3520 = vadd.f32 %v3457, %v3499
        %v3521 = vadd.f32 %v3460, %v3499
        %v3522 = vadd.f32 %v3463, %v3499
        %v3523 = vadd.f32 %v3466, %v3499
        %v3524 = vadd.f32 %v3469, %v3499
        %v3525 = vadd.f32 %v3472, %v3499
        %v3526 = vadd.f32 %v3475, %v3499
        %v3527 = vadd.f32 %v3478, %v3499
        %v3528 = vadd.f32 %v3481, %v3499
        %v3529 = vadd.f32 %v3484, %v3499
        %v3530 = vadd.f32 %v3487, %v3499
        %v3531 = vadd.f32 %v3490, %v3499
        %v3532 = vadd.f32 %v3493, %v3499
        %v3533 = vxor.u32 %v3501, 2147483648
        %v3534 = vxor.u32 %v3502, 2147483648
        %v3535 = vxor.u32 %v3503, 2147483648
        %v3536 = vxor.u32 %v3504, 2147483648
        %v3537 = vxor.u32 %v3505, 2147483648
        %v3538 = vxor.u32 %v3506, 2147483648
        %v3539 = vxor.u32 %v3507, 2147483648
        %v3540 = vxor.u32 %v3508, 2147483648
        %v3541 = vxor.u32 %v3509, 2147483648
        %v3542 = vxor.u32 %v3510, 2147483648
        %v3543 = vxor.u32 %v3511, 2147483648
        %v3544 = vxor.u32 %v3512, 2147483648
        %v3545 = vxor.u32 %v3513, 2147483648
        %v3546 = vxor.u32 %v3514, 2147483648
        %v3547 = vxor.u32 %v3515, 2147483648
        %v3548 = vxor.u32 %v3516, 2147483648
        %v3549 = vxor.u32 %v3517, 2147483648
        %v3550 = vxor.u32 %v3518, 2147483648
        %v3551 = vxor.u32 %v3519, 2147483648
        %v3552 = vxor.u32 %v3520, 2147483648
        %v3553 = vxor.u32 %v3521, 2147483648
        %v3554 = vxor.u32 %v3522, 2147483648
        %v3555 = vxor.u32 %v3523, 2147483648
        %v3556 = vxor.u32 %v3524, 2147483648
        %v3557 = vxor.u32 %v3525, 2147483648
        %v3558 = vxor.u32 %v3526, 2147483648
        %v3559 = vxor.u32 %v3527, 2147483648
        %v3560 = vxor.u32 %v3528, 2147483648
        %v3561 = vxor.u32 %v3529, 2147483648
        %v3562 = vxor.u32 %v3530, 2147483648
        %v3563 = vxor.u32 %v3531, 2147483648
        %v3564 = vxor.u32 %v3532, 2147483648
        %v3565 = vmul.f32 %v3533, 1.442695
        %v3566 = vpow.pop %v3565
        %v3567 = vmul.f32 %v3534, 1.442695
        %v3568 = vpow.pop %v3567
        %v3569 = vmul.f32 %v3535, 1.442695
        %v3570 = vpow.pop %v3569
        %v3571 = vmul.f32 %v3536, 1.442695
        %v3572 = vpow.pop %v3571
        %v3573 = vmul.f32 %v3537, 1.442695
        %v3574 = vpow.pop %v3573
        %v3575 = vmul.f32 %v3538, 1.442695
        %v3576 = vpow.pop %v3575
        %v3577 = vmul.f32 %v3539, 1.442695
        %v3578 = vpow.pop %v3577
        %v3579 = vmul.f32 %v3540, 1.442695
        %v3580 = vpow.pop %v3579
        %v3581 = vmul.f32 %v3541, 1.442695
        %v3582 = vpow.pop %v3581
        %v3583 = vmul.f32 %v3542, 1.442695
        %v3584 = vpow.pop %v3583
        %v3585 = vmul.f32 %v3543, 1.442695
        %v3586 = vpow.pop %v3585
        %v3587 = vmul.f32 %v3544, 1.442695
        %v3588 = vpow.pop %v3587
        %v3589 = vmul.f32 %v3545, 1.442695
        %v3590 = vpow.pop %v3589
        %v3591 = vmul.f32 %v3546, 1.442695
        %v3592 = vpow.pop %v3591
        %v3593 = vmul.f32 %v3547, 1.442695
        %v3594 = vpow.pop %v3593
        %v3595 = vmul.f32 %v3548, 1.442695
        %v3596 = vpow.pop %v3595
        %v3597 = vmul.f32 %v3549, 1.442695
        %v3598 = vpow.pop %v3597
        %v3599 = vmul.f32 %v3550, 1.442695
        %v3600 = vpow.pop %v3599
        %v3601 = vmul.f32 %v3551, 1.442695
        %v3602 = vpow.pop %v3601
        %v3603 = vmul.f32 %v3552, 1.442695
        %v3604 = vpow.pop %v3603
        %v3605 = vmul.f32 %v3553, 1.442695
        %v3606 = vpow.pop %v3605
        %v3607 = vmul.f32 %v3554, 1.442695
        %v3608 = vpow.pop %v3607
        %v3609 = vmul.f32 %v3555, 1.442695
        %v3610 = vpow.pop %v3609
        %v3611 = vmul.f32 %v3556, 1.442695
        %v3612 = vpow.pop %v3611
        %v3613 = vmul.f32 %v3557, 1.442695
        %v3614 = vpow.pop %v3613
        %v3615 = vmul.f32 %v3558, 1.442695
        %v3616 = vpow.pop %v3615
        %v3617 = vmul.f32 %v3559, 1.442695
        %v3618 = vpow.pop %v3617
        %v3619 = vmul.f32 %v3560, 1.442695
        %v3620 = vpow.pop %v3619
        %v3621 = vmul.f32 %v3561, 1.442695
        %v3622 = vpow.pop %v3621
        %v3623 = vmul.f32 %v3562, 1.442695
        %v3624 = vpow.pop %v3623
        %v3625 = vmul.f32 %v3563, 1.442695
        %v3626 = vpow.pop %v3625
        %v3627 = vmul.f32 %v3564, 1.442695
        %v3628 = vpow.pop %v3627
        %v3629 = vadd.f32 %v3566, 1.0
        %v3630 = vadd.f32 %v3568, 1.0
        %v3631 = vadd.f32 %v3570, 1.0
        %v3632 = vadd.f32 %v3572, 1.0
        %v3633 = vadd.f32 %v3574, 1.0
        %v3634 = vadd.f32 %v3576, 1.0
        %v3635 = vadd.f32 %v3578, 1.0
        %v3636 = vadd.f32 %v3580, 1.0
        %v3637 = vadd.f32 %v3582, 1.0
        %v3638 = vadd.f32 %v3584, 1.0
        %v3639 = vadd.f32 %v3586, 1.0
        %v3640 = vadd.f32 %v3588, 1.0
        %v3641 = vadd.f32 %v3590, 1.0
        %v3642 = vadd.f32 %v3592, 1.0
        %v3643 = vadd.f32 %v3594, 1.0
        %v3644 = vadd.f32 %v3596, 1.0
        %v3645 = vadd.f32 %v3598, 1.0
        %v3646 = vadd.f32 %v3600, 1.0
        %v3647 = vadd.f32 %v3602, 1.0
        %v3648 = vadd.f32 %v3604, 1.0
        %v3649 = vadd.f32 %v3606, 1.0
        %v3650 = vadd.f32 %v3608, 1.0
        %v3651 = vadd.f32 %v3610, 1.0
        %v3652 = vadd.f32 %v3612, 1.0
        %v3653 = vadd.f32 %v3614, 1.0
        %v3654 = vadd.f32 %v3616, 1.0
        %v3655 = vadd.f32 %v3618, 1.0
        %v3656 = vadd.f32 %v3620, 1.0
        %v3657 = vadd.f32 %v3622, 1.0
        %v3658 = vadd.f32 %v3624, 1.0
        %v3659 = vadd.f32 %v3626, 1.0
        %v3660 = vadd.f32 %v3628, 1.0
        %v3661 = vrcp.pop %v3629
        %v3662 = vmul.f32 1.0, %v3661
        %v3663 = vrcp.pop %v3630
        %v3664 = vmul.f32 1.0, %v3663
        %v3665 = vrcp.pop %v3631
        %v3666 = vmul.f32 1.0, %v3665
        %v3667 = vrcp.pop %v3632
        %v3668 = vmul.f32 1.0, %v3667
        %v3669 = vrcp.pop %v3633
        %v3670 = vmul.f32 1.0, %v3669
        %v3671 = vrcp.pop %v3634
        %v3672 = vmul.f32 1.0, %v3671
        %v3673 = vrcp.pop %v3635
        %v3674 = vmul.f32 1.0, %v3673
        %v3675 = vrcp.pop %v3636
        %v3676 = vmul.f32 1.0, %v3675
        %v3677 = vrcp.pop %v3637
        %v3678 = vmul.f32 1.0, %v3677
        %v3679 = vrcp.pop %v3638
        %v3680 = vmul.f32 1.0, %v3679
        %v3681 = vrcp.pop %v3639
        %v3682 = vmul.f32 1.0, %v3681
        %v3683 = vrcp.pop %v3640
        %v3684 = vmul.f32 1.0, %v3683
        %v3685 = vrcp.pop %v3641
        %v3686 = vmul.f32 1.0, %v3685
        %v3687 = vrcp.pop %v3642
        %v3688 = vmul.f32 1.0, %v3687
        %v3689 = vrcp.pop %v3643
        %v3690 = vmul.f32 1.0, %v3689
        %v3691 = vrcp.pop %v3644
        %v3692 = vmul.f32 1.0, %v3691
        %v3693 = vrcp.pop %v3645
        %v3694 = vmul.f32 1.0, %v3693
        %v3695 = vrcp.pop %v3646
        %v3696 = vmul.f32 1.0, %v3695
        %v3697 = vrcp.pop %v3647
        %v3698 = vmul.f32 1.0, %v3697
        %v3699 = vrcp.pop %v3648
        %v3700 = vmul.f32 1.0, %v3699
        %v3701 = vrcp.pop %v3649
        %v3702 = vmul.f32 1.0, %v3701
        %v3703 = vrcp.pop %v3650
        %v3704 = vmul.f32 1.0, %v3703
        %v3705 = vrcp.pop %v3651
        %v3706 = vmul.f32 1.0, %v3705
        %v3707 = vrcp.pop %v3652
        %v3708 = vmul.f32 1.0, %v3707
        %v3709 = vrcp.pop %v3653
        %v3710 = vmul.f32 1.0, %v3709
        %v3711 = vrcp.pop %v3654
        %v3712 = vmul.f32 1.0, %v3711
        %v3713 = vrcp.pop %v3655
        %v3714 = vmul.f32 1.0, %v3713
        %v3715 = vrcp.pop %v3656
        %v3716 = vmul.f32 1.0, %v3715
        %v3717 = vrcp.pop %v3657
        %v3718 = vmul.f32 1.0, %v3717
        %v3719 = vrcp.pop %v3658
        %v3720 = vmul.f32 1.0, %v3719
        %v3721 = vrcp.pop %v3659
        %v3722 = vmul.f32 1.0, %v3721
        %v3723 = vrcp.pop %v3660
        %v3724 = vmul.f32 1.0, %v3723
        %3757 = vrot.lane.b32.xlu0 %v1455, 32
        %v3758 = vpop.permute.xlu0 %3757
        %3759 = vrot.lane.b32.xlu0 %v1458, 32
        %v3760 = vpop.permute.xlu0 %3759
        %3761 = vrot.lane.b32.xlu0 %v1463, 32
        %v3762 = vpop.permute.xlu0 %3761
        %3763 = vrot.lane.b32.xlu0 %v1466, 32
        %v3764 = vpop.permute.xlu0 %3763
        %3765 = vrot.lane.b32.xlu0 %v1471, 32
        %v3766 = vpop.permute.xlu0 %3765
        %3767 = vrot.lane.b32.xlu0 %v1474, 32
        %v3768 = vpop.permute.xlu0 %3767
        %3769 = vrot.lane.b32.xlu0 %v1479, 32
        %v3770 = vpop.permute.xlu0 %3769
        %3771 = vrot.lane.b32.xlu0 %v1482, 32
        %v3772 = vpop.permute.xlu0 %3771
        %3773 = vrot.lane.b32.xlu0 %v1487, 32
        %v3774 = vpop.permute.xlu0 %3773
        %3775 = vrot.lane.b32.xlu0 %v1490, 32
        %v3776 = vpop.permute.xlu0 %3775
        %3777 = vrot.lane.b32.xlu0 %v1495, 32
        %v3778 = vpop.permute.xlu0 %3777
        %3779 = vrot.lane.b32.xlu0 %v1498, 32
        %v3780 = vpop.permute.xlu0 %3779
        %3781 = vrot.lane.b32.xlu0 %v1503, 32
        %v3782 = vpop.permute.xlu0 %3781
        %3783 = vrot.lane.b32.xlu0 %v1506, 32
        %v3784 = vpop.permute.xlu0 %3783
        %3785 = vrot.lane.b32.xlu0 %v1511, 32
        %v3786 = vpop.permute.xlu0 %3785
        %3787 = vrot.lane.b32.xlu0 %v1514, 32
        %v3788 = vpop.permute.xlu0 %3787
        %3789 = vrot.lane.b32.xlu0 %v1519, 32
        %v3790 = vpop.permute.xlu0 %3789
        %3791 = vrot.lane.b32.xlu0 %v1522, 32
        %v3792 = vpop.permute.xlu0 %3791
        %3793 = vrot.lane.b32.xlu0 %v1527, 32
        %v3794 = vpop.permute.xlu0 %3793
        %3795 = vrot.lane.b32.xlu0 %v1530, 32
        %v3796 = vpop.permute.xlu0 %3795
        %3797 = vrot.lane.b32.xlu0 %v1535, 32
        %v3798 = vpop.permute.xlu0 %3797
        %3799 = vrot.lane.b32.xlu0 %v1538, 32
        %v3800 = vpop.permute.xlu0 %3799
        %3801 = vrot.lane.b32.xlu0 %v1543, 32
        %v3802 = vpop.permute.xlu0 %3801
        %3803 = vrot.lane.b32.xlu0 %v1546, 32
        %v3804 = vpop.permute.xlu0 %3803
        %3805 = vrot.lane.b32.xlu0 %v1551, 32
        %v3806 = vpop.permute.xlu0 %3805
        %3807 = vrot.lane.b32.xlu0 %v1554, 32
        %v3808 = vpop.permute.xlu0 %3807
        %3809 = vrot.lane.b32.xlu0 %v1559, 32
        %v3810 = vpop.permute.xlu0 %3809
        %3811 = vrot.lane.b32.xlu0 %v1562, 32
        %v3812 = vpop.permute.xlu0 %3811
        %3813 = vrot.lane.b32.xlu0 %v1567, 32
        %v3814 = vpop.permute.xlu0 %3813
        %3815 = vrot.lane.b32.xlu0 %v1570, 32
        %v3816 = vpop.permute.xlu0 %3815
        %3817 = vrot.lane.b32.xlu0 %v1575, 32
        %v3818 = vpop.permute.xlu0 %3817
        %3819 = vrot.lane.b32.xlu0 %v1578, 32
        %v3820 = vpop.permute.xlu0 %3819
        %3885 = vrot.lane.b32.xlu0 %v3662, 48
        %v3886 = vpop.permute.xlu0 %3885
        %3887 = vrot.lane.b32.xlu0 %v3664, 48
        %v3888 = vpop.permute.xlu0 %3887
        %3889 = vrot.lane.b32.xlu0 %v3666, 48
        %v3890 = vpop.permute.xlu0 %3889
        %3891 = vrot.lane.b32.xlu0 %v3668, 48
        %v3892 = vpop.permute.xlu0 %3891
        %3893 = vrot.lane.b32.xlu0 %v3670, 48
        %v3894 = vpop.permute.xlu0 %3893
        %3895 = vrot.lane.b32.xlu0 %v3672, 48
        %v3896 = vpop.permute.xlu0 %3895
        %3897 = vrot.lane.b32.xlu0 %v3674, 48
        %v3898 = vpop.permute.xlu0 %3897
        %3899 = vrot.lane.b32.xlu0 %v3676, 48
        %v3900 = vpop.permute.xlu0 %3899
        %3901 = vrot.lane.b32.xlu0 %v3678, 48
        %v3902 = vpop.permute.xlu0 %3901
        %3903 = vrot.lane.b32.xlu0 %v3680, 48
        %v3904 = vpop.permute.xlu0 %3903
        %3905 = vrot.lane.b32.xlu0 %v3682, 48
        %v3906 = vpop.permute.xlu0 %3905
        %3907 = vrot.lane.b32.xlu0 %v3684, 48
        %v3908 = vpop.permute.xlu0 %3907
        %3909 = vrot.lane.b32.xlu0 %v3686, 48
        %v3910 = vpop.permute.xlu0 %3909
        %3911 = vrot.lane.b32.xlu0 %v3688, 48
        %v3912 = vpop.permute.xlu0 %3911
        %3913 = vrot.lane.b32.xlu0 %v3690, 48
        %v3914 = vpop.permute.xlu0 %3913
        %3915 = vrot.lane.b32.xlu0 %v3692, 48
        %v3916 = vpop.permute.xlu0 %3915
        %3917 = vrot.lane.b32.xlu0 %v3694, 48
        %v3918 = vpop.permute.xlu0 %3917
        %3919 = vrot.lane.b32.xlu0 %v3696, 48
        %v3920 = vpop.permute.xlu0 %3919
        %3921 = vrot.lane.b32.xlu0 %v3698, 48
        %v3922 = vpop.permute.xlu0 %3921
        %3923 = vrot.lane.b32.xlu0 %v3700, 48
        %v3924 = vpop.permute.xlu0 %3923
        %3925 = vrot.lane.b32.xlu0 %v3702, 48
        %v3926 = vpop.permute.xlu0 %3925
        %3927 = vrot.lane.b32.xlu0 %v3704, 48
        %v3928 = vpop.permute.xlu0 %3927
        %3929 = vrot.lane.b32.xlu0 %v3706, 48
        %v3930 = vpop.permute.xlu0 %3929
        %3931 = vrot.lane.b32.xlu0 %v3708, 48
        %v3932 = vpop.permute.xlu0 %3931
        %3933 = vrot.lane.b32.xlu0 %v3710, 48
        %v3934 = vpop.permute.xlu0 %3933
        %3935 = vrot.lane.b32.xlu0 %v3712, 48
        %v3936 = vpop.permute.xlu0 %3935
        %3937 = vrot.lane.b32.xlu0 %v3714, 48
        %v3938 = vpop.permute.xlu0 %3937
        %3939 = vrot.lane.b32.xlu0 %v3716, 48
        %v3940 = vpop.permute.xlu0 %3939
        %3941 = vrot.lane.b32.xlu0 %v3718, 48
        %v3942 = vpop.permute.xlu0 %3941
        %3943 = vrot.lane.b32.xlu0 %v3720, 48
        %v3944 = vpop.permute.xlu0 %3943
        %3945 = vrot.lane.b32.xlu0 %v3722, 48
        %v3946 = vpop.permute.xlu0 %3945
        %3947 = vrot.lane.b32.xlu0 %v3724, 48
        %v3948 = vpop.permute.xlu0 %3947
        %v3981 = vsel %vm785, %v2591, %v3758
        %v3982 = vsel %vm785, %v2594, %v3760
        %v3983 = vsel %vm785, %v2599, %v3762
        %v3984 = vsel %vm785, %v2602, %v3764
        %v3985 = vsel %vm785, %v2607, %v3766
        %v3986 = vsel %vm785, %v2610, %v3768
        %v3987 = vsel %vm785, %v2615, %v3770
        %v3988 = vsel %vm785, %v2618, %v3772
        %v3989 = vsel %vm785, %v2623, %v3774
        %v3990 = vsel %vm785, %v2626, %v3776
        %v3991 = vsel %vm785, %v2631, %v3778
        %v3992 = vsel %vm785, %v2634, %v3780
        %v3993 = vsel %vm785, %v2639, %v3782
        %v3994 = vsel %vm785, %v2642, %v3784
        %v3995 = vsel %vm785, %v2647, %v3786
        %v3996 = vsel %vm785, %v2650, %v3788
        %v3997 = vsel %vm785, %v2655, %v3790
        %v3998 = vsel %vm785, %v2658, %v3792
        %v3999 = vsel %vm785, %v2663, %v3794
        %v4000 = vsel %vm785, %v2666, %v3796
        %v4001 = vsel %vm785, %v2671, %v3798
        %v4002 = vsel %vm785, %v2674, %v3800
        %v4003 = vsel %vm785, %v2679, %v3802
        %v4004 = vsel %vm785, %v2682, %v3804
        %v4005 = vsel %vm785, %v2687, %v3806
        %v4006 = vsel %vm785, %v2690, %v3808
        %v4007 = vsel %vm785, %v2695, %v3810
        %v4008 = vsel %vm785, %v2698, %v3812
        %v4009 = vsel %vm785, %v2703, %v3814
        %v4010 = vsel %vm785, %v2706, %v3816
        %v4011 = vsel %vm785, %v2711, %v3818
        %v4012 = vsel %vm785, %v2714, %v3820
        %vm4013 = vcmask 392192
        %v4014 = vsel %vm4013, %v3981, %v3886
        %v4015 = vsel %vm4013, %v3982, %v3888
        %v4016 = vsel %vm4013, %v3983, %v3890
        %v4017 = vsel %vm4013, %v3984, %v3892
        %v4018 = vsel %vm4013, %v3985, %v3894
        %v4019 = vsel %vm4013, %v3986, %v3896
        %v4020 = vsel %vm4013, %v3987, %v3898
        %v4021 = vsel %vm4013, %v3988, %v3900
        %v4022 = vsel %vm4013, %v3989, %v3902
        %v4023 = vsel %vm4013, %v3990, %v3904
        %v4024 = vsel %vm4013, %v3991, %v3906
        %v4025 = vsel %vm4013, %v3992, %v3908
        %v4026 = vsel %vm4013, %v3993, %v3910
        %v4027 = vsel %vm4013, %v3994, %v3912
        %v4028 = vsel %vm4013, %v3995, %v3914
        %v4029 = vsel %vm4013, %v3996, %v3916
        %v4030 = vsel %vm4013, %v3997, %v3918
        %v4031 = vsel %vm4013, %v3998, %v3920
        %v4032 = vsel %vm4013, %v3999, %v3922
        %v4033 = vsel %vm4013, %v4000, %v3924
        %v4034 = vsel %vm4013, %v4001, %v3926
        %v4035 = vsel %vm4013, %v4002, %v3928
        %v4036 = vsel %vm4013, %v4003, %v3930
        %v4037 = vsel %vm4013, %v4004, %v3932
        %v4038 = vsel %vm4013, %v4005, %v3934
        %v4039 = vsel %vm4013, %v4006, %v3936
        %v4040 = vsel %vm4013, %v4007, %v3938
        %v4041 = vsel %vm4013, %v4008, %v3940
        %v4042 = vsel %vm4013, %v4009, %v3942
        %v4043 = vsel %vm4013, %v4010, %v3944
        %v4044 = vsel %vm4013, %v4011, %v3946
        %v4045 = vsel %vm4013, %v4012, %v3948
        %vm4046 = vcmask 400384
        %v4047 = vsel %vm4046, %v4014, 0.0
        %v4048 = vsel %vm4046, %v4015, 0.0
        %v4049 = vsel %vm4046, %v4016, 0.0
        %v4050 = vsel %vm4046, %v4017, 0.0
        %v4051 = vsel %vm4046, %v4018, 0.0
        %v4052 = vsel %vm4046, %v4019, 0.0
        %v4053 = vsel %vm4046, %v4020, 0.0
        %v4054 = vsel %vm4046, %v4021, 0.0
        %v4055 = vsel %vm4046, %v4022, 0.0
        %v4056 = vsel %vm4046, %v4023, 0.0
        %v4057 = vsel %vm4046, %v4024, 0.0
        %v4058 = vsel %vm4046, %v4025, 0.0
        %v4059 = vsel %vm4046, %v4026, 0.0
        %v4060 = vsel %vm4046, %v4027, 0.0
        %v4061 = vsel %vm4046, %v4028, 0.0
        %v4062 = vsel %vm4046, %v4029, 0.0
        %v4063 = vsel %vm4046, %v4030, 0.0
        %v4064 = vsel %vm4046, %v4031, 0.0
        %v4065 = vsel %vm4046, %v4032, 0.0
        %v4066 = vsel %vm4046, %v4033, 0.0
        %v4067 = vsel %vm4046, %v4034, 0.0
        %v4068 = vsel %vm4046, %v4035, 0.0
        %v4069 = vsel %vm4046, %v4036, 0.0
        %v4070 = vsel %vm4046, %v4037, 0.0
        %v4071 = vsel %vm4046, %v4038, 0.0
        %v4072 = vsel %vm4046, %v4039, 0.0
        %v4073 = vsel %vm4046, %v4040, 0.0
        %v4074 = vsel %vm4046, %v4041, 0.0
        %v4075 = vsel %vm4046, %v4042, 0.0
        %v4076 = vsel %vm4046, %v4043, 0.0
        %v4077 = vsel %vm4046, %v4044, 0.0
        %v4078 = vsel %vm4046, %v4045, 0.0
        %4079 = vst [vmem:[%s641] sm:$0xff] %v4047
        %4080 = vst [vmem:[%s641 + $0x8] sm:$0xff] %v4048
        %4081 = vst [vmem:[%s641 + $0x10] sm:$0xff] %v4049
        %4082 = vst [vmem:[%s641 + $0x18] sm:$0xff] %v4050
        %4083 = vst [vmem:[%s641 + $0x20] sm:$0xff] %v4051
        %4084 = vst [vmem:[%s641 + $0x28] sm:$0xff] %v4052
        %4085 = vst [vmem:[%s641 + $0x30] sm:$0xff] %v4053
        %4086 = vst [vmem:[%s641 + $0x38] sm:$0xff] %v4054
        %4087 = vst [vmem:[%s641 + $0x40] sm:$0xff] %v4055
        %4088 = vst [vmem:[%s641 + $0x48] sm:$0xff] %v4056
        %4089 = vst [vmem:[%s641 + $0x50] sm:$0xff] %v4057
        %4090 = vst [vmem:[%s641 + $0x58] sm:$0xff] %v4058
        %4091 = vst [vmem:[%s641 + $0x60] sm:$0xff] %v4059
        %4092 = vst [vmem:[%s641 + $0x68] sm:$0xff] %v4060
        %4093 = vst [vmem:[%s641 + $0x70] sm:$0xff] %v4061
        %4094 = vst [vmem:[%s641 + $0x78] sm:$0xff] %v4062
        %4095 = vst [vmem:[%s641 + $0x80] sm:$0xff] %v4063
        %4096 = vst [vmem:[%s641 + $0x88] sm:$0xff] %v4064
        %4097 = vst [vmem:[%s641 + $0x90] sm:$0xff] %v4065
        %4098 = vst [vmem:[%s641 + $0x98] sm:$0xff] %v4066
        %4099 = vst [vmem:[%s641 + $0xa0] sm:$0xff] %v4067
        %4100 = vst [vmem:[%s641 + $0xa8] sm:$0xff] %v4068
        %4101 = vst [vmem:[%s641 + $0xb0] sm:$0xff] %v4069
        %4102 = vst [vmem:[%s641 + $0xb8] sm:$0xff] %v4070
        %4103 = vst [vmem:[%s641 + $0xc0] sm:$0xff] %v4071
        %4104 = vst [vmem:[%s641 + $0xc8] sm:$0xff] %v4072
        %4105 = vst [vmem:[%s641 + $0xd0] sm:$0xff] %v4073
        %4106 = vst [vmem:[%s641 + $0xd8] sm:$0xff] %v4074
        %4107 = vst [vmem:[%s641 + $0xe0] sm:$0xff] %v4075
        %4108 = vst [vmem:[%s641 + $0xe8] sm:$0xff] %v4076
        %4109 = vst [vmem:[%s641 + $0xf0] sm:$0xff] %v4077
        %4110 = vst [vmem:[%s641 + $0xf8] sm:$0xff] %v4078
        %s4111 = sand.u32 %s474, 1
        %s4112 = scalar_lea.sflag [#allocation4], %s4111
        %s4113 = sand.u32 %s474, 1
        %s4114 = smul.addr %s4113, 256
        %s4115 = scalar_lea.vmem [#allocation3], %s4114
        // Predicated region
        $region101: #{tpu_custom_call.1} parent=99 // pred_check
          %p4116 = pneg %p484
        $region102: #{tpu_custom_call.1} parent=99 // pred_check_branch
          %4118 = sbr.rel (%p4116) target = $region104
        $region103: #{tpu_custom_call.1} parent=99 // pred_region
          %s4119 = smul.u32 32, %s36
          %s4121 = ssub.s32 4096, 4096
          %4122 = vsyncadd %s4112, %s4121
          %s4123 = smul.addr %s4119, 128
          %s4124 = scalar_lea.hbm %s20, %s4123
          %s4125 = sshll.u32 %s4115, 4
          %s4126 = int_to_ptr.vmem [resolvable:$true] %s4125
          %4131 = dma.vmem_to_hbm [thread:$0]  %s4126, 4096, %s4124, %s4112, 128, 128, 8
        $region104: #{tpu_custom_call.1} parent=99 // pred_fallthru
          _
      $region100: #{tpu_custom_call.1} parent=5 // pred_fallthru
        _
      %p4132 = scmp.le.s32.totalorder 2, %s31
      // Predicated region
      $region105: #{tpu_custom_call.1} parent=5 // pred_check
        %p4133 = pneg %p4132
      $region106: #{tpu_custom_call.1} parent=5 // pred_check_branch
        %4135 = sbr.rel (%p4133) target = $region108
      $region107: #{tpu_custom_call.1} parent=5 // pred_region
        %s4136 = ssub.s32 %s31, 2
        // Predicated region
        $region109: #{tpu_custom_call.1} parent=107 // pred_check
          %p4137 = pneg %p490
        $region110: #{tpu_custom_call.1} parent=107 // pred_check_branch
          %4139 = sbr.rel (%p4137) target = $region112
        $region111: #{tpu_custom_call.1} parent=107 // pred_region
          %s4140 = sand.u32 %s475, 1
          %s4141 = scalar_lea.sflag [#allocation4], %s4140
          %s4142 = sand.u32 %s475, 1
          %s4143 = smul.addr %s4142, 256
          %s4144 = scalar_lea.vmem [#allocation3], %s4143
          %4145 = dma.done %s4141, 4096
        $region112: #{tpu_custom_call.1} parent=107 // pred_fallthru
          _
      $region108: #{tpu_custom_call.1} parent=5 // pred_fallthru
        _
    $region6: #{tpu_custom_call.1} parent=1 // loop_footer
      %s35 = sadd.s32 1, %s31
    $region7: #{tpu_custom_call.1} parent=1 // loop_footer_branch
      %30 = sbr.rel target = $region3
    $region8: #{tpu_custom_call.1} parent=1 // loop_exit
      _
    %4146 = vsyncpa [#allocation4], 1
    %s4147 = scalar_lea.sflag [#allocation4], 1
    %4148 = vsyncpa %s4147, 1

</llo_original>
